<compile_context>
chip_gen: v5e
topology: v5e:2x2
jax: 0.10.0
libtpu: 0.0.40
codegen_flags: <defaults>
</compile_context>

<pallas_src>
import functools

import jax
import jax.numpy as jnp
from jax.experimental import pallas as pl
from jax.experimental.pallas import tpu as pltpu

EPS = 1e-5


def _bf16(x):
    return x.astype(jnp.bfloat16)


# ----------------------------- Pallas kernel -------------------------------- #

def _bn_relu(x, gamma, beta, inv_n):
    """Training-mode BatchNorm over axis 0 + ReLU + bf16 cast in one apply sweep.

    One pass over x for the stats (sum, sum-of-squares; x*x computed once);
    gamma*rsqrt(var+eps) folded into a single per-channel scale so the apply is
    one FMA + max + cast per element.  Stats stay f32; output is bf16 so the
    next matmul consumes it directly (no separate cast copy of the slab).
    """
    x2 = x * x
    s = jnp.sum(x, axis=0, keepdims=True)
    ss = jnp.sum(x2, axis=0, keepdims=True)
    mean = s * inv_n
    var = jnp.maximum(ss * inv_n - mean * mean, 0.0)        # guard fp cancellation
    scale = gamma * jax.lax.rsqrt(var + EPS)
    shift = beta - mean * scale
    return jnp.maximum(x * scale + shift, 0.0).astype(jnp.bfloat16)


def netlocald_kernel(
    x_ref,       # (B*N, 3) bf16
    pp_ref,      # (24, 256) f32 packed small params (BN gamma/beta, fw4 row, fb4, w1 rows)
    w2_ref,      # (64, 64)   bf16  conv2
    w3_ref,      # (64, 128)  bf16  conv3
    w4_ref,      # (128, 256) bf16  conv4
    fw1_ref,     # (448, 256) bf16  fc1 (sliced into the 256/128/64 blocks in-kernel)
    fw2_ref,     # (256, 128) bf16  fc2
    fw3_ref,     # (128, 16)  bf16  fc3
    out_ref,     # (B, 1) f32
    *, batch, npts,
):
    inv_rows = 1.0 / float(batch * npts)     # conv-stage BN: stats over every point
    inv_b = 1.0 / float(batch)               # fc-head BN: stats over the batch

    pp = pp_ref[...]                         # (24, 256) f32, one small load

    # conv1: Conv2d(1, 64, (1,3)) over the width-3 coord dim == 3->64 linear map.
    # K=3 fills 3/256 of the MXU contraction dim with a lane-sparse LHS, so do it
    # as three broadcast FMAs on the VPU instead.  Bias dropped (BN cancels it).
    x = x_ref[...]                           # (rows, 3) bf16
    h = (x[:, 0:1] * pp[16:17, :64]
         + x[:, 1:2] * pp[17:18, :64]
         + x[:, 2:3] * pp[18:19, :64])       # (rows, 64) f32
    h = _bn_relu(h, pp[0:1, :64], pp[1:2, :64], inv_rows)            # bf16

    # conv2..conv4 are 1x1 convs == pointwise matmuls (bf16 operands, f32 acc).
    # Pool each slab right after its BN so its live range ends at the next dot.
    h64 = jnp.dot(h, w2_ref[...], preferred_element_type=jnp.float32)
    h64 = _bn_relu(h64, pp[2:3, :64], pp[3:4, :64], inv_rows)
    p64 = jnp.max(h64.reshape(batch, npts, 64), axis=1)              # (B, 64) bf16

    h128 = jnp.dot(h64, w3_ref[...], preferred_element_type=jnp.float32)
    h128 = _bn_relu(h128, pp[4:5, :128], pp[5:6, :128], inv_rows)
    p128 = jnp.max(h128.reshape(batch, npts, 128), axis=1)           # (B, 128) bf16

    h256 = jnp.dot(h128, w4_ref[...], preferred_element_type=jnp.float32)
    h256 = _bn_relu(h256, pp[6:7, :256], pp[7:8, :256], inv_rows)
    p256 = jnp.max(h256.reshape(batch, npts, 256), axis=1)           # (B, 256) bf16

    # fc1 on concat([x_256, x_128, x_64]) -- concat folded into a split matmul over
    # static sublane slices of the single fw1 slab (no in-kernel lane concat).
    # Bias dropped (BN follows).
    f = (jnp.dot(p256, fw1_ref[0:256, :], preferred_element_type=jnp.float32)
         + jnp.dot(p128, fw1_ref[256:384, :], preferred_element_type=jnp.float32)
         + jnp.dot(p64, fw1_ref[384:448, :], preferred_element_type=jnp.float32))
    f = _bn_relu(f, pp[8:9, :256], pp[9:10, :256], inv_b)

    f = jnp.dot(f, fw2_ref[...], preferred_element_type=jnp.float32)
    f = _bn_relu(f, pp[10:11, :128], pp[11:12, :128], inv_b)

    f = jnp.dot(f, fw3_ref[...], preferred_element_type=jnp.float32)
    f = _bn_relu(f, pp[12:13, :16], pp[13:14, :16], inv_b)           # (B, 16) bf16

    # fc4 (16->1): M=B, N=1, K=16 is pure latency on the MXU; do it on the VPU as a
    # multiply + lane reduce.  Bias kept (no BN after).
    out_ref[...] = (jnp.sum(f * pp[14:15, :16], axis=1, keepdims=True)
                    + pp[15:16, 0:1])


# ------------------------------- wrapper ------------------------------------ #

def _vmem_limit_bytes():
    cap = 64 * 1024 * 1024                                  # safe fallback (v7x physical)
    try:
        cap = int(getattr(pltpu.get_tpu_info(), "vmem_capacity_bytes", cap))
    except Exception:
        pass
    # Leave >=16 MiB headroom for compiler scratch; never request more than ~100 MiB.
    return max(16 * 1024 * 1024, min(cap - 16 * 1024 * 1024, 100 * 1024 * 1024))


def _pack_params(P):
    """Pack all tiny per-channel parameters into one (24, 256) f32 slab (single DMA).

    Rows: 0..13 BN gamma/beta pairs (conv1..4, fc1..3), 14 fc4 weight row, 15 fc4
    bias, 16..18 conv1 weight rows (pre-rounded to bf16 values so the VPU FMA form
    matches the MXU bf16 matmul precision), 19..23 zero padding.
    """
    C = 256

    def padrow(v):
        v = jnp.asarray(v, jnp.float32).reshape(-1)
        return jnp.pad(v, (0, C - v.shape[0]))

    w1m = _bf16(P["w1"][:, 0, 0, :].T).astype(jnp.float32)           # (3, 64)
    fw4r = _bf16(P["fw4"].reshape(-1)).astype(jnp.float32)           # (16,)
    order = [P["g1"], P["be1"], P["g2"], P["be2"], P["g3"], P["be3"],
             P["g4"], P["be4"], P["fg1"], P["fbe1"], P["fg2"], P["fbe2"],
             P["fg3"], P["fbe3"], fw4r, P["fb4"], w1m[0], w1m[1], w1m[2]]
    slab = jnp.stack([padrow(v) for v in order])                     # (19, 256)
    pad_rows = (-slab.shape[0]) % 8
    return jnp.pad(slab, ((0, pad_rows), (0, 0)))                    # (24, 256)


def netlocald_forward(x_nchw, P):
    """x_nchw: (B, 1, N, 3) float32, torch NCHW convention."""
    B, _, N, _ = x_nchw.shape
    rows = B * N
    vmem_limit = _vmem_limit_bytes()
    # Per-row VMEM budget: lane-padded bf16 input (~256 B) + peak conv-stage slabs
    # (f32 pre-BN 256ch + x^2 temp + bf16 in/out slabs ~ 2.8 KiB), + 4 MiB for
    # weights / compiler scratch.
    if rows * (256 + 2816) + (4 << 20) > vmem_limit:
        # TODO(synk): row-tiled 'parallel' grid (two-pass BN + running max-pool scratch).
        raise ValueError(f"B*N={rows} exceeds this kernel's single-slab VMEM budget")

    x2d = _bf16(x_nchw.reshape(rows, 3))
    pp = _pack_params(P)

    # Matmul-form conv weights: OIHW -> (in, out), cast to bf16 for the MXU.
    w2m = _bf16(P["w2"][:, :, 0, 0].T)          # (64, 64)
    w3m = _bf16(P["w3"][:, :, 0, 0].T)          # (64, 128)
    w4m = _bf16(P["w4"][:, :, 0, 0].T)          # (128, 256)

    args = [x2d, pp, w2m, w3m, w4m,
            _bf16(P["fw1"]), _bf16(P["fw2"]), _bf16(P["fw3"])]

    kernel = functools.partial(netlocald_kernel, batch=B, npts=N)
    return pl.pallas_call(
        kernel,
        out_shape=jax.ShapeDtypeStruct((B, 1), jnp.float32),
        in_specs=[pl.BlockSpec(memory_space=pltpu.MemorySpace.VMEM)] * len(args),
        out_specs=pl.BlockSpec(memory_space=pltpu.MemorySpace.VMEM),
        compiler_params=pltpu.CompilerParams(vmem_limit_bytes=int(vmem_limit)),
    )(*args)


# -------------------------- pure-JAX reference ------------------------------ #

def torch_reference(x, P, mm_dtype=None):
    """Torch-semantics reference.  mm_dtype=jnp.bfloat16 mirrors the kernel's
    mixed-precision matmuls (bf16 operands, f32 accumulation) for a tight check;
    mm_dtype=None is the exact f32 module."""
    cast = (lambda t: t.astype(mm_dtype)) if mm_dtype is not None else (lambda t: t)

    def conv2d(t, w, b):
        y = jax.lax.conv_general_dilated(
            cast(t), cast(w), window_strides=(1, 1), padding="VALID",
            dimension_numbers=("NCHW", "OIHW", "NCHW"),
            preferred_element_type=jnp.float32)
        return y + b.reshape(1, -1, 1, 1)

    def linear(t, w, b):
        return jnp.dot(cast(t), cast(w), preferred_element_type=jnp.float32) + b

    def bn2d(t, g, be):
        mean = jnp.mean(t, axis=(0, 2, 3), keepdims=True)
        var = jnp.mean((t - mean) ** 2, axis=(0, 2, 3), keepdims=True)
        return (t - mean) * jax.lax.rsqrt(var + EPS) * g.reshape(1, -1, 1, 1) \
            + be.reshape(1, -1, 1, 1)

    def bn1d(t, g, be):
        mean = jnp.mean(t, axis=0, keepdims=True)
        var = jnp.mean((t - mean) ** 2, axis=0, keepdims=True)
        return (t - mean) * jax.lax.rsqrt(var + EPS) * g + be

    h = jax.nn.relu(bn2d(conv2d(x, P["w1"], P["b1"]), P["g1"], P["be1"]))
    x64 = jax.nn.relu(bn2d(conv2d(h, P["w2"], P["b2"]), P["g2"], P["be2"]))
    x128 = jax.nn.relu(bn2d(conv2d(x64, P["w3"], P["b3"]), P["g3"], P["be3"]))
    x256 = jax.nn.relu(bn2d(conv2d(x128, P["w4"], P["b4"]), P["g4"], P["be4"]))

    def pool(t):  # MaxPool2d((N,1)) + squeeze
        return jnp.max(t, axis=2)[:, :, 0]

    f = jnp.concatenate([pool(x256), pool(x128), pool(x64)], axis=1)     # (B, 448)
    f = jax.nn.relu(bn1d(linear(f, P["fw1"], P["fb1"]), P["fg1"], P["fbe1"]))
    f = jax.nn.relu(bn1d(linear(f, P["fw2"], P["fb2"]), P["fg2"], P["fbe2"]))
    f = jax.nn.relu(bn1d(linear(f, P["fw3"], P["fb3"]), P["fg3"], P["fbe3"]))
    return linear(f, P["fw4"], P["fb4"])


# ------------------------------ param init ---------------------------------- #

def init_params(key):
    keys = iter(jax.random.split(key, 64))

    def w(shape, scale=0.1):
        return scale * jax.random.normal(next(keys), shape, jnp.float32)

    def gamma(c):
        return 1.0 + 0.05 * jax.random.normal(next(keys), (c,), jnp.float32)

    def beta(c):
        return 0.05 * jax.random.normal(next(keys), (c,), jnp.float32)

    P = {}
    P["w1"], P["b1"] = w((64, 1, 1, 3)), w((64,), 0.05)
    P["w2"], P["b2"] = w((64, 64, 1, 1)), w((64,), 0.05)
    P["w3"], P["b3"] = w((128, 64, 1, 1)), w((128,), 0.05)
    P["w4"], P["b4"] = w((256, 128, 1, 1)), w((256,), 0.05)
    for i, c in zip((1, 2, 3, 4), (64, 64, 128, 256)):
        P[f"g{i}"], P[f"be{i}"] = gamma(c), beta(c)
    P["fw1"], P["fb1"] = w((448, 256)), w((256,), 0.05)
    P["fw2"], P["fb2"] = w((256, 128)), w((128,), 0.05)
    P["fw3"], P["fb3"] = w((128, 16)), w((16,), 0.05)
    P["fw4"], P["fb4"] = w((16, 1)), w((1,), 0.05)
    for i, c in zip((1, 2, 3), (256, 128, 16)):
        P[f"fg{i}"], P[f"fbe{i}"] = gamma(c), beta(c)
    return P


# --------------------------------- main -------------------------------------- #

if __name__ == "__main__":
    B = 8
    CROP_POINT_NUM = 32   # small; multiple of 8 for clean sublane tiling

    key = jax.random.PRNGKey(0)
    k_x, k_p = jax.random.split(key)
    x = jax.random.normal(k_x, (B, 1, CROP_POINT_NUM, 3), jnp.float32)
    P = init_params(k_p)

    out = jax.block_until_ready(jax.jit(netlocald_forward)(x, P))
    assert out.shape == (B, 1), out.shape

    # 1) Tight check against a reference that mirrors the kernel's precision choice
    #    (bf16 matmul operands, f32 accumulation, f32 BN): validates the translation.
    ref_mixed = jax.block_until_ready(torch_reference(x, P, mm_dtype=jnp.bfloat16))
    assert jnp.allclose(out, ref_mixed, atol=2e-2, rtol=2e-2), (out, ref_mixed)

    # 2) Sanity band against the exact-f32 torch module: bf16 matmul rounding gets
    #    amplified by the training-mode BatchNorms over a small batch, so allow a
    #    few percent of the feature scale.
    ref_f32 = jax.block_until_ready(torch_reference(x, P))
    assert jnp.allclose(out, ref_f32, atol=1e-1, rtol=1e-1), (out, ref_f32)

    print("KERNEL_OK")
</pallas_src>

<mosaic_0001>
module attributes {stable_mosaic.version = 11 : i64} {
  func.func @netlocald_kernel(%arg0: memref<256x3xbf16, #tpu.memory_space<vmem>>, %arg1: memref<24x256xf32, #tpu.memory_space<vmem>>, %arg2: memref<64x64xbf16, #tpu.memory_space<vmem>>, %arg3: memref<64x128xbf16, #tpu.memory_space<vmem>>, %arg4: memref<128x256xbf16, #tpu.memory_space<vmem>>, %arg5: memref<448x256xbf16, #tpu.memory_space<vmem>>, %arg6: memref<256x128xbf16, #tpu.memory_space<vmem>>, %arg7: memref<128x16xbf16, #tpu.memory_space<vmem>>, %arg8: memref<8x1xf32, #tpu.memory_space<vmem>>) attributes {dimension_semantics = [], scalar_prefetch = 0 : i64, scratch_operands = 0 : i64, tpu.core_type = #tpu.core_type<tc>} {
    %c0 = arith.constant 0 : index
    %c0_0 = arith.constant 0 : index
    %0 = vector.load %arg1[%c0, %c0_0] : memref<24x256xf32, #tpu.memory_space<vmem>>, vector<24x256xf32>
    %c0_1 = arith.constant 0 : index
    %c0_2 = arith.constant 0 : index
    %1 = vector.load %arg0[%c0_1, %c0_2] : memref<256x3xbf16, #tpu.memory_space<vmem>>, vector<256x3xbf16>
    %2 = vector.extract_strided_slice %1 {offsets = [0, 0], sizes = [256, 1], strides = [1, 1]} : vector<256x3xbf16> to vector<256x1xbf16>
    %3 = vector.extract_strided_slice %0 {offsets = [16, 0], sizes = [1, 64], strides = [1, 1]} : vector<24x256xf32> to vector<1x64xf32>
    %4 = arith.extf %2 : vector<256x1xbf16> to vector<256x1xf32>
    %5 = vector.broadcast %4 : vector<256x1xf32> to vector<256x64xf32>
    %6 = vector.broadcast %3 : vector<1x64xf32> to vector<256x64xf32>
    %7 = arith.mulf %5, %6 : vector<256x64xf32>
    %8 = vector.extract_strided_slice %1 {offsets = [0, 1], sizes = [256, 1], strides = [1, 1]} : vector<256x3xbf16> to vector<256x1xbf16>
    %9 = vector.extract_strided_slice %0 {offsets = [17, 0], sizes = [1, 64], strides = [1, 1]} : vector<24x256xf32> to vector<1x64xf32>
    %10 = arith.extf %8 : vector<256x1xbf16> to vector<256x1xf32>
    %11 = vector.broadcast %10 : vector<256x1xf32> to vector<256x64xf32>
    %12 = vector.broadcast %9 : vector<1x64xf32> to vector<256x64xf32>
    %13 = arith.mulf %11, %12 : vector<256x64xf32>
    %14 = arith.addf %7, %13 : vector<256x64xf32>
    %15 = vector.extract_strided_slice %1 {offsets = [0, 2], sizes = [256, 1], strides = [1, 1]} : vector<256x3xbf16> to vector<256x1xbf16>
    %16 = vector.extract_strided_slice %0 {offsets = [18, 0], sizes = [1, 64], strides = [1, 1]} : vector<24x256xf32> to vector<1x64xf32>
    %17 = arith.extf %15 : vector<256x1xbf16> to vector<256x1xf32>
    %18 = vector.broadcast %17 : vector<256x1xf32> to vector<256x64xf32>
    %19 = vector.broadcast %16 : vector<1x64xf32> to vector<256x64xf32>
    %20 = arith.mulf %18, %19 : vector<256x64xf32>
    %21 = arith.addf %14, %20 : vector<256x64xf32>
    %22 = vector.extract_strided_slice %0 {offsets = [0, 0], sizes = [1, 64], strides = [1, 1]} : vector<24x256xf32> to vector<1x64xf32>
    %23 = vector.extract_strided_slice %0 {offsets = [1, 0], sizes = [1, 64], strides = [1, 1]} : vector<24x256xf32> to vector<1x64xf32>
    %24 = arith.mulf %21, %21 : vector<256x64xf32>
    %cst = arith.constant dense<0.000000e+00> : vector<64xf32>
    %25 = vector.multi_reduction <add>, %21, %cst [0] : vector<256x64xf32> to vector<64xf32>
    %26 = vector.shape_cast %25 : vector<64xf32> to vector<1x64xf32>
    %cst_3 = arith.constant dense<0.000000e+00> : vector<64xf32>
    %27 = vector.multi_reduction <add>, %24, %cst_3 [0] : vector<256x64xf32> to vector<64xf32>
    %28 = vector.shape_cast %27 : vector<64xf32> to vector<1x64xf32>
    %cst_4 = arith.constant 3.906250e-03 : f32
    %29 = vector.broadcast %cst_4 : f32 to vector<1x64xf32>
    %30 = arith.mulf %26, %29 : vector<1x64xf32>
    %cst_5 = arith.constant 3.906250e-03 : f32
    %31 = vector.broadcast %cst_5 : f32 to vector<1x64xf32>
    %32 = arith.mulf %28, %31 : vector<1x64xf32>
    %33 = arith.mulf %30, %30 : vector<1x64xf32>
    %34 = arith.subf %32, %33 : vector<1x64xf32>
    %cst_6 = arith.constant 0.000000e+00 : f32
    %35 = vector.broadcast %cst_6 : f32 to vector<1x64xf32>
    %36 = arith.maximumf %34, %35 : vector<1x64xf32>
    %cst_7 = arith.constant 9.99999974E-6 : f32
    %37 = vector.broadcast %cst_7 : f32 to vector<1x64xf32>
    %38 = arith.addf %36, %37 : vector<1x64xf32>
    %39 = math.rsqrt %38 : vector<1x64xf32>
    %40 = arith.mulf %22, %39 : vector<1x64xf32>
    %41 = arith.mulf %30, %40 : vector<1x64xf32>
    %42 = arith.subf %23, %41 : vector<1x64xf32>
    %43 = vector.broadcast %40 : vector<1x64xf32> to vector<256x64xf32>
    %44 = arith.mulf %21, %43 : vector<256x64xf32>
    %45 = vector.broadcast %42 : vector<1x64xf32> to vector<256x64xf32>
    %46 = arith.addf %44, %45 : vector<256x64xf32>
    %cst_8 = arith.constant 0.000000e+00 : f32
    %47 = vector.broadcast %cst_8 : f32 to vector<256x64xf32>
    %48 = arith.maximumf %46, %47 : vector<256x64xf32>
    %49 = arith.truncf %48 : vector<256x64xf32> to vector<256x64xbf16>
    %c0_9 = arith.constant 0 : index
    %c0_10 = arith.constant 0 : index
    %50 = vector.load %arg2[%c0_9, %c0_10] : memref<64x64xbf16, #tpu.memory_space<vmem>>, vector<64x64xbf16>
    %cst_11 = arith.constant dense<0.000000e+00> : vector<256x64xf32>
    %51 = tpu.matmul %49, %50, %cst_11 {dimension_numbers = #tpu.dot_dimension_numbers<[1], [0], [0], [1], [0, 0, 1, 1], [], []>} : vector<256x64xbf16>, vector<64x64xbf16>, vector<256x64xf32> -> vector<256x64xf32>
    %52 = vector.extract_strided_slice %0 {offsets = [2, 0], sizes = [1, 64], strides = [1, 1]} : vector<24x256xf32> to vector<1x64xf32>
    %53 = vector.extract_strided_slice %0 {offsets = [3, 0], sizes = [1, 64], strides = [1, 1]} : vector<24x256xf32> to vector<1x64xf32>
    %54 = arith.mulf %51, %51 : vector<256x64xf32>
    %cst_12 = arith.constant dense<0.000000e+00> : vector<64xf32>
    %55 = vector.multi_reduction <add>, %51, %cst_12 [0] : vector<256x64xf32> to vector<64xf32>
    %56 = vector.shape_cast %55 : vector<64xf32> to vector<1x64xf32>
    %cst_13 = arith.constant dense<0.000000e+00> : vector<64xf32>
    %57 = vector.multi_reduction <add>, %54, %cst_13 [0] : vector<256x64xf32> to vector<64xf32>
    %58 = vector.shape_cast %57 : vector<64xf32> to vector<1x64xf32>
    %cst_14 = arith.constant 3.906250e-03 : f32
    %59 = vector.broadcast %cst_14 : f32 to vector<1x64xf32>
    %60 = arith.mulf %56, %59 : vector<1x64xf32>
    %cst_15 = arith.constant 3.906250e-03 : f32
    %61 = vector.broadcast %cst_15 : f32 to vector<1x64xf32>
    %62 = arith.mulf %58, %61 : vector<1x64xf32>
    %63 = arith.mulf %60, %60 : vector<1x64xf32>
    %64 = arith.subf %62, %63 : vector<1x64xf32>
    %cst_16 = arith.constant 0.000000e+00 : f32
    %65 = vector.broadcast %cst_16 : f32 to vector<1x64xf32>
    %66 = arith.maximumf %64, %65 : vector<1x64xf32>
    %cst_17 = arith.constant 9.99999974E-6 : f32
    %67 = vector.broadcast %cst_17 : f32 to vector<1x64xf32>
    %68 = arith.addf %66, %67 : vector<1x64xf32>
    %69 = math.rsqrt %68 : vector<1x64xf32>
    %70 = arith.mulf %52, %69 : vector<1x64xf32>
    %71 = arith.mulf %60, %70 : vector<1x64xf32>
    %72 = arith.subf %53, %71 : vector<1x64xf32>
    %73 = vector.broadcast %70 : vector<1x64xf32> to vector<256x64xf32>
    %74 = arith.mulf %51, %73 : vector<256x64xf32>
    %75 = vector.broadcast %72 : vector<1x64xf32> to vector<256x64xf32>
    %76 = arith.addf %74, %75 : vector<256x64xf32>
    %cst_18 = arith.constant 0.000000e+00 : f32
    %77 = vector.broadcast %cst_18 : f32 to vector<256x64xf32>
    %78 = arith.maximumf %76, %77 : vector<256x64xf32>
    %79 = arith.truncf %78 : vector<256x64xf32> to vector<256x64xbf16>
    %80 = vector.shape_cast %79 : vector<256x64xbf16> to vector<8x32x64xbf16>
    %cst_19 = arith.constant dense<0xFF80> : vector<8x64xbf16>
    %81 = vector.multi_reduction <maximumf>, %80, %cst_19 [1] : vector<8x32x64xbf16> to vector<8x64xbf16>
    %c0_20 = arith.constant 0 : index
    %c0_21 = arith.constant 0 : index
    %82 = vector.load %arg3[%c0_20, %c0_21] : memref<64x128xbf16, #tpu.memory_space<vmem>>, vector<64x128xbf16>
    %cst_22 = arith.constant dense<0.000000e+00> : vector<256x128xf32>
    %83 = tpu.matmul %79, %82, %cst_22 {dimension_numbers = #tpu.dot_dimension_numbers<[1], [0], [0], [1], [0, 0, 1, 1], [], []>} : vector<256x64xbf16>, vector<64x128xbf16>, vector<256x128xf32> -> vector<256x128xf32>
    %84 = vector.extract_strided_slice %0 {offsets = [4, 0], sizes = [1, 128], strides = [1, 1]} : vector<24x256xf32> to vector<1x128xf32>
    %85 = vector.extract_strided_slice %0 {offsets = [5, 0], sizes = [1, 128], strides = [1, 1]} : vector<24x256xf32> to vector<1x128xf32>
    %86 = arith.mulf %83, %83 : vector<256x128xf32>
    %cst_23 = arith.constant dense<0.000000e+00> : vector<128xf32>
    %87 = vector.multi_reduction <add>, %83, %cst_23 [0] : vector<256x128xf32> to vector<128xf32>
    %88 = vector.shape_cast %87 : vector<128xf32> to vector<1x128xf32>
    %cst_24 = arith.constant dense<0.000000e+00> : vector<128xf32>
    %89 = vector.multi_reduction <add>, %86, %cst_24 [0] : vector<256x128xf32> to vector<128xf32>
    %90 = vector.shape_cast %89 : vector<128xf32> to vector<1x128xf32>
    %cst_25 = arith.constant 3.906250e-03 : f32
    %91 = vector.broadcast %cst_25 : f32 to vector<1x128xf32>
    %92 = arith.mulf %88, %91 : vector<1x128xf32>
    %cst_26 = arith.constant 3.906250e-03 : f32
    %93 = vector.broadcast %cst_26 : f32 to vector<1x128xf32>
    %94 = arith.mulf %90, %93 : vector<1x128xf32>
    %95 = arith.mulf %92, %92 : vector<1x128xf32>
    %96 = arith.subf %94, %95 : vector<1x128xf32>
    %cst_27 = arith.constant 0.000000e+00 : f32
    %97 = vector.broadcast %cst_27 : f32 to vector<1x128xf32>
    %98 = arith.maximumf %96, %97 : vector<1x128xf32>
    %cst_28 = arith.constant 9.99999974E-6 : f32
    %99 = vector.broadcast %cst_28 : f32 to vector<1x128xf32>
    %100 = arith.addf %98, %99 : vector<1x128xf32>
    %101 = math.rsqrt %100 : vector<1x128xf32>
    %102 = arith.mulf %84, %101 : vector<1x128xf32>
    %103 = arith.mulf %92, %102 : vector<1x128xf32>
    %104 = arith.subf %85, %103 : vector<1x128xf32>
    %105 = vector.broadcast %102 : vector<1x128xf32> to vector<256x128xf32>
    %106 = arith.mulf %83, %105 : vector<256x128xf32>
    %107 = vector.broadcast %104 : vector<1x128xf32> to vector<256x128xf32>
    %108 = arith.addf %106, %107 : vector<256x128xf32>
    %cst_29 = arith.constant 0.000000e+00 : f32
    %109 = vector.broadcast %cst_29 : f32 to vector<256x128xf32>
    %110 = arith.maximumf %108, %109 : vector<256x128xf32>
    %111 = arith.truncf %110 : vector<256x128xf32> to vector<256x128xbf16>
    %112 = vector.shape_cast %111 : vector<256x128xbf16> to vector<8x32x128xbf16>
    %cst_30 = arith.constant dense<0xFF80> : vector<8x128xbf16>
    %113 = vector.multi_reduction <maximumf>, %112, %cst_30 [1] : vector<8x32x128xbf16> to vector<8x128xbf16>
    %c0_31 = arith.constant 0 : index
    %c0_32 = arith.constant 0 : index
    %114 = vector.load %arg4[%c0_31, %c0_32] : memref<128x256xbf16, #tpu.memory_space<vmem>>, vector<128x256xbf16>
    %cst_33 = arith.constant dense<0.000000e+00> : vector<256x256xf32>
    %115 = tpu.matmul %111, %114, %cst_33 {dimension_numbers = #tpu.dot_dimension_numbers<[1], [0], [0], [1], [0, 0, 1, 1], [], []>} : vector<256x128xbf16>, vector<128x256xbf16>, vector<256x256xf32> -> vector<256x256xf32>
    %116 = vector.extract_strided_slice %0 {offsets = [6, 0], sizes = [1, 256], strides = [1, 1]} : vector<24x256xf32> to vector<1x256xf32>
    %117 = vector.extract_strided_slice %0 {offsets = [7, 0], sizes = [1, 256], strides = [1, 1]} : vector<24x256xf32> to vector<1x256xf32>
    %118 = arith.mulf %115, %115 : vector<256x256xf32>
    %cst_34 = arith.constant dense<0.000000e+00> : vector<256xf32>
    %119 = vector.multi_reduction <add>, %115, %cst_34 [0] : vector<256x256xf32> to vector<256xf32>
    %120 = vector.shape_cast %119 : vector<256xf32> to vector<1x256xf32>
    %cst_35 = arith.constant dense<0.000000e+00> : vector<256xf32>
    %121 = vector.multi_reduction <add>, %118, %cst_35 [0] : vector<256x256xf32> to vector<256xf32>
    %122 = vector.shape_cast %121 : vector<256xf32> to vector<1x256xf32>
    %cst_36 = arith.constant 3.906250e-03 : f32
    %123 = vector.broadcast %cst_36 : f32 to vector<1x256xf32>
    %124 = arith.mulf %120, %123 : vector<1x256xf32>
    %cst_37 = arith.constant 3.906250e-03 : f32
    %125 = vector.broadcast %cst_37 : f32 to vector<1x256xf32>
    %126 = arith.mulf %122, %125 : vector<1x256xf32>
    %127 = arith.mulf %124, %124 : vector<1x256xf32>
    %128 = arith.subf %126, %127 : vector<1x256xf32>
    %cst_38 = arith.constant 0.000000e+00 : f32
    %129 = vector.broadcast %cst_38 : f32 to vector<1x256xf32>
    %130 = arith.maximumf %128, %129 : vector<1x256xf32>
    %cst_39 = arith.constant 9.99999974E-6 : f32
    %131 = vector.broadcast %cst_39 : f32 to vector<1x256xf32>
    %132 = arith.addf %130, %131 : vector<1x256xf32>
    %133 = math.rsqrt %132 : vector<1x256xf32>
    %134 = arith.mulf %116, %133 : vector<1x256xf32>
    %135 = arith.mulf %124, %134 : vector<1x256xf32>
    %136 = arith.subf %117, %135 : vector<1x256xf32>
    %137 = vector.broadcast %134 : vector<1x256xf32> to vector<256x256xf32>
    %138 = arith.mulf %115, %137 : vector<256x256xf32>
    %139 = vector.broadcast %136 : vector<1x256xf32> to vector<256x256xf32>
    %140 = arith.addf %138, %139 : vector<256x256xf32>
    %cst_40 = arith.constant 0.000000e+00 : f32
    %141 = vector.broadcast %cst_40 : f32 to vector<256x256xf32>
    %142 = arith.maximumf %140, %141 : vector<256x256xf32>
    %143 = arith.truncf %142 : vector<256x256xf32> to vector<256x256xbf16>
    %144 = vector.shape_cast %143 : vector<256x256xbf16> to vector<8x32x256xbf16>
    %cst_41 = arith.constant dense<0xFF80> : vector<8x256xbf16>
    %145 = vector.multi_reduction <maximumf>, %144, %cst_41 [1] : vector<8x32x256xbf16> to vector<8x256xbf16>
    %c0_42 = arith.constant 0 : index
    %c0_43 = arith.constant 0 : index
    %146 = vector.load %arg5[%c0_42, %c0_43] : memref<448x256xbf16, #tpu.memory_space<vmem>>, vector<256x256xbf16>
    %cst_44 = arith.constant dense<0.000000e+00> : vector<8x256xf32>
    %147 = tpu.matmul %145, %146, %cst_44 {dimension_numbers = #tpu.dot_dimension_numbers<[1], [0], [0], [1], [0, 0, 1, 1], [], []>} : vector<8x256xbf16>, vector<256x256xbf16>, vector<8x256xf32> -> vector<8x256xf32>
    %c256 = arith.constant 256 : index
    %c0_45 = arith.constant 0 : index
    %148 = vector.load %arg5[%c256, %c0_45] : memref<448x256xbf16, #tpu.memory_space<vmem>>, vector<128x256xbf16>
    %cst_46 = arith.constant dense<0.000000e+00> : vector<8x256xf32>
    %149 = tpu.matmul %113, %148, %cst_46 {dimension_numbers = #tpu.dot_dimension_numbers<[1], [0], [0], [1], [0, 0, 1, 1], [], []>} : vector<8x128xbf16>, vector<128x256xbf16>, vector<8x256xf32> -> vector<8x256xf32>
    %150 = arith.addf %147, %149 : vector<8x256xf32>
    %c384 = arith.constant 384 : index
    %c0_47 = arith.constant 0 : index
    %151 = vector.load %arg5[%c384, %c0_47] : memref<448x256xbf16, #tpu.memory_space<vmem>>, vector<64x256xbf16>
    %cst_48 = arith.constant dense<0.000000e+00> : vector<8x256xf32>
    %152 = tpu.matmul %81, %151, %cst_48 {dimension_numbers = #tpu.dot_dimension_numbers<[1], [0], [0], [1], [0, 0, 1, 1], [], []>} : vector<8x64xbf16>, vector<64x256xbf16>, vector<8x256xf32> -> vector<8x256xf32>
    %153 = arith.addf %150, %152 : vector<8x256xf32>
    %154 = vector.extract_strided_slice %0 {offsets = [8, 0], sizes = [1, 256], strides = [1, 1]} : vector<24x256xf32> to vector<1x256xf32>
    %155 = vector.extract_strided_slice %0 {offsets = [9, 0], sizes = [1, 256], strides = [1, 1]} : vector<24x256xf32> to vector<1x256xf32>
    %156 = arith.mulf %153, %153 : vector<8x256xf32>
    %cst_49 = arith.constant dense<0.000000e+00> : vector<256xf32>
    %157 = vector.multi_reduction <add>, %153, %cst_49 [0] : vector<8x256xf32> to vector<256xf32>
    %158 = vector.shape_cast %157 : vector<256xf32> to vector<1x256xf32>
    %cst_50 = arith.constant dense<0.000000e+00> : vector<256xf32>
    %159 = vector.multi_reduction <add>, %156, %cst_50 [0] : vector<8x256xf32> to vector<256xf32>
    %160 = vector.shape_cast %159 : vector<256xf32> to vector<1x256xf32>
    %cst_51 = arith.constant 1.250000e-01 : f32
    %161 = vector.broadcast %cst_51 : f32 to vector<1x256xf32>
    %162 = arith.mulf %158, %161 : vector<1x256xf32>
    %cst_52 = arith.constant 1.250000e-01 : f32
    %163 = vector.broadcast %cst_52 : f32 to vector<1x256xf32>
    %164 = arith.mulf %160, %163 : vector<1x256xf32>
    %165 = arith.mulf %162, %162 : vector<1x256xf32>
    %166 = arith.subf %164, %165 : vector<1x256xf32>
    %cst_53 = arith.constant 0.000000e+00 : f32
    %167 = vector.broadcast %cst_53 : f32 to vector<1x256xf32>
    %168 = arith.maximumf %166, %167 : vector<1x256xf32>
    %cst_54 = arith.constant 9.99999974E-6 : f32
    %169 = vector.broadcast %cst_54 : f32 to vector<1x256xf32>
    %170 = arith.addf %168, %169 : vector<1x256xf32>
    %171 = math.rsqrt %170 : vector<1x256xf32>
    %172 = arith.mulf %154, %171 : vector<1x256xf32>
    %173 = arith.mulf %162, %172 : vector<1x256xf32>
    %174 = arith.subf %155, %173 : vector<1x256xf32>
    %175 = vector.broadcast %172 : vector<1x256xf32> to vector<8x256xf32>
    %176 = arith.mulf %153, %175 : vector<8x256xf32>
    %177 = vector.broadcast %174 : vector<1x256xf32> to vector<8x256xf32>
    %178 = arith.addf %176, %177 : vector<8x256xf32>
    %cst_55 = arith.constant 0.000000e+00 : f32
    %179 = vector.broadcast %cst_55 : f32 to vector<8x256xf32>
    %180 = arith.maximumf %178, %179 : vector<8x256xf32>
    %181 = arith.truncf %180 : vector<8x256xf32> to vector<8x256xbf16>
    %c0_56 = arith.constant 0 : index
    %c0_57 = arith.constant 0 : index
    %182 = vector.load %arg6[%c0_56, %c0_57] : memref<256x128xbf16, #tpu.memory_space<vmem>>, vector<256x128xbf16>
    %cst_58 = arith.constant dense<0.000000e+00> : vector<8x128xf32>
    %183 = tpu.matmul %181, %182, %cst_58 {dimension_numbers = #tpu.dot_dimension_numbers<[1], [0], [0], [1], [0, 0, 1, 1], [], []>} : vector<8x256xbf16>, vector<256x128xbf16>, vector<8x128xf32> -> vector<8x128xf32>
    %184 = vector.extract_strided_slice %0 {offsets = [10, 0], sizes = [1, 128], strides = [1, 1]} : vector<24x256xf32> to vector<1x128xf32>
    %185 = vector.extract_strided_slice %0 {offsets = [11, 0], sizes = [1, 128], strides = [1, 1]} : vector<24x256xf32> to vector<1x128xf32>
    %186 = arith.mulf %183, %183 : vector<8x128xf32>
    %cst_59 = arith.constant dense<0.000000e+00> : vector<128xf32>
    %187 = vector.multi_reduction <add>, %183, %cst_59 [0] : vector<8x128xf32> to vector<128xf32>
    %188 = vector.shape_cast %187 : vector<128xf32> to vector<1x128xf32>
    %cst_60 = arith.constant dense<0.000000e+00> : vector<128xf32>
    %189 = vector.multi_reduction <add>, %186, %cst_60 [0] : vector<8x128xf32> to vector<128xf32>
    %190 = vector.shape_cast %189 : vector<128xf32> to vector<1x128xf32>
    %cst_61 = arith.constant 1.250000e-01 : f32
    %191 = vector.broadcast %cst_61 : f32 to vector<1x128xf32>
    %192 = arith.mulf %188, %191 : vector<1x128xf32>
    %cst_62 = arith.constant 1.250000e-01 : f32
    %193 = vector.broadcast %cst_62 : f32 to vector<1x128xf32>
    %194 = arith.mulf %190, %193 : vector<1x128xf32>
    %195 = arith.mulf %192, %192 : vector<1x128xf32>
    %196 = arith.subf %194, %195 : vector<1x128xf32>
    %cst_63 = arith.constant 0.000000e+00 : f32
    %197 = vector.broadcast %cst_63 : f32 to vector<1x128xf32>
    %198 = arith.maximumf %196, %197 : vector<1x128xf32>
    %cst_64 = arith.constant 9.99999974E-6 : f32
    %199 = vector.broadcast %cst_64 : f32 to vector<1x128xf32>
    %200 = arith.addf %198, %199 : vector<1x128xf32>
    %201 = math.rsqrt %200 : vector<1x128xf32>
    %202 = arith.mulf %184, %201 : vector<1x128xf32>
    %203 = arith.mulf %192, %202 : vector<1x128xf32>
    %204 = arith.subf %185, %203 : vector<1x128xf32>
    %205 = vector.broadcast %202 : vector<1x128xf32> to vector<8x128xf32>
    %206 = arith.mulf %183, %205 : vector<8x128xf32>
    %207 = vector.broadcast %204 : vector<1x128xf32> to vector<8x128xf32>
    %208 = arith.addf %206, %207 : vector<8x128xf32>
    %cst_65 = arith.constant 0.000000e+00 : f32
    %209 = vector.broadcast %cst_65 : f32 to vector<8x128xf32>
    %210 = arith.maximumf %208, %209 : vector<8x128xf32>
    %211 = arith.truncf %210 : vector<8x128xf32> to vector<8x128xbf16>
    %c0_66 = arith.constant 0 : index
    %c0_67 = arith.constant 0 : index
    %212 = vector.load %arg7[%c0_66, %c0_67] : memref<128x16xbf16, #tpu.memory_space<vmem>>, vector<128x16xbf16>
    %cst_68 = arith.constant dense<0.000000e+00> : vector<8x16xf32>
    %213 = tpu.matmul %211, %212, %cst_68 {dimension_numbers = #tpu.dot_dimension_numbers<[1], [0], [0], [1], [0, 0, 1, 1], [], []>} : vector<8x128xbf16>, vector<128x16xbf16>, vector<8x16xf32> -> vector<8x16xf32>
    %214 = vector.extract_strided_slice %0 {offsets = [12, 0], sizes = [1, 16], strides = [1, 1]} : vector<24x256xf32> to vector<1x16xf32>
    %215 = vector.extract_strided_slice %0 {offsets = [13, 0], sizes = [1, 16], strides = [1, 1]} : vector<24x256xf32> to vector<1x16xf32>
    %216 = arith.mulf %213, %213 : vector<8x16xf32>
    %cst_69 = arith.constant dense<0.000000e+00> : vector<16xf32>
    %217 = vector.multi_reduction <add>, %213, %cst_69 [0] : vector<8x16xf32> to vector<16xf32>
    %218 = vector.shape_cast %217 : vector<16xf32> to vector<1x16xf32>
    %cst_70 = arith.constant dense<0.000000e+00> : vector<16xf32>
    %219 = vector.multi_reduction <add>, %216, %cst_70 [0] : vector<8x16xf32> to vector<16xf32>
    %220 = vector.shape_cast %219 : vector<16xf32> to vector<1x16xf32>
    %cst_71 = arith.constant 1.250000e-01 : f32
    %221 = vector.broadcast %cst_71 : f32 to vector<1x16xf32>
    %222 = arith.mulf %218, %221 : vector<1x16xf32>
    %cst_72 = arith.constant 1.250000e-01 : f32
    %223 = vector.broadcast %cst_72 : f32 to vector<1x16xf32>
    %224 = arith.mulf %220, %223 : vector<1x16xf32>
    %225 = arith.mulf %222, %222 : vector<1x16xf32>
    %226 = arith.subf %224, %225 : vector<1x16xf32>
    %cst_73 = arith.constant 0.000000e+00 : f32
    %227 = vector.broadcast %cst_73 : f32 to vector<1x16xf32>
    %228 = arith.maximumf %226, %227 : vector<1x16xf32>
    %cst_74 = arith.constant 9.99999974E-6 : f32
    %229 = vector.broadcast %cst_74 : f32 to vector<1x16xf32>
    %230 = arith.addf %228, %229 : vector<1x16xf32>
    %231 = math.rsqrt %230 : vector<1x16xf32>
    %232 = arith.mulf %214, %231 : vector<1x16xf32>
    %233 = arith.mulf %222, %232 : vector<1x16xf32>
    %234 = arith.subf %215, %233 : vector<1x16xf32>
    %235 = vector.broadcast %232 : vector<1x16xf32> to vector<8x16xf32>
    %236 = arith.mulf %213, %235 : vector<8x16xf32>
    %237 = vector.broadcast %234 : vector<1x16xf32> to vector<8x16xf32>
    %238 = arith.addf %236, %237 : vector<8x16xf32>
    %cst_75 = arith.constant 0.000000e+00 : f32
    %239 = vector.broadcast %cst_75 : f32 to vector<8x16xf32>
    %240 = arith.maximumf %238, %239 : vector<8x16xf32>
    %241 = arith.truncf %240 : vector<8x16xf32> to vector<8x16xbf16>
    %242 = vector.extract_strided_slice %0 {offsets = [14, 0], sizes = [1, 16], strides = [1, 1]} : vector<24x256xf32> to vector<1x16xf32>
    %243 = arith.extf %241 : vector<8x16xbf16> to vector<8x16xf32>
    %244 = vector.broadcast %242 : vector<1x16xf32> to vector<8x16xf32>
    %245 = arith.mulf %243, %244 : vector<8x16xf32>
    %cst_76 = arith.constant dense<0.000000e+00> : vector<8xf32>
    %246 = vector.multi_reduction <add>, %245, %cst_76 [1] : vector<8x16xf32> to vector<8xf32>
    %247 = vector.shape_cast %246 : vector<8xf32> to vector<8x1xf32>
    %248 = vector.extract_strided_slice %0 {offsets = [15, 0], sizes = [1, 1], strides = [1, 1]} : vector<24x256xf32> to vector<1x1xf32>
    %249 = vector.broadcast %248 : vector<1x1xf32> to vector<8x1xf32>
    %250 = arith.addf %247, %249 : vector<8x1xf32>
    %c0_77 = arith.constant 0 : index
    %c0_78 = arith.constant 0 : index
    %251 = vector.load %arg8[%c0_77, %c0_78] : memref<8x1xf32, #tpu.memory_space<vmem>>, vector<8x1xf32>
    tpu.vector_store %arg8[%c0_77, %c0_78], %250 {strides = array<i32>} : memref<8x1xf32, #tpu.memory_space<vmem>>, vector<8x1xf32>,
    return
  }
}

</mosaic_0001>

<llo_original>
// kernel: netlocald_forward.1
$region0: #{netlocald_forward.1}
  #allocation0 [shape = 'u32[]', space=smem, size = 0x4, offset = 0x4, fixed_abs, tag = 'smem constant byte address 0x4 - core index']
  #allocation1 [shape = 'u32[72,128]{1,0:T(1,128)}', space=vmem, size = 0x9000, scoped, tag = 'internal scratch']
  %s0 = inlined_call_operand.vmem [shape: bf16[256,3], index: 0, kind: input, shape index: {}]
  %s1 = inlined_call_operand.vmem [shape: f32[24,256], index: 1, kind: input, shape index: {}]
  %s2 = inlined_call_operand.vmem [shape: bf16[64,64], index: 2, kind: input, shape index: {}]
  %s3 = inlined_call_operand.vmem [shape: bf16[64,128], index: 3, kind: input, shape index: {}]
  %s4 = inlined_call_operand.vmem [shape: bf16[128,256], index: 4, kind: input, shape index: {}]
  %s5 = inlined_call_operand.vmem [shape: bf16[448,256], index: 5, kind: input, shape index: {}]
  %s6 = inlined_call_operand.vmem [shape: bf16[256,128], index: 6, kind: input, shape index: {}]
  %s7 = inlined_call_operand.vmem [shape: bf16[128,16], index: 7, kind: input, shape index: {}]
  %s8 = inlined_call_operand.vmem [shape: f32[8,1], index: 8, kind: output, shape index: {}]
  %s9 = sld [smem:[#allocation0]]
  $region42: #{netlocald_forward.1} parent=0
    _
  %s11 = ssub.s32 1, %s9
  %s12 = scalar_select 0, %s11, %s9
  // Predicated region
  $region2: #{netlocald_forward.1} parent=0 // pred_check
    _
  $region3: #{netlocald_forward.1} parent=0 // pred_check_branch
    %14 = sbr.rel (0) target = $region5
  $region4: #{netlocald_forward.1} parent=0 // pred_region
    _
  $region5: #{netlocald_forward.1} parent=0 // pred_fallthru
    _
  // Predicated region
  $region6: #{netlocald_forward.1} parent=0 // pred_check
    _
  $region7: #{netlocald_forward.1} parent=0 // pred_check_branch
    %16 = sbr.rel (0) target = $region9
  $region8: #{netlocald_forward.1} parent=0 // pred_region
    _
  $region9: #{netlocald_forward.1} parent=0 // pred_fallthru
    _
  // Predicated region
  $region10: #{netlocald_forward.1} parent=0 // pred_check
    _
  $region11: #{netlocald_forward.1} parent=0 // pred_check_branch
    %18 = sbr.rel (0) target = $region13
  $region12: #{netlocald_forward.1} parent=0 // pred_region
    _
  $region13: #{netlocald_forward.1} parent=0 // pred_fallthru
    _
  // Predicated region
  $region14: #{netlocald_forward.1} parent=0 // pred_check
    _
  $region15: #{netlocald_forward.1} parent=0 // pred_check_branch
    %20 = sbr.rel (0) target = $region17
  $region16: #{netlocald_forward.1} parent=0 // pred_region
    _
  $region17: #{netlocald_forward.1} parent=0 // pred_fallthru
    _
  // Predicated region
  $region18: #{netlocald_forward.1} parent=0 // pred_check
    _
  $region19: #{netlocald_forward.1} parent=0 // pred_check_branch
    %22 = sbr.rel (0) target = $region21
  $region20: #{netlocald_forward.1} parent=0 // pred_region
    _
  $region21: #{netlocald_forward.1} parent=0 // pred_fallthru
    _
  // Predicated region
  $region22: #{netlocald_forward.1} parent=0 // pred_check
    _
  $region23: #{netlocald_forward.1} parent=0 // pred_check_branch
    %24 = sbr.rel (0) target = $region25
  $region24: #{netlocald_forward.1} parent=0 // pred_region
    _
  $region25: #{netlocald_forward.1} parent=0 // pred_fallthru
    _
  // Predicated region
  $region26: #{netlocald_forward.1} parent=0 // pred_check
    _
  $region27: #{netlocald_forward.1} parent=0 // pred_check_branch
    %26 = sbr.rel (0) target = $region29
  $region28: #{netlocald_forward.1} parent=0 // pred_region
    _
  $region29: #{netlocald_forward.1} parent=0 // pred_fallthru
    _
  // Predicated region
  $region30: #{netlocald_forward.1} parent=0 // pred_check
    _
  $region31: #{netlocald_forward.1} parent=0 // pred_check_branch
    %28 = sbr.rel (0) target = $region33
  $region32: #{netlocald_forward.1} parent=0 // pred_region
    _
  $region33: #{netlocald_forward.1} parent=0 // pred_fallthru
    _
  %v30 = vld [vmem:[%s1] sm:$0xff]
  %v31 = vld [vmem:[%s1 + $0x8] sm:$0xff]
  %v32 = vld [vmem:[%s1 + $0x10] sm:$0xff]
  %v33 = vld [vmem:[%s1 + $0x18] sm:$0xff]
  %v34 = vld [vmem:[%s1 + $0x20] sm:$0xff]
  %v35 = vld [vmem:[%s0] sm:$0xf]
  %v36 = vld [vmem:[%s0 + $0x4] sm:$0xf]
  %v37 = vld [vmem:[%s0 + $0x8] sm:$0xf]
  %v38 = vld [vmem:[%s0 + $0xc] sm:$0xf]
  %v39 = vld [vmem:[%s0 + $0x10] sm:$0xf]
  %v40 = vld [vmem:[%s0 + $0x14] sm:$0xf]
  %v41 = vld [vmem:[%s0 + $0x18] sm:$0xf]
  %v42 = vld [vmem:[%s0 + $0x1c] sm:$0xf]
  %v43 = vld [vmem:[%s0 + $0x20] sm:$0xf]
  %v44 = vld [vmem:[%s0 + $0x24] sm:$0xf]
  %v45 = vld [vmem:[%s0 + $0x28] sm:$0xf]
  %v46 = vld [vmem:[%s0 + $0x2c] sm:$0xf]
  %v47 = vld [vmem:[%s0 + $0x30] sm:$0xf]
  %v48 = vld [vmem:[%s0 + $0x34] sm:$0xf]
  %v49 = vld [vmem:[%s0 + $0x38] sm:$0xf]
  %v50 = vld [vmem:[%s0 + $0x3c] sm:$0xf]
  %v51 = vld [vmem:[%s0 + $0x40] sm:$0xf]
  %v52 = vld [vmem:[%s0 + $0x44] sm:$0xf]
  %v53 = vld [vmem:[%s0 + $0x48] sm:$0xf]
  %v54 = vld [vmem:[%s0 + $0x4c] sm:$0xf]
  %v55 = vld [vmem:[%s0 + $0x50] sm:$0xf]
  %v56 = vld [vmem:[%s0 + $0x54] sm:$0xf]
  %v57 = vld [vmem:[%s0 + $0x58] sm:$0xf]
  %v58 = vld [vmem:[%s0 + $0x5c] sm:$0xf]
  %v59 = vld [vmem:[%s0 + $0x60] sm:$0xf]
  %v60 = vld [vmem:[%s0 + $0x64] sm:$0xf]
  %v61 = vld [vmem:[%s0 + $0x68] sm:$0xf]
  %v62 = vld [vmem:[%s0 + $0x6c] sm:$0xf]
  %v63 = vld [vmem:[%s0 + $0x70] sm:$0xf]
  %v64 = vld [vmem:[%s0 + $0x74] sm:$0xf]
  %v65 = vld [vmem:[%s0 + $0x78] sm:$0xf]
  %v66 = vld [vmem:[%s0 + $0x7c] sm:$0xf]
  %v67 = vunpack.c.l.bf16 %v35
  %v68 = vunpack.c.l.bf16 %v36
  %v69 = vunpack.c.l.bf16 %v37
  %v70 = vunpack.c.l.bf16 %v38
  %v71 = vunpack.c.l.bf16 %v39
  %v72 = vunpack.c.l.bf16 %v40
  %v73 = vunpack.c.l.bf16 %v41
  %v74 = vunpack.c.l.bf16 %v42
  %v75 = vunpack.c.l.bf16 %v43
  %v76 = vunpack.c.l.bf16 %v44
  %v77 = vunpack.c.l.bf16 %v45
  %v78 = vunpack.c.l.bf16 %v46
  %v79 = vunpack.c.l.bf16 %v47
  %v80 = vunpack.c.l.bf16 %v48
  %v81 = vunpack.c.l.bf16 %v49
  %v82 = vunpack.c.l.bf16 %v50
  %v83 = vunpack.c.l.bf16 %v51
  %v84 = vunpack.c.l.bf16 %v52
  %v85 = vunpack.c.l.bf16 %v53
  %v86 = vunpack.c.l.bf16 %v54
  %v87 = vunpack.c.l.bf16 %v55
  %v88 = vunpack.c.l.bf16 %v56
  %v89 = vunpack.c.l.bf16 %v57
  %v90 = vunpack.c.l.bf16 %v58
  %v91 = vunpack.c.l.bf16 %v59
  %v92 = vunpack.c.l.bf16 %v60
  %v93 = vunpack.c.l.bf16 %v61
  %v94 = vunpack.c.l.bf16 %v62
  %v95 = vunpack.c.l.bf16 %v63
  %v96 = vunpack.c.l.bf16 %v64
  %v97 = vunpack.c.l.bf16 %v65
  %v98 = vunpack.c.l.bf16 %v66
  %100 = vset.pattern.permute.xlu0 0
  %101 = vperm.xlu0 %100, %v67
  %v102 = vpop.permute.xlu0 %101
  %105 = vset.pattern.permute.xlu0 0
  %106 = vperm.xlu0 %105, %v68
  %v107 = vpop.permute.xlu0 %106
  %110 = vset.pattern.permute.xlu0 0
  %111 = vperm.xlu0 %110, %v69
  %v112 = vpop.permute.xlu0 %111
  %115 = vset.pattern.permute.xlu0 0
  %116 = vperm.xlu0 %115, %v70
  %v117 = vpop.permute.xlu0 %116
  %120 = vset.pattern.permute.xlu0 0
  %121 = vperm.xlu0 %120, %v71
  %v122 = vpop.permute.xlu0 %121
  %125 = vset.pattern.permute.xlu0 0
  %126 = vperm.xlu0 %125, %v72
  %v127 = vpop.permute.xlu0 %126
  %130 = vset.pattern.permute.xlu0 0
  %131 = vperm.xlu0 %130, %v73
  %v132 = vpop.permute.xlu0 %131
  %135 = vset.pattern.permute.xlu0 0
  %136 = vperm.xlu0 %135, %v74
  %v137 = vpop.permute.xlu0 %136
  %140 = vset.pattern.permute.xlu0 0
  %141 = vperm.xlu0 %140, %v75
  %v142 = vpop.permute.xlu0 %141
  %145 = vset.pattern.permute.xlu0 0
  %146 = vperm.xlu0 %145, %v76
  %v147 = vpop.permute.xlu0 %146
  %150 = vset.pattern.permute.xlu0 0
  %151 = vperm.xlu0 %150, %v77
  %v152 = vpop.permute.xlu0 %151
  %155 = vset.pattern.permute.xlu0 0
  %156 = vperm.xlu0 %155, %v78
  %v157 = vpop.permute.xlu0 %156
  %160 = vset.pattern.permute.xlu0 0
  %161 = vperm.xlu0 %160, %v79
  %v162 = vpop.permute.xlu0 %161
  %165 = vset.pattern.permute.xlu0 0
  %166 = vperm.xlu0 %165, %v80
  %v167 = vpop.permute.xlu0 %166
  %170 = vset.pattern.permute.xlu0 0
  %171 = vperm.xlu0 %170, %v81
  %v172 = vpop.permute.xlu0 %171
  %175 = vset.pattern.permute.xlu0 0
  %176 = vperm.xlu0 %175, %v82
  %v177 = vpop.permute.xlu0 %176
  %180 = vset.pattern.permute.xlu0 0
  %181 = vperm.xlu0 %180, %v83
  %v182 = vpop.permute.xlu0 %181
  %185 = vset.pattern.permute.xlu0 0
  %186 = vperm.xlu0 %185, %v84
  %v187 = vpop.permute.xlu0 %186
  %190 = vset.pattern.permute.xlu0 0
  %191 = vperm.xlu0 %190, %v85
  %v192 = vpop.permute.xlu0 %191
  %195 = vset.pattern.permute.xlu0 0
  %196 = vperm.xlu0 %195, %v86
  %v197 = vpop.permute.xlu0 %196
  %200 = vset.pattern.permute.xlu0 0
  %201 = vperm.xlu0 %200, %v87
  %v202 = vpop.permute.xlu0 %201
  %205 = vset.pattern.permute.xlu0 0
  %206 = vperm.xlu0 %205, %v88
  %v207 = vpop.permute.xlu0 %206
  %210 = vset.pattern.permute.xlu0 0
  %211 = vperm.xlu0 %210, %v89
  %v212 = vpop.permute.xlu0 %211
  %215 = vset.pattern.permute.xlu0 0
  %216 = vperm.xlu0 %215, %v90
  %v217 = vpop.permute.xlu0 %216
  %220 = vset.pattern.permute.xlu0 0
  %221 = vperm.xlu0 %220, %v91
  %v222 = vpop.permute.xlu0 %221
  %225 = vset.pattern.permute.xlu0 0
  %226 = vperm.xlu0 %225, %v92
  %v227 = vpop.permute.xlu0 %226
  %230 = vset.pattern.permute.xlu0 0
  %231 = vperm.xlu0 %230, %v93
  %v232 = vpop.permute.xlu0 %231
  %235 = vset.pattern.permute.xlu0 0
  %236 = vperm.xlu0 %235, %v94
  %v237 = vpop.permute.xlu0 %236
  %240 = vset.pattern.permute.xlu0 0
  %241 = vperm.xlu0 %240, %v95
  %v242 = vpop.permute.xlu0 %241
  %245 = vset.pattern.permute.xlu0 0
  %246 = vperm.xlu0 %245, %v96
  %v247 = vpop.permute.xlu0 %246
  %250 = vset.pattern.permute.xlu0 0
  %251 = vperm.xlu0 %250, %v97
  %v252 = vpop.permute.xlu0 %251
  %255 = vset.pattern.permute.xlu0 0
  %256 = vperm.xlu0 %255, %v98
  %v257 = vpop.permute.xlu0 %256
  %v259 = vperm.slane %v34, 0
  %v260 = vmul.f32 %v102, %v259
  %v261 = vmul.f32 %v107, %v259
  %v262 = vmul.f32 %v112, %v259
  %v263 = vmul.f32 %v117, %v259
  %v264 = vmul.f32 %v122, %v259
  %v265 = vmul.f32 %v127, %v259
  %v266 = vmul.f32 %v132, %v259
  %v267 = vmul.f32 %v137, %v259
  %v268 = vmul.f32 %v142, %v259
  %v269 = vmul.f32 %v147, %v259
  %v270 = vmul.f32 %v152, %v259
  %v271 = vmul.f32 %v157, %v259
  %v272 = vmul.f32 %v162, %v259
  %v273 = vmul.f32 %v167, %v259
  %v274 = vmul.f32 %v172, %v259
  %v275 = vmul.f32 %v177, %v259
  %v276 = vmul.f32 %v182, %v259
  %v277 = vmul.f32 %v187, %v259
  %v278 = vmul.f32 %v192, %v259
  %v279 = vmul.f32 %v197, %v259
  %v280 = vmul.f32 %v202, %v259
  %v281 = vmul.f32 %v207, %v259
  %v282 = vmul.f32 %v212, %v259
  %v283 = vmul.f32 %v217, %v259
  %v284 = vmul.f32 %v222, %v259
  %v285 = vmul.f32 %v227, %v259
  %v286 = vmul.f32 %v232, %v259
  %v287 = vmul.f32 %v237, %v259
  %v288 = vmul.f32 %v242, %v259
  %v289 = vmul.f32 %v247, %v259
  %v290 = vmul.f32 %v252, %v259
  %v291 = vmul.f32 %v257, %v259
  %292 = vset.pattern.permute.xlu0 1
  %293 = vperm.xlu0 %292, %v67
  %v294 = vpop.permute.xlu0 %293
  %296 = vset.pattern.permute.xlu0 1
  %297 = vperm.xlu0 %296, %v68
  %v298 = vpop.permute.xlu0 %297
  %300 = vset.pattern.permute.xlu0 1
  %301 = vperm.xlu0 %300, %v69
  %v302 = vpop.permute.xlu0 %301
  %304 = vset.pattern.permute.xlu0 1
  %305 = vperm.xlu0 %304, %v70
  %v306 = vpop.permute.xlu0 %305
  %308 = vset.pattern.permute.xlu0 1
  %309 = vperm.xlu0 %308, %v71
  %v310 = vpop.permute.xlu0 %309
  %312 = vset.pattern.permute.xlu0 1
  %313 = vperm.xlu0 %312, %v72
  %v314 = vpop.permute.xlu0 %313
  %316 = vset.pattern.permute.xlu0 1
  %317 = vperm.xlu0 %316, %v73
  %v318 = vpop.permute.xlu0 %317
  %320 = vset.pattern.permute.xlu0 1
  %321 = vperm.xlu0 %320, %v74
  %v322 = vpop.permute.xlu0 %321
  %324 = vset.pattern.permute.xlu0 1
  %325 = vperm.xlu0 %324, %v75
  %v326 = vpop.permute.xlu0 %325
  %328 = vset.pattern.permute.xlu0 1
  %329 = vperm.xlu0 %328, %v76
  %v330 = vpop.permute.xlu0 %329
  %332 = vset.pattern.permute.xlu0 1
  %333 = vperm.xlu0 %332, %v77
  %v334 = vpop.permute.xlu0 %333
  %336 = vset.pattern.permute.xlu0 1
  %337 = vperm.xlu0 %336, %v78
  %v338 = vpop.permute.xlu0 %337
  %340 = vset.pattern.permute.xlu0 1
  %341 = vperm.xlu0 %340, %v79
  %v342 = vpop.permute.xlu0 %341
  %344 = vset.pattern.permute.xlu0 1
  %345 = vperm.xlu0 %344, %v80
  %v346 = vpop.permute.xlu0 %345
  %348 = vset.pattern.permute.xlu0 1
  %349 = vperm.xlu0 %348, %v81
  %v350 = vpop.permute.xlu0 %349
  %352 = vset.pattern.permute.xlu0 1
  %353 = vperm.xlu0 %352, %v82
  %v354 = vpop.permute.xlu0 %353
  %356 = vset.pattern.permute.xlu0 1
  %357 = vperm.xlu0 %356, %v83
  %v358 = vpop.permute.xlu0 %357
  %360 = vset.pattern.permute.xlu0 1
  %361 = vperm.xlu0 %360, %v84
  %v362 = vpop.permute.xlu0 %361
  %364 = vset.pattern.permute.xlu0 1
  %365 = vperm.xlu0 %364, %v85
  %v366 = vpop.permute.xlu0 %365
  %368 = vset.pattern.permute.xlu0 1
  %369 = vperm.xlu0 %368, %v86
  %v370 = vpop.permute.xlu0 %369
  %372 = vset.pattern.permute.xlu0 1
  %373 = vperm.xlu0 %372, %v87
  %v374 = vpop.permute.xlu0 %373
  %376 = vset.pattern.permute.xlu0 1
  %377 = vperm.xlu0 %376, %v88
  %v378 = vpop.permute.xlu0 %377
  %380 = vset.pattern.permute.xlu0 1
  %381 = vperm.xlu0 %380, %v89
  %v382 = vpop.permute.xlu0 %381
  %384 = vset.pattern.permute.xlu0 1
  %385 = vperm.xlu0 %384, %v90
  %v386 = vpop.permute.xlu0 %385
  %388 = vset.pattern.permute.xlu0 1
  %389 = vperm.xlu0 %388, %v91
  %v390 = vpop.permute.xlu0 %389
  %392 = vset.pattern.permute.xlu0 1
  %393 = vperm.xlu0 %392, %v92
  %v394 = vpop.permute.xlu0 %393
  %396 = vset.pattern.permute.xlu0 1
  %397 = vperm.xlu0 %396, %v93
  %v398 = vpop.permute.xlu0 %397
  %400 = vset.pattern.permute.xlu0 1
  %401 = vperm.xlu0 %400, %v94
  %v402 = vpop.permute.xlu0 %401
  %404 = vset.pattern.permute.xlu0 1
  %405 = vperm.xlu0 %404, %v95
  %v406 = vpop.permute.xlu0 %405
  %408 = vset.pattern.permute.xlu0 1
  %409 = vperm.xlu0 %408, %v96
  %v410 = vpop.permute.xlu0 %409
  %412 = vset.pattern.permute.xlu0 1
  %413 = vperm.xlu0 %412, %v97
  %v414 = vpop.permute.xlu0 %413
  %416 = vset.pattern.permute.xlu0 1
  %417 = vperm.xlu0 %416, %v98
  %v418 = vpop.permute.xlu0 %417
  %v420 = vperm.slane %v34, 1
  %v421 = vmul.f32 %v294, %v420
  %v422 = vmul.f32 %v298, %v420
  %v423 = vmul.f32 %v302, %v420
  %v424 = vmul.f32 %v306, %v420
  %v425 = vmul.f32 %v310, %v420
  %v426 = vmul.f32 %v314, %v420
  %v427 = vmul.f32 %v318, %v420
  %v428 = vmul.f32 %v322, %v420
  %v429 = vmul.f32 %v326, %v420
  %v430 = vmul.f32 %v330, %v420
  %v431 = vmul.f32 %v334, %v420
  %v432 = vmul.f32 %v338, %v420
  %v433 = vmul.f32 %v342, %v420
  %v434 = vmul.f32 %v346, %v420
  %v435 = vmul.f32 %v350, %v420
  %v436 = vmul.f32 %v354, %v420
  %v437 = vmul.f32 %v358, %v420
  %v438 = vmul.f32 %v362, %v420
  %v439 = vmul.f32 %v366, %v420
  %v440 = vmul.f32 %v370, %v420
  %v441 = vmul.f32 %v374, %v420
  %v442 = vmul.f32 %v378, %v420
  %v443 = vmul.f32 %v382, %v420
  %v444 = vmul.f32 %v386, %v420
  %v445 = vmul.f32 %v390, %v420
  %v446 = vmul.f32 %v394, %v420
  %v447 = vmul.f32 %v398, %v420
  %v448 = vmul.f32 %v402, %v420
  %v449 = vmul.f32 %v406, %v420
  %v450 = vmul.f32 %v410, %v420
  %v451 = vmul.f32 %v414, %v420
  %v452 = vmul.f32 %v418, %v420
  %v453 = vadd.f32 %v260, %v421
  %v454 = vadd.f32 %v261, %v422
  %v455 = vadd.f32 %v262, %v423
  %v456 = vadd.f32 %v263, %v424
  %v457 = vadd.f32 %v264, %v425
  %v458 = vadd.f32 %v265, %v426
  %v459 = vadd.f32 %v266, %v427
  %v460 = vadd.f32 %v267, %v428
  %v461 = vadd.f32 %v268, %v429
  %v462 = vadd.f32 %v269, %v430
  %v463 = vadd.f32 %v270, %v431
  %v464 = vadd.f32 %v271, %v432
  %v465 = vadd.f32 %v272, %v433
  %v466 = vadd.f32 %v273, %v434
  %v467 = vadd.f32 %v274, %v435
  %v468 = vadd.f32 %v275, %v436
  %v469 = vadd.f32 %v276, %v437
  %v470 = vadd.f32 %v277, %v438
  %v471 = vadd.f32 %v278, %v439
  %v472 = vadd.f32 %v279, %v440
  %v473 = vadd.f32 %v280, %v441
  %v474 = vadd.f32 %v281, %v442
  %v475 = vadd.f32 %v282, %v443
  %v476 = vadd.f32 %v283, %v444
  %v477 = vadd.f32 %v284, %v445
  %v478 = vadd.f32 %v285, %v446
  %v479 = vadd.f32 %v286, %v447
  %v480 = vadd.f32 %v287, %v448
  %v481 = vadd.f32 %v288, %v449
  %v482 = vadd.f32 %v289, %v450
  %v483 = vadd.f32 %v290, %v451
  %v484 = vadd.f32 %v291, %v452
  %485 = vset.pattern.permute.xlu0 2
  %486 = vperm.xlu0 %485, %v67
  %v487 = vpop.permute.xlu0 %486
  %489 = vset.pattern.permute.xlu0 2
  %490 = vperm.xlu0 %489, %v68
  %v491 = vpop.permute.xlu0 %490
  %493 = vset.pattern.permute.xlu0 2
  %494 = vperm.xlu0 %493, %v69
  %v495 = vpop.permute.xlu0 %494
  %497 = vset.pattern.permute.xlu0 2
  %498 = vperm.xlu0 %497, %v70
  %v499 = vpop.permute.xlu0 %498
  %501 = vset.pattern.permute.xlu0 2
  %502 = vperm.xlu0 %501, %v71
  %v503 = vpop.permute.xlu0 %502
  %505 = vset.pattern.permute.xlu0 2
  %506 = vperm.xlu0 %505, %v72
  %v507 = vpop.permute.xlu0 %506
  %509 = vset.pattern.permute.xlu0 2
  %510 = vperm.xlu0 %509, %v73
  %v511 = vpop.permute.xlu0 %510
  %513 = vset.pattern.permute.xlu0 2
  %514 = vperm.xlu0 %513, %v74
  %v515 = vpop.permute.xlu0 %514
  %517 = vset.pattern.permute.xlu0 2
  %518 = vperm.xlu0 %517, %v75
  %v519 = vpop.permute.xlu0 %518
  %521 = vset.pattern.permute.xlu0 2
  %522 = vperm.xlu0 %521, %v76
  %v523 = vpop.permute.xlu0 %522
  %525 = vset.pattern.permute.xlu0 2
  %526 = vperm.xlu0 %525, %v77
  %v527 = vpop.permute.xlu0 %526
  %529 = vset.pattern.permute.xlu0 2
  %530 = vperm.xlu0 %529, %v78
  %v531 = vpop.permute.xlu0 %530
  %533 = vset.pattern.permute.xlu0 2
  %534 = vperm.xlu0 %533, %v79
  %v535 = vpop.permute.xlu0 %534
  %537 = vset.pattern.permute.xlu0 2
  %538 = vperm.xlu0 %537, %v80
  %v539 = vpop.permute.xlu0 %538
  %541 = vset.pattern.permute.xlu0 2
  %542 = vperm.xlu0 %541, %v81
  %v543 = vpop.permute.xlu0 %542
  %545 = vset.pattern.permute.xlu0 2
  %546 = vperm.xlu0 %545, %v82
  %v547 = vpop.permute.xlu0 %546
  %549 = vset.pattern.permute.xlu0 2
  %550 = vperm.xlu0 %549, %v83
  %v551 = vpop.permute.xlu0 %550
  %553 = vset.pattern.permute.xlu0 2
  %554 = vperm.xlu0 %553, %v84
  %v555 = vpop.permute.xlu0 %554
  %557 = vset.pattern.permute.xlu0 2
  %558 = vperm.xlu0 %557, %v85
  %v559 = vpop.permute.xlu0 %558
  %561 = vset.pattern.permute.xlu0 2
  %562 = vperm.xlu0 %561, %v86
  %v563 = vpop.permute.xlu0 %562
  %565 = vset.pattern.permute.xlu0 2
  %566 = vperm.xlu0 %565, %v87
  %v567 = vpop.permute.xlu0 %566
  %569 = vset.pattern.permute.xlu0 2
  %570 = vperm.xlu0 %569, %v88
  %v571 = vpop.permute.xlu0 %570
  %573 = vset.pattern.permute.xlu0 2
  %574 = vperm.xlu0 %573, %v89
  %v575 = vpop.permute.xlu0 %574
  %577 = vset.pattern.permute.xlu0 2
  %578 = vperm.xlu0 %577, %v90
  %v579 = vpop.permute.xlu0 %578
  %581 = vset.pattern.permute.xlu0 2
  %582 = vperm.xlu0 %581, %v91
  %v583 = vpop.permute.xlu0 %582
  %585 = vset.pattern.permute.xlu0 2
  %586 = vperm.xlu0 %585, %v92
  %v587 = vpop.permute.xlu0 %586
  %589 = vset.pattern.permute.xlu0 2
  %590 = vperm.xlu0 %589, %v93
  %v591 = vpop.permute.xlu0 %590
  %593 = vset.pattern.permute.xlu0 2
  %594 = vperm.xlu0 %593, %v94
  %v595 = vpop.permute.xlu0 %594
  %597 = vset.pattern.permute.xlu0 2
  %598 = vperm.xlu0 %597, %v95
  %v599 = vpop.permute.xlu0 %598
  %601 = vset.pattern.permute.xlu0 2
  %602 = vperm.xlu0 %601, %v96
  %v603 = vpop.permute.xlu0 %602
  %605 = vset.pattern.permute.xlu0 2
  %606 = vperm.xlu0 %605, %v97
  %v607 = vpop.permute.xlu0 %606
  %609 = vset.pattern.permute.xlu0 2
  %610 = vperm.xlu0 %609, %v98
  %v611 = vpop.permute.xlu0 %610
  %v613 = vperm.slane %v34, 2
  %v614 = vmul.f32 %v487, %v613
  %v615 = vmul.f32 %v491, %v613
  %v616 = vmul.f32 %v495, %v613
  %v617 = vmul.f32 %v499, %v613
  %v618 = vmul.f32 %v503, %v613
  %v619 = vmul.f32 %v507, %v613
  %v620 = vmul.f32 %v511, %v613
  %v621 = vmul.f32 %v515, %v613
  %v622 = vmul.f32 %v519, %v613
  %v623 = vmul.f32 %v523, %v613
  %v624 = vmul.f32 %v527, %v613
  %v625 = vmul.f32 %v531, %v613
  %v626 = vmul.f32 %v535, %v613
  %v627 = vmul.f32 %v539, %v613
  %v628 = vmul.f32 %v543, %v613
  %v629 = vmul.f32 %v547, %v613
  %v630 = vmul.f32 %v551, %v613
  %v631 = vmul.f32 %v555, %v613
  %v632 = vmul.f32 %v559, %v613
  %v633 = vmul.f32 %v563, %v613
  %v634 = vmul.f32 %v567, %v613
  %v635 = vmul.f32 %v571, %v613
  %v636 = vmul.f32 %v575, %v613
  %v637 = vmul.f32 %v579, %v613
  %v638 = vmul.f32 %v583, %v613
  %v639 = vmul.f32 %v587, %v613
  %v640 = vmul.f32 %v591, %v613
  %v641 = vmul.f32 %v595, %v613
  %v642 = vmul.f32 %v599, %v613
  %v643 = vmul.f32 %v603, %v613
  %v644 = vmul.f32 %v607, %v613
  %v645 = vmul.f32 %v611, %v613
  %v646 = vadd.f32 %v453, %v614
  %v647 = vadd.f32 %v454, %v615
  %v648 = vadd.f32 %v455, %v616
  %v649 = vadd.f32 %v456, %v617
  %v650 = vadd.f32 %v457, %v618
  %v651 = vadd.f32 %v458, %v619
  %v652 = vadd.f32 %v459, %v620
  %v653 = vadd.f32 %v460, %v621
  %v654 = vadd.f32 %v461, %v622
  %v655 = vadd.f32 %v462, %v623
  %v656 = vadd.f32 %v463, %v624
  %v657 = vadd.f32 %v464, %v625
  %v658 = vadd.f32 %v465, %v626
  %v659 = vadd.f32 %v466, %v627
  %v660 = vadd.f32 %v467, %v628
  %v661 = vadd.f32 %v468, %v629
  %v662 = vadd.f32 %v469, %v630
  %v663 = vadd.f32 %v470, %v631
  %v664 = vadd.f32 %v471, %v632
  %v665 = vadd.f32 %v472, %v633
  %v666 = vadd.f32 %v473, %v634
  %v667 = vadd.f32 %v474, %v635
  %v668 = vadd.f32 %v475, %v636
  %v669 = vadd.f32 %v476, %v637
  %v670 = vadd.f32 %v477, %v638
  %v671 = vadd.f32 %v478, %v639
  %v672 = vadd.f32 %v479, %v640
  %v673 = vadd.f32 %v480, %v641
  %v674 = vadd.f32 %v481, %v642
  %v675 = vadd.f32 %v482, %v643
  %v676 = vadd.f32 %v483, %v644
  %v677 = vadd.f32 %v484, %v645
  %v678 = vmul.f32 %v646, %v646
  %v679 = vmul.f32 %v647, %v647
  %v680 = vmul.f32 %v648, %v648
  %v681 = vmul.f32 %v649, %v649
  %v682 = vmul.f32 %v650, %v650
  %v683 = vmul.f32 %v651, %v651
  %v684 = vmul.f32 %v652, %v652
  %v685 = vmul.f32 %v653, %v653
  %v686 = vmul.f32 %v654, %v654
  %v687 = vmul.f32 %v655, %v655
  %v688 = vmul.f32 %v656, %v656
  %v689 = vmul.f32 %v657, %v657
  %v690 = vmul.f32 %v658, %v658
  %v691 = vmul.f32 %v659, %v659
  %v692 = vmul.f32 %v660, %v660
  %v693 = vmul.f32 %v661, %v661
  %v694 = vmul.f32 %v662, %v662
  %v695 = vmul.f32 %v663, %v663
  %v696 = vmul.f32 %v664, %v664
  %v697 = vmul.f32 %v665, %v665
  %v698 = vmul.f32 %v666, %v666
  %v699 = vmul.f32 %v667, %v667
  %v700 = vmul.f32 %v668, %v668
  %v701 = vmul.f32 %v669, %v669
  %v702 = vmul.f32 %v670, %v670
  %v703 = vmul.f32 %v671, %v671
  %v704 = vmul.f32 %v672, %v672
  %v705 = vmul.f32 %v673, %v673
  %v706 = vmul.f32 %v674, %v674
  %v707 = vmul.f32 %v675, %v675
  %v708 = vmul.f32 %v676, %v676
  %v709 = vmul.f32 %v677, %v677
  %vm710 = vcmask 523264
  %v711 = vsel %vm710, %v646, 0.0
  %v712 = vsel %vm710, %v647, 0.0
  %v713 = vadd.f32 %v711, %v712
  %v714 = vsel %vm710, %v648, 0.0
  %v715 = vadd.f32 %v713, %v714
  %v716 = vsel %vm710, %v649, 0.0
  %v717 = vadd.f32 %v715, %v716
  %v718 = vsel %vm710, %v650, 0.0
  %v719 = vadd.f32 %v717, %v718
  %v720 = vsel %vm710, %v651, 0.0
  %v721 = vadd.f32 %v719, %v720
  %v722 = vsel %vm710, %v652, 0.0
  %v723 = vadd.f32 %v721, %v722
  %v724 = vsel %vm710, %v653, 0.0
  %v725 = vadd.f32 %v723, %v724
  %v726 = vsel %vm710, %v654, 0.0
  %v727 = vadd.f32 %v725, %v726
  %v728 = vsel %vm710, %v655, 0.0
  %v729 = vadd.f32 %v727, %v728
  %v730 = vsel %vm710, %v656, 0.0
  %v731 = vadd.f32 %v729, %v730
  %v732 = vsel %vm710, %v657, 0.0
  %v733 = vadd.f32 %v731, %v732
  %v734 = vsel %vm710, %v658, 0.0
  %v735 = vadd.f32 %v733, %v734
  %v736 = vsel %vm710, %v659, 0.0
  %v737 = vadd.f32 %v735, %v736
  %v738 = vsel %vm710, %v660, 0.0
  %v739 = vadd.f32 %v737, %v738
  %v740 = vsel %vm710, %v661, 0.0
  %v741 = vadd.f32 %v739, %v740
  %v742 = vsel %vm710, %v662, 0.0
  %v743 = vadd.f32 %v741, %v742
  %v744 = vsel %vm710, %v663, 0.0
  %v745 = vadd.f32 %v743, %v744
  %v746 = vsel %vm710, %v664, 0.0
  %v747 = vadd.f32 %v745, %v746
  %v748 = vsel %vm710, %v665, 0.0
  %v749 = vadd.f32 %v747, %v748
  %v750 = vsel %vm710, %v666, 0.0
  %v751 = vadd.f32 %v749, %v750
  %v752 = vsel %vm710, %v667, 0.0
  %v753 = vadd.f32 %v751, %v752
  %v754 = vsel %vm710, %v668, 0.0
  %v755 = vadd.f32 %v753, %v754
  %v756 = vsel %vm710, %v669, 0.0
  %v757 = vadd.f32 %v755, %v756
  %v758 = vsel %vm710, %v670, 0.0
  %v759 = vadd.f32 %v757, %v758
  %v760 = vsel %vm710, %v671, 0.0
  %v761 = vadd.f32 %v759, %v760
  %v762 = vsel %vm710, %v672, 0.0
  %v763 = vadd.f32 %v761, %v762
  %v764 = vsel %vm710, %v673, 0.0
  %v765 = vadd.f32 %v763, %v764
  %v766 = vsel %vm710, %v674, 0.0
  %v767 = vadd.f32 %v765, %v766
  %v768 = vsel %vm710, %v675, 0.0
  %v769 = vadd.f32 %v767, %v768
  %v770 = vsel %vm710, %v676, 0.0
  %v771 = vadd.f32 %v769, %v770
  %v772 = vsel %vm710, %v677, 0.0
  %v773 = vadd.f32 %v771, %v772
  %v774 = vrot.slane %v773, 4
  %v775 = vadd.f32 %v773, %v774
  %v776 = vrot.slane %v775, 2
  %v777 = vadd.f32 %v775, %v776
  %v778 = vrot.slane %v777, 1
  %v779 = vadd.f32 %v777, %v778
  %v780 = vsel %vm710, %v678, 0.0
  %v781 = vsel %vm710, %v679, 0.0
  %v782 = vadd.f32 %v780, %v781
  %v783 = vsel %vm710, %v680, 0.0
  %v784 = vadd.f32 %v782, %v783
  %v785 = vsel %vm710, %v681, 0.0
  %v786 = vadd.f32 %v784, %v785
  %v787 = vsel %vm710, %v682, 0.0
  %v788 = vadd.f32 %v786, %v787
  %v789 = vsel %vm710, %v683, 0.0
  %v790 = vadd.f32 %v788, %v789
  %v791 = vsel %vm710, %v684, 0.0
  %v792 = vadd.f32 %v790, %v791
  %v793 = vsel %vm710, %v685, 0.0
  %v794 = vadd.f32 %v792, %v793
  %v795 = vsel %vm710, %v686, 0.0
  %v796 = vadd.f32 %v794, %v795
  %v797 = vsel %vm710, %v687, 0.0
  %v798 = vadd.f32 %v796, %v797
  %v799 = vsel %vm710, %v688, 0.0
  %v800 = vadd.f32 %v798, %v799
  %v801 = vsel %vm710, %v689, 0.0
  %v802 = vadd.f32 %v800, %v801
  %v803 = vsel %vm710, %v690, 0.0
  %v804 = vadd.f32 %v802, %v803
  %v805 = vsel %vm710, %v691, 0.0
  %v806 = vadd.f32 %v804, %v805
  %v807 = vsel %vm710, %v692, 0.0
  %v808 = vadd.f32 %v806, %v807
  %v809 = vsel %vm710, %v693, 0.0
  %v810 = vadd.f32 %v808, %v809
  %v811 = vsel %vm710, %v694, 0.0
  %v812 = vadd.f32 %v810, %v811
  %v813 = vsel %vm710, %v695, 0.0
  %v814 = vadd.f32 %v812, %v813
  %v815 = vsel %vm710, %v696, 0.0
  %v816 = vadd.f32 %v814, %v815
  %v817 = vsel %vm710, %v697, 0.0
  %v818 = vadd.f32 %v816, %v817
  %v819 = vsel %vm710, %v698, 0.0
  %v820 = vadd.f32 %v818, %v819
  %v821 = vsel %vm710, %v699, 0.0
  %v822 = vadd.f32 %v820, %v821
  %v823 = vsel %vm710, %v700, 0.0
  %v824 = vadd.f32 %v822, %v823
  %v825 = vsel %vm710, %v701, 0.0
  %v826 = vadd.f32 %v824, %v825
  %v827 = vsel %vm710, %v702, 0.0
  %v828 = vadd.f32 %v826, %v827
  %v829 = vsel %vm710, %v703, 0.0
  %v830 = vadd.f32 %v828, %v829
  %v831 = vsel %vm710, %v704, 0.0
  %v832 = vadd.f32 %v830, %v831
  %v833 = vsel %vm710, %v705, 0.0
  %v834 = vadd.f32 %v832, %v833
  %v835 = vsel %vm710, %v706, 0.0
  %v836 = vadd.f32 %v834, %v835
  %v837 = vsel %vm710, %v707, 0.0
  %v838 = vadd.f32 %v836, %v837
  %v839 = vsel %vm710, %v708, 0.0
  %v840 = vadd.f32 %v838, %v839
  %v841 = vsel %vm710, %v709, 0.0
  %v842 = vadd.f32 %v840, %v841
  %v843 = vrot.slane %v842, 4
  %v844 = vadd.f32 %v842, %v843
  %v845 = vrot.slane %v844, 2
  %v846 = vadd.f32 %v844, %v845
  %v847 = vrot.slane %v846, 1
  %v848 = vadd.f32 %v846, %v847
  %v849 = vmul.f32 %v779, 0.00390625
  %v850 = vmul.f32 %v848, 0.00390625
  %v851 = vmul.f32 %v849, %v849
  %v852 = vsub.f32 %v850, %v851
  %v853 = vmax.f32 %v852, 0.0
  %v854 = vadd.f32 %v853, 1e-05
  %v855 = vrsqrt.pop %v854
  %v856 = vmul.f32 %v855, %v854
  %v857 = vmul.f32 %v856, %v855
  %v858 = vmul.f32 0.5, %v857
  %v859 = vsub.f32 1.5, %v858
  %v860 = vmul.f32 %v855, %v859
  %vm861 = vweird.f32 %v854
  %vm862 = vweird.f32 %v855
  %vm863 = vmor %vm861, %vm862
  %v864 = vsel %vm863, %v855, %v860
  %v865 = vmul.f32 %v30, %v864
  %v866 = vmul.f32 %v849, %v865
  %v868 = vrot.slane %v866, 7
  %v870 = vsub.f32 %v30, %v868
  %v871 = vperm.slane %v865, 0
  %v872 = vmul.f32 %v646, %v871
  %v873 = vmul.f32 %v647, %v871
  %v874 = vmul.f32 %v648, %v871
  %v875 = vmul.f32 %v649, %v871
  %v876 = vmul.f32 %v650, %v871
  %v877 = vmul.f32 %v651, %v871
  %v878 = vmul.f32 %v652, %v871
  %v879 = vmul.f32 %v653, %v871
  %v880 = vmul.f32 %v654, %v871
  %v881 = vmul.f32 %v655, %v871
  %v882 = vmul.f32 %v656, %v871
  %v883 = vmul.f32 %v657, %v871
  %v884 = vmul.f32 %v658, %v871
  %v885 = vmul.f32 %v659, %v871
  %v886 = vmul.f32 %v660, %v871
  %v887 = vmul.f32 %v661, %v871
  %v888 = vmul.f32 %v662, %v871
  %v889 = vmul.f32 %v663, %v871
  %v890 = vmul.f32 %v664, %v871
  %v891 = vmul.f32 %v665, %v871
  %v892 = vmul.f32 %v666, %v871
  %v893 = vmul.f32 %v667, %v871
  %v894 = vmul.f32 %v668, %v871
  %v895 = vmul.f32 %v669, %v871
  %v896 = vmul.f32 %v670, %v871
  %v897 = vmul.f32 %v671, %v871
  %v898 = vmul.f32 %v672, %v871
  %v899 = vmul.f32 %v673, %v871
  %v900 = vmul.f32 %v674, %v871
  %v901 = vmul.f32 %v675, %v871
  %v902 = vmul.f32 %v676, %v871
  %v903 = vmul.f32 %v677, %v871
  %v904 = vperm.slane %v870, 1
  %v905 = vadd.f32 %v872, %v904
  %v906 = vadd.f32 %v873, %v904
  %v907 = vadd.f32 %v874, %v904
  %v908 = vadd.f32 %v875, %v904
  %v909 = vadd.f32 %v876, %v904
  %v910 = vadd.f32 %v877, %v904
  %v911 = vadd.f32 %v878, %v904
  %v912 = vadd.f32 %v879, %v904
  %v913 = vadd.f32 %v880, %v904
  %v914 = vadd.f32 %v881, %v904
  %v915 = vadd.f32 %v882, %v904
  %v916 = vadd.f32 %v883, %v904
  %v917 = vadd.f32 %v884, %v904
  %v918 = vadd.f32 %v885, %v904
  %v919 = vadd.f32 %v886, %v904
  %v920 = vadd.f32 %v887, %v904
  %v921 = vadd.f32 %v888, %v904
  %v922 = vadd.f32 %v889, %v904
  %v923 = vadd.f32 %v890, %v904
  %v924 = vadd.f32 %v891, %v904
  %v925 = vadd.f32 %v892, %v904
  %v926 = vadd.f32 %v893, %v904
  %v927 = vadd.f32 %v894, %v904
  %v928 = vadd.f32 %v895, %v904
  %v929 = vadd.f32 %v896, %v904
  %v930 = vadd.f32 %v897, %v904
  %v931 = vadd.f32 %v898, %v904
  %v932 = vadd.f32 %v899, %v904
  %v933 = vadd.f32 %v900, %v904
  %v934 = vadd.f32 %v901, %v904
  %v935 = vadd.f32 %v902, %v904
  %v936 = vadd.f32 %v903, %v904
  %v937 = vmax.f32 %v905, 0.0
  %v938 = vmax.f32 %v906, 0.0
  %v939 = vmax.f32 %v907, 0.0
  %v940 = vmax.f32 %v908, 0.0
  %v941 = vmax.f32 %v909, 0.0
  %v942 = vmax.f32 %v910, 0.0
  %v943 = vmax.f32 %v911, 0.0
  %v944 = vmax.f32 %v912, 0.0
  %v945 = vmax.f32 %v913, 0.0
  %v946 = vmax.f32 %v914, 0.0
  %v947 = vmax.f32 %v915, 0.0
  %v948 = vmax.f32 %v916, 0.0
  %v949 = vmax.f32 %v917, 0.0
  %v950 = vmax.f32 %v918, 0.0
  %v951 = vmax.f32 %v919, 0.0
  %v952 = vmax.f32 %v920, 0.0
  %v953 = vmax.f32 %v921, 0.0
  %v954 = vmax.f32 %v922, 0.0
  %v955 = vmax.f32 %v923, 0.0
  %v956 = vmax.f32 %v924, 0.0
  %v957 = vmax.f32 %v925, 0.0
  %v958 = vmax.f32 %v926, 0.0
  %v959 = vmax.f32 %v927, 0.0
  %v960 = vmax.f32 %v928, 0.0
  %v961 = vmax.f32 %v929, 0.0
  %v962 = vmax.f32 %v930, 0.0
  %v963 = vmax.f32 %v931, 0.0
  %v964 = vmax.f32 %v932, 0.0
  %v965 = vmax.f32 %v933, 0.0
  %v966 = vmax.f32 %v934, 0.0
  %v967 = vmax.f32 %v935, 0.0
  %v968 = vmax.f32 %v936, 0.0
  %v969 = vpack.c.bf16 %v938, %v937
  %v970 = vpack.c.bf16 %v940, %v939
  %v971 = vpack.c.bf16 %v942, %v941
  %v972 = vpack.c.bf16 %v944, %v943
  %v973 = vpack.c.bf16 %v946, %v945
  %v974 = vpack.c.bf16 %v948, %v947
  %v975 = vpack.c.bf16 %v950, %v949
  %v976 = vpack.c.bf16 %v952, %v951
  %v977 = vpack.c.bf16 %v954, %v953
  %v978 = vpack.c.bf16 %v956, %v955
  %v979 = vpack.c.bf16 %v958, %v957
  %v980 = vpack.c.bf16 %v960, %v959
  %v981 = vpack.c.bf16 %v962, %v961
  %v982 = vpack.c.bf16 %v964, %v963
  %v983 = vpack.c.bf16 %v966, %v965
  %v984 = vpack.c.bf16 %v968, %v967
  %v985 = vld [vmem:[%s2] sm:$0xf]
  %v986 = vld [vmem:[%s2 + $0x4] sm:$0xf]
  %v987 = vld [vmem:[%s2 + $0x8] sm:$0xf]
  %v988 = vld [vmem:[%s2 + $0xc] sm:$0xf]
  %v989 = vld [vmem:[%s2 + $0x10] sm:$0xf]
  %v990 = vld [vmem:[%s2 + $0x14] sm:$0xf]
  %v991 = vld [vmem:[%s2 + $0x18] sm:$0xf]
  %v992 = vld [vmem:[%s2 + $0x1c] sm:$0xf]
  %v1001 = vunpack.c.l.b16 %v985
  %v1002 = vunpack.c.l.b16 %v986
  %v1003 = vunpack.c.l.b16 %v987
  %v1004 = vunpack.c.l.b16 %v988
  %v1005 = vunpack.c.l.b16 %v989
  %v1006 = vunpack.c.l.b16 %v990
  %v1007 = vunpack.c.l.b16 %v991
  %v1008 = vunpack.c.l.b16 %v992
  %v1009 = vpack.c.b16 %v1002, %v1001
  %v1010 = vpack.c.b16 %v1004, %v1003
  %v1011 = vpack.c.b16 %v1006, %v1005
  %v1012 = vpack.c.b16 %v1008, %v1007
  %v1018 = vsel %vm710, %v969, 0
  %v1021 = vsel %vm710, %v970, 0
  %v1024 = vsel %vm710, %v971, 0
  %v1027 = vsel %vm710, %v972, 0
  %v1030 = vsel %vm710, %v973, 0
  %v1033 = vsel %vm710, %v974, 0
  %v1036 = vsel %vm710, %v975, 0
  %v1039 = vsel %vm710, %v976, 0
  %v1042 = vsel %vm710, %v977, 0
  %v1045 = vsel %vm710, %v978, 0
  %v1048 = vsel %vm710, %v979, 0
  %v1051 = vsel %vm710, %v980, 0
  %v1054 = vsel %vm710, %v981, 0
  %v1057 = vsel %vm710, %v982, 0
  %v1060 = vsel %vm710, %v983, 0
  %v1063 = vsel %vm710, %v984, 0
  %1065 = vmatpush.bf16.msra.mxu0 0
  %1066 = vmatpush.bf16.msra.mxu0 0
  %1067 = vmatpush.bf16.msra.mxu0 0
  %1068 = vmatpush.bf16.msra.mxu0 0
  %1069 = vmatpush.bf16.msra.mxu0 %v1012
  %1070 = vmatpush.bf16.msra.mxu0 %v1011
  %1071 = vmatpush.bf16.msra.mxu0 %v1010
  %1072 = vmatpush.bf16.msra.mxu0 %v1009
  %1073 = vmatmul.bf16.gmra.mxu0 %v1018
  %v1074 = vpop.f32.mrf.mxu0
  %v1075 = vadd.f32 0.0, %v1074
  %v1076 = vpop.f32.mrf.mxu0
  %v1077 = vadd.f32 0.0, %v1076
  %1078 = vmatmul.bf16.gmra.mxu0 %v1021
  %v1079 = vpop.f32.mrf.mxu0
  %v1080 = vadd.f32 0.0, %v1079
  %v1081 = vpop.f32.mrf.mxu0
  %v1082 = vadd.f32 0.0, %v1081
  %1083 = vmatmul.bf16.gmra.mxu0 %v1024
  %v1084 = vpop.f32.mrf.mxu0
  %v1085 = vadd.f32 0.0, %v1084
  %v1086 = vpop.f32.mrf.mxu0
  %v1087 = vadd.f32 0.0, %v1086
  %1088 = vmatmul.bf16.gmra.mxu0 %v1027
  %v1089 = vpop.f32.mrf.mxu0
  %v1090 = vadd.f32 0.0, %v1089
  %v1091 = vpop.f32.mrf.mxu0
  %v1092 = vadd.f32 0.0, %v1091
  %1093 = vmatmul.bf16.gmra.mxu0 %v1030
  %v1094 = vpop.f32.mrf.mxu0
  %v1095 = vadd.f32 0.0, %v1094
  %v1096 = vpop.f32.mrf.mxu0
  %v1097 = vadd.f32 0.0, %v1096
  %1098 = vmatmul.bf16.gmra.mxu0 %v1033
  %v1099 = vpop.f32.mrf.mxu0
  %v1100 = vadd.f32 0.0, %v1099
  %v1101 = vpop.f32.mrf.mxu0
  %v1102 = vadd.f32 0.0, %v1101
  %1103 = vmatmul.bf16.gmra.mxu0 %v1036
  %v1104 = vpop.f32.mrf.mxu0
  %v1105 = vadd.f32 0.0, %v1104
  %v1106 = vpop.f32.mrf.mxu0
  %v1107 = vadd.f32 0.0, %v1106
  %1108 = vmatmul.bf16.gmra.mxu0 %v1039
  %v1109 = vpop.f32.mrf.mxu0
  %v1110 = vadd.f32 0.0, %v1109
  %v1111 = vpop.f32.mrf.mxu0
  %v1112 = vadd.f32 0.0, %v1111
  %1113 = vmatmul.bf16.gmra.mxu0 %v1042
  %v1114 = vpop.f32.mrf.mxu0
  %v1115 = vadd.f32 0.0, %v1114
  %v1116 = vpop.f32.mrf.mxu0
  %v1117 = vadd.f32 0.0, %v1116
  %1118 = vmatmul.bf16.gmra.mxu0 %v1045
  %v1119 = vpop.f32.mrf.mxu0
  %v1120 = vadd.f32 0.0, %v1119
  %v1121 = vpop.f32.mrf.mxu0
  %v1122 = vadd.f32 0.0, %v1121
  %1123 = vmatmul.bf16.gmra.mxu0 %v1048
  %v1124 = vpop.f32.mrf.mxu0
  %v1125 = vadd.f32 0.0, %v1124
  %v1126 = vpop.f32.mrf.mxu0
  %v1127 = vadd.f32 0.0, %v1126
  %1128 = vmatmul.bf16.gmra.mxu0 %v1051
  %v1129 = vpop.f32.mrf.mxu0
  %v1130 = vadd.f32 0.0, %v1129
  %v1131 = vpop.f32.mrf.mxu0
  %v1132 = vadd.f32 0.0, %v1131
  %1133 = vmatmul.bf16.gmra.mxu0 %v1054
  %v1134 = vpop.f32.mrf.mxu0
  %v1135 = vadd.f32 0.0, %v1134
  %v1136 = vpop.f32.mrf.mxu0
  %v1137 = vadd.f32 0.0, %v1136
  %1138 = vmatmul.bf16.gmra.mxu0 %v1057
  %v1139 = vpop.f32.mrf.mxu0
  %v1140 = vadd.f32 0.0, %v1139
  %v1141 = vpop.f32.mrf.mxu0
  %v1142 = vadd.f32 0.0, %v1141
  %1143 = vmatmul.bf16.gmra.mxu0 %v1060
  %v1144 = vpop.f32.mrf.mxu0
  %v1145 = vadd.f32 0.0, %v1144
  %v1146 = vpop.f32.mrf.mxu0
  %v1147 = vadd.f32 0.0, %v1146
  %1148 = vmatmul.bf16.gmra.mxu0 %v1063
  %v1149 = vpop.f32.mrf.mxu0
  %v1150 = vadd.f32 0.0, %v1149
  %v1151 = vpop.f32.mrf.mxu0
  %v1152 = vadd.f32 0.0, %v1151
  %1153 = vdwg.mxu0
  %v1154 = vmul.f32 %v1075, %v1075
  %v1155 = vmul.f32 %v1077, %v1077
  %v1156 = vmul.f32 %v1080, %v1080
  %v1157 = vmul.f32 %v1082, %v1082
  %v1158 = vmul.f32 %v1085, %v1085
  %v1159 = vmul.f32 %v1087, %v1087
  %v1160 = vmul.f32 %v1090, %v1090
  %v1161 = vmul.f32 %v1092, %v1092
  %v1162 = vmul.f32 %v1095, %v1095
  %v1163 = vmul.f32 %v1097, %v1097
  %v1164 = vmul.f32 %v1100, %v1100
  %v1165 = vmul.f32 %v1102, %v1102
  %v1166 = vmul.f32 %v1105, %v1105
  %v1167 = vmul.f32 %v1107, %v1107
  %v1168 = vmul.f32 %v1110, %v1110
  %v1169 = vmul.f32 %v1112, %v1112
  %v1170 = vmul.f32 %v1115, %v1115
  %v1171 = vmul.f32 %v1117, %v1117
  %v1172 = vmul.f32 %v1120, %v1120
  %v1173 = vmul.f32 %v1122, %v1122
  %v1174 = vmul.f32 %v1125, %v1125
  %v1175 = vmul.f32 %v1127, %v1127
  %v1176 = vmul.f32 %v1130, %v1130
  %v1177 = vmul.f32 %v1132, %v1132
  %v1178 = vmul.f32 %v1135, %v1135
  %v1179 = vmul.f32 %v1137, %v1137
  %v1180 = vmul.f32 %v1140, %v1140
  %v1181 = vmul.f32 %v1142, %v1142
  %v1182 = vmul.f32 %v1145, %v1145
  %v1183 = vmul.f32 %v1147, %v1147
  %v1184 = vmul.f32 %v1150, %v1150
  %v1185 = vmul.f32 %v1152, %v1152
  %v1186 = vsel %vm710, %v1075, 0.0
  %v1187 = vsel %vm710, %v1077, 0.0
  %v1188 = vadd.f32 %v1186, %v1187
  %v1189 = vsel %vm710, %v1080, 0.0
  %v1190 = vadd.f32 %v1188, %v1189
  %v1191 = vsel %vm710, %v1082, 0.0
  %v1192 = vadd.f32 %v1190, %v1191
  %v1193 = vsel %vm710, %v1085, 0.0
  %v1194 = vadd.f32 %v1192, %v1193
  %v1195 = vsel %vm710, %v1087, 0.0
  %v1196 = vadd.f32 %v1194, %v1195
  %v1197 = vsel %vm710, %v1090, 0.0
  %v1198 = vadd.f32 %v1196, %v1197
  %v1199 = vsel %vm710, %v1092, 0.0
  %v1200 = vadd.f32 %v1198, %v1199
  %v1201 = vsel %vm710, %v1095, 0.0
  %v1202 = vadd.f32 %v1200, %v1201
  %v1203 = vsel %vm710, %v1097, 0.0
  %v1204 = vadd.f32 %v1202, %v1203
  %v1205 = vsel %vm710, %v1100, 0.0
  %v1206 = vadd.f32 %v1204, %v1205
  %v1207 = vsel %vm710, %v1102, 0.0
  %v1208 = vadd.f32 %v1206, %v1207
  %v1209 = vsel %vm710, %v1105, 0.0
  %v1210 = vadd.f32 %v1208, %v1209
  %v1211 = vsel %vm710, %v1107, 0.0
  %v1212 = vadd.f32 %v1210, %v1211
  %v1213 = vsel %vm710, %v1110, 0.0
  %v1214 = vadd.f32 %v1212, %v1213
  %v1215 = vsel %vm710, %v1112, 0.0
  %v1216 = vadd.f32 %v1214, %v1215
  %v1217 = vsel %vm710, %v1115, 0.0
  %v1218 = vadd.f32 %v1216, %v1217
  %v1219 = vsel %vm710, %v1117, 0.0
  %v1220 = vadd.f32 %v1218, %v1219
  %v1221 = vsel %vm710, %v1120, 0.0
  %v1222 = vadd.f32 %v1220, %v1221
  %v1223 = vsel %vm710, %v1122, 0.0
  %v1224 = vadd.f32 %v1222, %v1223
  %v1225 = vsel %vm710, %v1125, 0.0
  %v1226 = vadd.f32 %v1224, %v1225
  %v1227 = vsel %vm710, %v1127, 0.0
  %v1228 = vadd.f32 %v1226, %v1227
  %v1229 = vsel %vm710, %v1130, 0.0
  %v1230 = vadd.f32 %v1228, %v1229
  %v1231 = vsel %vm710, %v1132, 0.0
  %v1232 = vadd.f32 %v1230, %v1231
  %v1233 = vsel %vm710, %v1135, 0.0
  %v1234 = vadd.f32 %v1232, %v1233
  %v1235 = vsel %vm710, %v1137, 0.0
  %v1236 = vadd.f32 %v1234, %v1235
  %v1237 = vsel %vm710, %v1140, 0.0
  %v1238 = vadd.f32 %v1236, %v1237
  %v1239 = vsel %vm710, %v1142, 0.0
  %v1240 = vadd.f32 %v1238, %v1239
  %v1241 = vsel %vm710, %v1145, 0.0
  %v1242 = vadd.f32 %v1240, %v1241
  %v1243 = vsel %vm710, %v1147, 0.0
  %v1244 = vadd.f32 %v1242, %v1243
  %v1245 = vsel %vm710, %v1150, 0.0
  %v1246 = vadd.f32 %v1244, %v1245
  %v1247 = vsel %vm710, %v1152, 0.0
  %v1248 = vadd.f32 %v1246, %v1247
  %v1249 = vrot.slane %v1248, 4
  %v1250 = vadd.f32 %v1248, %v1249
  %v1251 = vrot.slane %v1250, 2
  %v1252 = vadd.f32 %v1250, %v1251
  %v1253 = vrot.slane %v1252, 1
  %v1254 = vadd.f32 %v1252, %v1253
  %v1255 = vsel %vm710, %v1154, 0.0
  %v1256 = vsel %vm710, %v1155, 0.0
  %v1257 = vadd.f32 %v1255, %v1256
  %v1258 = vsel %vm710, %v1156, 0.0
  %v1259 = vadd.f32 %v1257, %v1258
  %v1260 = vsel %vm710, %v1157, 0.0
  %v1261 = vadd.f32 %v1259, %v1260
  %v1262 = vsel %vm710, %v1158, 0.0
  %v1263 = vadd.f32 %v1261, %v1262
  %v1264 = vsel %vm710, %v1159, 0.0
  %v1265 = vadd.f32 %v1263, %v1264
  %v1266 = vsel %vm710, %v1160, 0.0
  %v1267 = vadd.f32 %v1265, %v1266
  %v1268 = vsel %vm710, %v1161, 0.0
  %v1269 = vadd.f32 %v1267, %v1268
  %v1270 = vsel %vm710, %v1162, 0.0
  %v1271 = vadd.f32 %v1269, %v1270
  %v1272 = vsel %vm710, %v1163, 0.0
  %v1273 = vadd.f32 %v1271, %v1272
  %v1274 = vsel %vm710, %v1164, 0.0
  %v1275 = vadd.f32 %v1273, %v1274
  %v1276 = vsel %vm710, %v1165, 0.0
  %v1277 = vadd.f32 %v1275, %v1276
  %v1278 = vsel %vm710, %v1166, 0.0
  %v1279 = vadd.f32 %v1277, %v1278
  %v1280 = vsel %vm710, %v1167, 0.0
  %v1281 = vadd.f32 %v1279, %v1280
  %v1282 = vsel %vm710, %v1168, 0.0
  %v1283 = vadd.f32 %v1281, %v1282
  %v1284 = vsel %vm710, %v1169, 0.0
  %v1285 = vadd.f32 %v1283, %v1284
  %v1286 = vsel %vm710, %v1170, 0.0
  %v1287 = vadd.f32 %v1285, %v1286
  %v1288 = vsel %vm710, %v1171, 0.0
  %v1289 = vadd.f32 %v1287, %v1288
  %v1290 = vsel %vm710, %v1172, 0.0
  %v1291 = vadd.f32 %v1289, %v1290
  %v1292 = vsel %vm710, %v1173, 0.0
  %v1293 = vadd.f32 %v1291, %v1292
  %v1294 = vsel %vm710, %v1174, 0.0
  %v1295 = vadd.f32 %v1293, %v1294
  %v1296 = vsel %vm710, %v1175, 0.0
  %v1297 = vadd.f32 %v1295, %v1296
  %v1298 = vsel %vm710, %v1176, 0.0
  %v1299 = vadd.f32 %v1297, %v1298
  %v1300 = vsel %vm710, %v1177, 0.0
  %v1301 = vadd.f32 %v1299, %v1300
  %v1302 = vsel %vm710, %v1178, 0.0
  %v1303 = vadd.f32 %v1301, %v1302
  %v1304 = vsel %vm710, %v1179, 0.0
  %v1305 = vadd.f32 %v1303, %v1304
  %v1306 = vsel %vm710, %v1180, 0.0
  %v1307 = vadd.f32 %v1305, %v1306
  %v1308 = vsel %vm710, %v1181, 0.0
  %v1309 = vadd.f32 %v1307, %v1308
  %v1310 = vsel %vm710, %v1182, 0.0
  %v1311 = vadd.f32 %v1309, %v1310
  %v1312 = vsel %vm710, %v1183, 0.0
  %v1313 = vadd.f32 %v1311, %v1312
  %v1314 = vsel %vm710, %v1184, 0.0
  %v1315 = vadd.f32 %v1313, %v1314
  %v1316 = vsel %vm710, %v1185, 0.0
  %v1317 = vadd.f32 %v1315, %v1316
  %v1318 = vrot.slane %v1317, 4
  %v1319 = vadd.f32 %v1317, %v1318
  %v1320 = vrot.slane %v1319, 2
  %v1321 = vadd.f32 %v1319, %v1320
  %v1322 = vrot.slane %v1321, 1
  %v1323 = vadd.f32 %v1321, %v1322
  %v1324 = vmul.f32 %v1254, 0.00390625
  %v1325 = vmul.f32 %v1323, 0.00390625
  %v1326 = vmul.f32 %v1324, %v1324
  %v1327 = vsub.f32 %v1325, %v1326
  %v1328 = vmax.f32 %v1327, 0.0
  %v1329 = vadd.f32 %v1328, 1e-05
  %v1330 = vrsqrt.pop %v1329
  %v1331 = vmul.f32 %v1330, %v1329
  %v1332 = vmul.f32 %v1331, %v1330
  %v1333 = vmul.f32 0.5, %v1332
  %v1334 = vsub.f32 1.5, %v1333
  %v1335 = vmul.f32 %v1330, %v1334
  %vm1336 = vweird.f32 %v1329
  %vm1337 = vweird.f32 %v1330
  %vm1338 = vmor %vm1336, %vm1337
  %v1339 = vsel %vm1338, %v1330, %v1335
  %v1340 = vmul.f32 %v30, %v1339
  %v1341 = vmul.f32 %v1324, %v1340
  %v1343 = vrot.slane %v1341, 7
  %v1345 = vsub.f32 %v30, %v1343
  %v1346 = vperm.slane %v1340, 2
  %v1347 = vmul.f32 %v1075, %v1346
  %v1348 = vmul.f32 %v1077, %v1346
  %v1349 = vmul.f32 %v1080, %v1346
  %v1350 = vmul.f32 %v1082, %v1346
  %v1351 = vmul.f32 %v1085, %v1346
  %v1352 = vmul.f32 %v1087, %v1346
  %v1353 = vmul.f32 %v1090, %v1346
  %v1354 = vmul.f32 %v1092, %v1346
  %v1355 = vmul.f32 %v1095, %v1346
  %v1356 = vmul.f32 %v1097, %v1346
  %v1357 = vmul.f32 %v1100, %v1346
  %v1358 = vmul.f32 %v1102, %v1346
  %v1359 = vmul.f32 %v1105, %v1346
  %v1360 = vmul.f32 %v1107, %v1346
  %v1361 = vmul.f32 %v1110, %v1346
  %v1362 = vmul.f32 %v1112, %v1346
  %v1363 = vmul.f32 %v1115, %v1346
  %v1364 = vmul.f32 %v1117, %v1346
  %v1365 = vmul.f32 %v1120, %v1346
  %v1366 = vmul.f32 %v1122, %v1346
  %v1367 = vmul.f32 %v1125, %v1346
  %v1368 = vmul.f32 %v1127, %v1346
  %v1369 = vmul.f32 %v1130, %v1346
  %v1370 = vmul.f32 %v1132, %v1346
  %v1371 = vmul.f32 %v1135, %v1346
  %v1372 = vmul.f32 %v1137, %v1346
  %v1373 = vmul.f32 %v1140, %v1346
  %v1374 = vmul.f32 %v1142, %v1346
  %v1375 = vmul.f32 %v1145, %v1346
  %v1376 = vmul.f32 %v1147, %v1346
  %v1377 = vmul.f32 %v1150, %v1346
  %v1378 = vmul.f32 %v1152, %v1346
  %v1379 = vperm.slane %v1345, 3
  %v1380 = vadd.f32 %v1347, %v1379
  %v1381 = vadd.f32 %v1348, %v1379
  %v1382 = vadd.f32 %v1349, %v1379
  %v1383 = vadd.f32 %v1350, %v1379
  %v1384 = vadd.f32 %v1351, %v1379
  %v1385 = vadd.f32 %v1352, %v1379
  %v1386 = vadd.f32 %v1353, %v1379
  %v1387 = vadd.f32 %v1354, %v1379
  %v1388 = vadd.f32 %v1355, %v1379
  %v1389 = vadd.f32 %v1356, %v1379
  %v1390 = vadd.f32 %v1357, %v1379
  %v1391 = vadd.f32 %v1358, %v1379
  %v1392 = vadd.f32 %v1359, %v1379
  %v1393 = vadd.f32 %v1360, %v1379
  %v1394 = vadd.f32 %v1361, %v1379
  %v1395 = vadd.f32 %v1362, %v1379
  %v1396 = vadd.f32 %v1363, %v1379
  %v1397 = vadd.f32 %v1364, %v1379
  %v1398 = vadd.f32 %v1365, %v1379
  %v1399 = vadd.f32 %v1366, %v1379
  %v1400 = vadd.f32 %v1367, %v1379
  %v1401 = vadd.f32 %v1368, %v1379
  %v1402 = vadd.f32 %v1369, %v1379
  %v1403 = vadd.f32 %v1370, %v1379
  %v1404 = vadd.f32 %v1371, %v1379
  %v1405 = vadd.f32 %v1372, %v1379
  %v1406 = vadd.f32 %v1373, %v1379
  %v1407 = vadd.f32 %v1374, %v1379
  %v1408 = vadd.f32 %v1375, %v1379
  %v1409 = vadd.f32 %v1376, %v1379
  %v1410 = vadd.f32 %v1377, %v1379
  %v1411 = vadd.f32 %v1378, %v1379
  %v1412 = vmax.f32 %v1380, 0.0
  %v1413 = vmax.f32 %v1381, 0.0
  %v1414 = vmax.f32 %v1382, 0.0
  %v1415 = vmax.f32 %v1383, 0.0
  %v1416 = vmax.f32 %v1384, 0.0
  %v1417 = vmax.f32 %v1385, 0.0
  %v1418 = vmax.f32 %v1386, 0.0
  %v1419 = vmax.f32 %v1387, 0.0
  %v1420 = vmax.f32 %v1388, 0.0
  %v1421 = vmax.f32 %v1389, 0.0
  %v1422 = vmax.f32 %v1390, 0.0
  %v1423 = vmax.f32 %v1391, 0.0
  %v1424 = vmax.f32 %v1392, 0.0
  %v1425 = vmax.f32 %v1393, 0.0
  %v1426 = vmax.f32 %v1394, 0.0
  %v1427 = vmax.f32 %v1395, 0.0
  %v1428 = vmax.f32 %v1396, 0.0
  %v1429 = vmax.f32 %v1397, 0.0
  %v1430 = vmax.f32 %v1398, 0.0
  %v1431 = vmax.f32 %v1399, 0.0
  %v1432 = vmax.f32 %v1400, 0.0
  %v1433 = vmax.f32 %v1401, 0.0
  %v1434 = vmax.f32 %v1402, 0.0
  %v1435 = vmax.f32 %v1403, 0.0
  %v1436 = vmax.f32 %v1404, 0.0
  %v1437 = vmax.f32 %v1405, 0.0
  %v1438 = vmax.f32 %v1406, 0.0
  %v1439 = vmax.f32 %v1407, 0.0
  %v1440 = vmax.f32 %v1408, 0.0
  %v1441 = vmax.f32 %v1409, 0.0
  %v1442 = vmax.f32 %v1410, 0.0
  %v1443 = vmax.f32 %v1411, 0.0
  %v1444 = vpack.c.bf16 %v1412, %v1412
  %v1445 = vpack.c.bf16 %v1413, %v1413
  %v1446 = vpack.c.bf16 %v1414, %v1414
  %v1447 = vpack.c.bf16 %v1415, %v1415
  %v1448 = vpack.c.bf16 %v1416, %v1416
  %v1449 = vpack.c.bf16 %v1417, %v1417
  %v1450 = vpack.c.bf16 %v1418, %v1418
  %v1451 = vpack.c.bf16 %v1419, %v1419
  %v1452 = vpack.c.bf16 %v1420, %v1420
  %v1453 = vpack.c.bf16 %v1421, %v1421
  %v1454 = vpack.c.bf16 %v1422, %v1422
  %v1455 = vpack.c.bf16 %v1423, %v1423
  %v1456 = vpack.c.bf16 %v1424, %v1424
  %v1457 = vpack.c.bf16 %v1425, %v1425
  %v1458 = vpack.c.bf16 %v1426, %v1426
  %v1459 = vpack.c.bf16 %v1427, %v1427
  %v1460 = vpack.c.bf16 %v1428, %v1428
  %v1461 = vpack.c.bf16 %v1429, %v1429
  %v1462 = vpack.c.bf16 %v1430, %v1430
  %v1463 = vpack.c.bf16 %v1431, %v1431
  %v1464 = vpack.c.bf16 %v1432, %v1432
  %v1465 = vpack.c.bf16 %v1433, %v1433
  %v1466 = vpack.c.bf16 %v1434, %v1434
  %v1467 = vpack.c.bf16 %v1435, %v1435
  %v1468 = vpack.c.bf16 %v1436, %v1436
  %v1469 = vpack.c.bf16 %v1437, %v1437
  %v1470 = vpack.c.bf16 %v1438, %v1438
  %v1471 = vpack.c.bf16 %v1439, %v1439
  %v1472 = vpack.c.bf16 %v1440, %v1440
  %v1473 = vpack.c.bf16 %v1441, %v1441
  %v1474 = vpack.c.bf16 %v1442, %v1442
  %v1475 = vpack.c.bf16 %v1443, %v1443
  %v1476 = vunpack.c.l.bf16 %v1444
  %v1477 = vunpack.c.l.bf16 %v1445
  %v1478 = vunpack.c.l.bf16 %v1446
  %v1479 = vunpack.c.l.bf16 %v1447
  %v1480 = vunpack.c.l.bf16 %v1448
  %v1481 = vunpack.c.l.bf16 %v1449
  %v1482 = vunpack.c.l.bf16 %v1450
  %v1483 = vunpack.c.l.bf16 %v1451
  %v1484 = vunpack.c.l.bf16 %v1452
  %v1485 = vunpack.c.l.bf16 %v1453
  %v1486 = vunpack.c.l.bf16 %v1454
  %v1487 = vunpack.c.l.bf16 %v1455
  %v1488 = vunpack.c.l.bf16 %v1456
  %v1489 = vunpack.c.l.bf16 %v1457
  %v1490 = vunpack.c.l.bf16 %v1458
  %v1491 = vunpack.c.l.bf16 %v1459
  %v1492 = vunpack.c.l.bf16 %v1460
  %v1493 = vunpack.c.l.bf16 %v1461
  %v1494 = vunpack.c.l.bf16 %v1462
  %v1495 = vunpack.c.l.bf16 %v1463
  %v1496 = vunpack.c.l.bf16 %v1464
  %v1497 = vunpack.c.l.bf16 %v1465
  %v1498 = vunpack.c.l.bf16 %v1466
  %v1499 = vunpack.c.l.bf16 %v1467
  %v1500 = vunpack.c.l.bf16 %v1468
  %v1501 = vunpack.c.l.bf16 %v1469
  %v1502 = vunpack.c.l.bf16 %v1470
  %v1503 = vunpack.c.l.bf16 %v1471
  %v1504 = vunpack.c.l.bf16 %v1472
  %v1505 = vunpack.c.l.bf16 %v1473
  %v1506 = vunpack.c.l.bf16 %v1474
  %v1507 = vunpack.c.l.bf16 %v1475
  %v1508 = vsel %vm710, %v1476, -inf
  %v1509 = vsel %vm710, %v1477, -inf
  %v1510 = vmax.f32 %v1508, %v1509
  %v1511 = vsel %vm710, %v1478, -inf
  %v1512 = vmax.f32 %v1510, %v1511
  %v1513 = vsel %vm710, %v1479, -inf
  %v1514 = vmax.f32 %v1512, %v1513
  %v1515 = vrot.slane %v1514, 4
  %v1516 = vmax.f32 %v1514, %v1515
  %v1517 = vrot.slane %v1516, 2
  %v1518 = vmax.f32 %v1516, %v1517
  %v1519 = vrot.slane %v1518, 1
  %v1520 = vmax.f32 %v1518, %v1519
  %v1521 = vsel %vm710, %v1480, -inf
  %v1522 = vsel %vm710, %v1481, -inf
  %v1523 = vmax.f32 %v1521, %v1522
  %v1524 = vsel %vm710, %v1482, -inf
  %v1525 = vmax.f32 %v1523, %v1524
  %v1526 = vsel %vm710, %v1483, -inf
  %v1527 = vmax.f32 %v1525, %v1526
  %v1528 = vrot.slane %v1527, 4
  %v1529 = vmax.f32 %v1527, %v1528
  %v1530 = vrot.slane %v1529, 2
  %v1531 = vmax.f32 %v1529, %v1530
  %v1532 = vrot.slane %v1531, 1
  %v1533 = vmax.f32 %v1531, %v1532
  %v1534 = vsel %vm710, %v1484, -inf
  %v1535 = vsel %vm710, %v1485, -inf
  %v1536 = vmax.f32 %v1534, %v1535
  %v1537 = vsel %vm710, %v1486, -inf
  %v1538 = vmax.f32 %v1536, %v1537
  %v1539 = vsel %vm710, %v1487, -inf
  %v1540 = vmax.f32 %v1538, %v1539
  %v1541 = vrot.slane %v1540, 4
  %v1542 = vmax.f32 %v1540, %v1541
  %v1543 = vrot.slane %v1542, 2
  %v1544 = vmax.f32 %v1542, %v1543
  %v1545 = vrot.slane %v1544, 1
  %v1546 = vmax.f32 %v1544, %v1545
  %v1547 = vsel %vm710, %v1488, -inf
  %v1548 = vsel %vm710, %v1489, -inf
  %v1549 = vmax.f32 %v1547, %v1548
  %v1550 = vsel %vm710, %v1490, -inf
  %v1551 = vmax.f32 %v1549, %v1550
  %v1552 = vsel %vm710, %v1491, -inf
  %v1553 = vmax.f32 %v1551, %v1552
  %v1554 = vrot.slane %v1553, 4
  %v1555 = vmax.f32 %v1553, %v1554
  %v1556 = vrot.slane %v1555, 2
  %v1557 = vmax.f32 %v1555, %v1556
  %v1558 = vrot.slane %v1557, 1
  %v1559 = vmax.f32 %v1557, %v1558
  %v1560 = vsel %vm710, %v1492, -inf
  %v1561 = vsel %vm710, %v1493, -inf
  %v1562 = vmax.f32 %v1560, %v1561
  %v1563 = vsel %vm710, %v1494, -inf
  %v1564 = vmax.f32 %v1562, %v1563
  %v1565 = vsel %vm710, %v1495, -inf
  %v1566 = vmax.f32 %v1564, %v1565
  %v1567 = vrot.slane %v1566, 4
  %v1568 = vmax.f32 %v1566, %v1567
  %v1569 = vrot.slane %v1568, 2
  %v1570 = vmax.f32 %v1568, %v1569
  %v1571 = vrot.slane %v1570, 1
  %v1572 = vmax.f32 %v1570, %v1571
  %v1573 = vsel %vm710, %v1496, -inf
  %v1574 = vsel %vm710, %v1497, -inf
  %v1575 = vmax.f32 %v1573, %v1574
  %v1576 = vsel %vm710, %v1498, -inf
  %v1577 = vmax.f32 %v1575, %v1576
  %v1578 = vsel %vm710, %v1499, -inf
  %v1579 = vmax.f32 %v1577, %v1578
  %v1580 = vrot.slane %v1579, 4
  %v1581 = vmax.f32 %v1579, %v1580
  %v1582 = vrot.slane %v1581, 2
  %v1583 = vmax.f32 %v1581, %v1582
  %v1584 = vrot.slane %v1583, 1
  %v1585 = vmax.f32 %v1583, %v1584
  %v1586 = vsel %vm710, %v1500, -inf
  %v1587 = vsel %vm710, %v1501, -inf
  %v1588 = vmax.f32 %v1586, %v1587
  %v1589 = vsel %vm710, %v1502, -inf
  %v1590 = vmax.f32 %v1588, %v1589
  %v1591 = vsel %vm710, %v1503, -inf
  %v1592 = vmax.f32 %v1590, %v1591
  %v1593 = vrot.slane %v1592, 4
  %v1594 = vmax.f32 %v1592, %v1593
  %v1595 = vrot.slane %v1594, 2
  %v1596 = vmax.f32 %v1594, %v1595
  %v1597 = vrot.slane %v1596, 1
  %v1598 = vmax.f32 %v1596, %v1597
  %v1599 = vsel %vm710, %v1504, -inf
  %v1600 = vsel %vm710, %v1505, -inf
  %v1601 = vmax.f32 %v1599, %v1600
  %v1602 = vsel %vm710, %v1506, -inf
  %v1603 = vmax.f32 %v1601, %v1602
  %v1604 = vsel %vm710, %v1507, -inf
  %v1605 = vmax.f32 %v1603, %v1604
  %v1606 = vrot.slane %v1605, 4
  %v1607 = vmax.f32 %v1605, %v1606
  %v1608 = vrot.slane %v1607, 2
  %v1609 = vmax.f32 %v1607, %v1608
  %v1610 = vrot.slane %v1609, 1
  %v1611 = vmax.f32 %v1609, %v1610
  %v1612 = vpack.c.bf16 %v1520, %v1520
  %v1613 = vpack.c.bf16 %v1533, %v1533
  %v1614 = vpack.c.bf16 %v1546, %v1546
  %v1615 = vpack.c.bf16 %v1559, %v1559
  %v1616 = vpack.c.bf16 %v1572, %v1572
  %v1617 = vpack.c.bf16 %v1585, %v1585
  %v1618 = vpack.c.bf16 %v1598, %v1598
  %v1619 = vpack.c.bf16 %v1611, %v1611
  %v1620 = vld [vmem:[%s3] sm:$0xf]
  %v1621 = vld [vmem:[%s3 + $0x4] sm:$0xf]
  %v1622 = vld [vmem:[%s3 + $0x8] sm:$0xf]
  %v1623 = vld [vmem:[%s3 + $0xc] sm:$0xf]
  %v1624 = vld [vmem:[%s3 + $0x10] sm:$0xf]
  %v1625 = vld [vmem:[%s3 + $0x14] sm:$0xf]
  %v1626 = vld [vmem:[%s3 + $0x18] sm:$0xf]
  %v1627 = vld [vmem:[%s3 + $0x1c] sm:$0xf]
  %v1660 = vunpack.c.l.b16 %v1444
  %v1661 = vunpack.c.l.b16 %v1445
  %v1662 = vunpack.c.l.b16 %v1446
  %v1663 = vunpack.c.l.b16 %v1447
  %v1664 = vunpack.c.l.b16 %v1448
  %v1665 = vunpack.c.l.b16 %v1449
  %v1666 = vunpack.c.l.b16 %v1450
  %v1667 = vunpack.c.l.b16 %v1451
  %v1668 = vunpack.c.l.b16 %v1452
  %v1669 = vunpack.c.l.b16 %v1453
  %v1670 = vunpack.c.l.b16 %v1454
  %v1671 = vunpack.c.l.b16 %v1455
  %v1672 = vunpack.c.l.b16 %v1456
  %v1673 = vunpack.c.l.b16 %v1457
  %v1674 = vunpack.c.l.b16 %v1458
  %v1675 = vunpack.c.l.b16 %v1459
  %v1676 = vunpack.c.l.b16 %v1460
  %v1677 = vunpack.c.l.b16 %v1461
  %v1678 = vunpack.c.l.b16 %v1462
  %v1679 = vunpack.c.l.b16 %v1463
  %v1680 = vunpack.c.l.b16 %v1464
  %v1681 = vunpack.c.l.b16 %v1465
  %v1682 = vunpack.c.l.b16 %v1466
  %v1683 = vunpack.c.l.b16 %v1467
  %v1684 = vunpack.c.l.b16 %v1468
  %v1685 = vunpack.c.l.b16 %v1469
  %v1686 = vunpack.c.l.b16 %v1470
  %v1687 = vunpack.c.l.b16 %v1471
  %v1688 = vunpack.c.l.b16 %v1472
  %v1689 = vunpack.c.l.b16 %v1473
  %v1690 = vunpack.c.l.b16 %v1474
  %v1691 = vunpack.c.l.b16 %v1475
  %v1692 = vpack.c.b16 %v1661, %v1660
  %v1693 = vpack.c.b16 %v1663, %v1662
  %v1694 = vpack.c.b16 %v1665, %v1664
  %v1695 = vpack.c.b16 %v1667, %v1666
  %v1696 = vpack.c.b16 %v1669, %v1668
  %v1697 = vpack.c.b16 %v1671, %v1670
  %v1698 = vpack.c.b16 %v1673, %v1672
  %v1699 = vpack.c.b16 %v1675, %v1674
  %v1700 = vpack.c.b16 %v1677, %v1676
  %v1701 = vpack.c.b16 %v1679, %v1678
  %v1702 = vpack.c.b16 %v1681, %v1680
  %v1703 = vpack.c.b16 %v1683, %v1682
  %v1704 = vpack.c.b16 %v1685, %v1684
  %v1705 = vpack.c.b16 %v1687, %v1686
  %v1706 = vpack.c.b16 %v1689, %v1688
  %v1707 = vpack.c.b16 %v1691, %v1690
  %v1716 = vunpack.c.l.b16 %v1620
  %v1717 = vunpack.c.l.b16 %v1621
  %v1718 = vunpack.c.l.b16 %v1622
  %v1719 = vunpack.c.l.b16 %v1623
  %v1720 = vunpack.c.l.b16 %v1624
  %v1721 = vunpack.c.l.b16 %v1625
  %v1722 = vunpack.c.l.b16 %v1626
  %v1723 = vunpack.c.l.b16 %v1627
  %v1724 = vpack.c.b16 %v1717, %v1716
  %v1725 = vpack.c.b16 %v1719, %v1718
  %v1726 = vpack.c.b16 %v1721, %v1720
  %v1727 = vpack.c.b16 %v1723, %v1722
  %v1733 = vsel %vm710, %v1692, 0
  %v1736 = vsel %vm710, %v1693, 0
  %v1739 = vsel %vm710, %v1694, 0
  %v1742 = vsel %vm710, %v1695, 0
  %v1745 = vsel %vm710, %v1696, 0
  %v1748 = vsel %vm710, %v1697, 0
  %v1751 = vsel %vm710, %v1698, 0
  %v1754 = vsel %vm710, %v1699, 0
  %v1757 = vsel %vm710, %v1700, 0
  %v1760 = vsel %vm710, %v1701, 0
  %v1763 = vsel %vm710, %v1702, 0
  %v1766 = vsel %vm710, %v1703, 0
  %v1769 = vsel %vm710, %v1704, 0
  %v1772 = vsel %vm710, %v1705, 0
  %v1775 = vsel %vm710, %v1706, 0
  %v1778 = vsel %vm710, %v1707, 0
  %1780 = vmatpush.bf16.msra.mxu0 0
  %1781 = vmatpush.bf16.msra.mxu0 0
  %1782 = vmatpush.bf16.msra.mxu0 0
  %1783 = vmatpush.bf16.msra.mxu0 0
  %1784 = vmatpush.bf16.msra.mxu0 %v1727
  %1785 = vmatpush.bf16.msra.mxu0 %v1726
  %1786 = vmatpush.bf16.msra.mxu0 %v1725
  %1787 = vmatpush.bf16.msra.mxu0 %v1724
  %1788 = vmatmul.bf16.gmra.mxu0 %v1733
  %v1789 = vpop.f32.mrf.mxu0
  %v1790 = vadd.f32 0.0, %v1789
  %v1791 = vpop.f32.mrf.mxu0
  %v1792 = vadd.f32 0.0, %v1791
  %1793 = vmatmul.bf16.gmra.mxu0 %v1736
  %v1794 = vpop.f32.mrf.mxu0
  %v1795 = vadd.f32 0.0, %v1794
  %v1796 = vpop.f32.mrf.mxu0
  %v1797 = vadd.f32 0.0, %v1796
  %1798 = vmatmul.bf16.gmra.mxu0 %v1739
  %v1799 = vpop.f32.mrf.mxu0
  %v1800 = vadd.f32 0.0, %v1799
  %v1801 = vpop.f32.mrf.mxu0
  %v1802 = vadd.f32 0.0, %v1801
  %1803 = vmatmul.bf16.gmra.mxu0 %v1742
  %v1804 = vpop.f32.mrf.mxu0
  %v1805 = vadd.f32 0.0, %v1804
  %v1806 = vpop.f32.mrf.mxu0
  %v1807 = vadd.f32 0.0, %v1806
  %1808 = vmatmul.bf16.gmra.mxu0 %v1745
  %v1809 = vpop.f32.mrf.mxu0
  %v1810 = vadd.f32 0.0, %v1809
  %v1811 = vpop.f32.mrf.mxu0
  %v1812 = vadd.f32 0.0, %v1811
  %1813 = vmatmul.bf16.gmra.mxu0 %v1748
  %v1814 = vpop.f32.mrf.mxu0
  %v1815 = vadd.f32 0.0, %v1814
  %v1816 = vpop.f32.mrf.mxu0
  %v1817 = vadd.f32 0.0, %v1816
  %1818 = vmatmul.bf16.gmra.mxu0 %v1751
  %v1819 = vpop.f32.mrf.mxu0
  %v1820 = vadd.f32 0.0, %v1819
  %v1821 = vpop.f32.mrf.mxu0
  %v1822 = vadd.f32 0.0, %v1821
  %1823 = vmatmul.bf16.gmra.mxu0 %v1754
  %v1824 = vpop.f32.mrf.mxu0
  %v1825 = vadd.f32 0.0, %v1824
  %v1826 = vpop.f32.mrf.mxu0
  %v1827 = vadd.f32 0.0, %v1826
  %1828 = vmatmul.bf16.gmra.mxu0 %v1757
  %v1829 = vpop.f32.mrf.mxu0
  %v1830 = vadd.f32 0.0, %v1829
  %v1831 = vpop.f32.mrf.mxu0
  %v1832 = vadd.f32 0.0, %v1831
  %1833 = vmatmul.bf16.gmra.mxu0 %v1760
  %v1834 = vpop.f32.mrf.mxu0
  %v1835 = vadd.f32 0.0, %v1834
  %v1836 = vpop.f32.mrf.mxu0
  %v1837 = vadd.f32 0.0, %v1836
  %1838 = vmatmul.bf16.gmra.mxu0 %v1763
  %v1839 = vpop.f32.mrf.mxu0
  %v1840 = vadd.f32 0.0, %v1839
  %v1841 = vpop.f32.mrf.mxu0
  %v1842 = vadd.f32 0.0, %v1841
  %1843 = vmatmul.bf16.gmra.mxu0 %v1766
  %v1844 = vpop.f32.mrf.mxu0
  %v1845 = vadd.f32 0.0, %v1844
  %v1846 = vpop.f32.mrf.mxu0
  %v1847 = vadd.f32 0.0, %v1846
  %1848 = vmatmul.bf16.gmra.mxu0 %v1769
  %v1849 = vpop.f32.mrf.mxu0
  %v1850 = vadd.f32 0.0, %v1849
  %v1851 = vpop.f32.mrf.mxu0
  %v1852 = vadd.f32 0.0, %v1851
  %1853 = vmatmul.bf16.gmra.mxu0 %v1772
  %v1854 = vpop.f32.mrf.mxu0
  %v1855 = vadd.f32 0.0, %v1854
  %v1856 = vpop.f32.mrf.mxu0
  %v1857 = vadd.f32 0.0, %v1856
  %1858 = vmatmul.bf16.gmra.mxu0 %v1775
  %v1859 = vpop.f32.mrf.mxu0
  %v1860 = vadd.f32 0.0, %v1859
  %v1861 = vpop.f32.mrf.mxu0
  %v1862 = vadd.f32 0.0, %v1861
  %1863 = vmatmul.bf16.gmra.mxu0 %v1778
  %v1864 = vpop.f32.mrf.mxu0
  %v1865 = vadd.f32 0.0, %v1864
  %v1866 = vpop.f32.mrf.mxu0
  %v1867 = vadd.f32 0.0, %v1866
  %1868 = vdwg.mxu0
  %v1869 = vmul.f32 %v1790, %v1790
  %v1870 = vmul.f32 %v1792, %v1792
  %v1871 = vmul.f32 %v1795, %v1795
  %v1872 = vmul.f32 %v1797, %v1797
  %v1873 = vmul.f32 %v1800, %v1800
  %v1874 = vmul.f32 %v1802, %v1802
  %v1875 = vmul.f32 %v1805, %v1805
  %v1876 = vmul.f32 %v1807, %v1807
  %v1877 = vmul.f32 %v1810, %v1810
  %v1878 = vmul.f32 %v1812, %v1812
  %v1879 = vmul.f32 %v1815, %v1815
  %v1880 = vmul.f32 %v1817, %v1817
  %v1881 = vmul.f32 %v1820, %v1820
  %v1882 = vmul.f32 %v1822, %v1822
  %v1883 = vmul.f32 %v1825, %v1825
  %v1884 = vmul.f32 %v1827, %v1827
  %v1885 = vmul.f32 %v1830, %v1830
  %v1886 = vmul.f32 %v1832, %v1832
  %v1887 = vmul.f32 %v1835, %v1835
  %v1888 = vmul.f32 %v1837, %v1837
  %v1889 = vmul.f32 %v1840, %v1840
  %v1890 = vmul.f32 %v1842, %v1842
  %v1891 = vmul.f32 %v1845, %v1845
  %v1892 = vmul.f32 %v1847, %v1847
  %v1893 = vmul.f32 %v1850, %v1850
  %v1894 = vmul.f32 %v1852, %v1852
  %v1895 = vmul.f32 %v1855, %v1855
  %v1896 = vmul.f32 %v1857, %v1857
  %v1897 = vmul.f32 %v1860, %v1860
  %v1898 = vmul.f32 %v1862, %v1862
  %v1899 = vmul.f32 %v1865, %v1865
  %v1900 = vmul.f32 %v1867, %v1867
  %v1901 = vadd.f32 %v1790, %v1792
  %v1902 = vadd.f32 %v1901, %v1795
  %v1903 = vadd.f32 %v1902, %v1797
  %v1904 = vadd.f32 %v1903, %v1800
  %v1905 = vadd.f32 %v1904, %v1802
  %v1906 = vadd.f32 %v1905, %v1805
  %v1907 = vadd.f32 %v1906, %v1807
  %v1908 = vadd.f32 %v1907, %v1810
  %v1909 = vadd.f32 %v1908, %v1812
  %v1910 = vadd.f32 %v1909, %v1815
  %v1911 = vadd.f32 %v1910, %v1817
  %v1912 = vadd.f32 %v1911, %v1820
  %v1913 = vadd.f32 %v1912, %v1822
  %v1914 = vadd.f32 %v1913, %v1825
  %v1915 = vadd.f32 %v1914, %v1827
  %v1916 = vadd.f32 %v1915, %v1830
  %v1917 = vadd.f32 %v1916, %v1832
  %v1918 = vadd.f32 %v1917, %v1835
  %v1919 = vadd.f32 %v1918, %v1837
  %v1920 = vadd.f32 %v1919, %v1840
  %v1921 = vadd.f32 %v1920, %v1842
  %v1922 = vadd.f32 %v1921, %v1845
  %v1923 = vadd.f32 %v1922, %v1847
  %v1924 = vadd.f32 %v1923, %v1850
  %v1925 = vadd.f32 %v1924, %v1852
  %v1926 = vadd.f32 %v1925, %v1855
  %v1927 = vadd.f32 %v1926, %v1857
  %v1928 = vadd.f32 %v1927, %v1860
  %v1929 = vadd.f32 %v1928, %v1862
  %v1930 = vadd.f32 %v1929, %v1865
  %v1931 = vadd.f32 %v1930, %v1867
  %v1932 = vrot.slane %v1931, 4
  %v1933 = vadd.f32 %v1931, %v1932
  %v1934 = vrot.slane %v1933, 2
  %v1935 = vadd.f32 %v1933, %v1934
  %v1936 = vrot.slane %v1935, 1
  %v1937 = vadd.f32 %v1935, %v1936
  %v1938 = vadd.f32 %v1869, %v1870
  %v1939 = vadd.f32 %v1938, %v1871
  %v1940 = vadd.f32 %v1939, %v1872
  %v1941 = vadd.f32 %v1940, %v1873
  %v1942 = vadd.f32 %v1941, %v1874
  %v1943 = vadd.f32 %v1942, %v1875
  %v1944 = vadd.f32 %v1943, %v1876
  %v1945 = vadd.f32 %v1944, %v1877
  %v1946 = vadd.f32 %v1945, %v1878
  %v1947 = vadd.f32 %v1946, %v1879
  %v1948 = vadd.f32 %v1947, %v1880
  %v1949 = vadd.f32 %v1948, %v1881
  %v1950 = vadd.f32 %v1949, %v1882
  %v1951 = vadd.f32 %v1950, %v1883
  %v1952 = vadd.f32 %v1951, %v1884
  %v1953 = vadd.f32 %v1952, %v1885
  %v1954 = vadd.f32 %v1953, %v1886
  %v1955 = vadd.f32 %v1954, %v1887
  %v1956 = vadd.f32 %v1955, %v1888
  %v1957 = vadd.f32 %v1956, %v1889
  %v1958 = vadd.f32 %v1957, %v1890
  %v1959 = vadd.f32 %v1958, %v1891
  %v1960 = vadd.f32 %v1959, %v1892
  %v1961 = vadd.f32 %v1960, %v1893
  %v1962 = vadd.f32 %v1961, %v1894
  %v1963 = vadd.f32 %v1962, %v1895
  %v1964 = vadd.f32 %v1963, %v1896
  %v1965 = vadd.f32 %v1964, %v1897
  %v1966 = vadd.f32 %v1965, %v1898
  %v1967 = vadd.f32 %v1966, %v1899
  %v1968 = vadd.f32 %v1967, %v1900
  %v1969 = vrot.slane %v1968, 4
  %v1970 = vadd.f32 %v1968, %v1969
  %v1971 = vrot.slane %v1970, 2
  %v1972 = vadd.f32 %v1970, %v1971
  %v1973 = vrot.slane %v1972, 1
  %v1974 = vadd.f32 %v1972, %v1973
  %v1975 = vmul.f32 %v1937, 0.00390625
  %v1976 = vmul.f32 %v1974, 0.00390625
  %v1977 = vmul.f32 %v1975, %v1975
  %v1978 = vsub.f32 %v1976, %v1977
  %v1979 = vmax.f32 %v1978, 0.0
  %v1980 = vadd.f32 %v1979, 1e-05
  %v1981 = vrsqrt.pop %v1980
  %v1982 = vmul.f32 %v1981, %v1980
  %v1983 = vmul.f32 %v1982, %v1981
  %v1984 = vmul.f32 0.5, %v1983
  %v1985 = vsub.f32 1.5, %v1984
  %v1986 = vmul.f32 %v1981, %v1985
  %vm1987 = vweird.f32 %v1980
  %vm1988 = vweird.f32 %v1981
  %vm1989 = vmor %vm1987, %vm1988
  %v1990 = vsel %vm1989, %v1981, %v1986
  %v1991 = vmul.f32 %v30, %v1990
  %v1992 = vmul.f32 %v1975, %v1991
  %v1994 = vrot.slane %v1992, 7
  %v1996 = vsub.f32 %v30, %v1994
  %v1997 = vperm.slane %v1991, 4
  %v1998 = vmul.f32 %v1790, %v1997
  %v1999 = vmul.f32 %v1792, %v1997
  %v2000 = vmul.f32 %v1795, %v1997
  %v2001 = vmul.f32 %v1797, %v1997
  %v2002 = vmul.f32 %v1800, %v1997
  %v2003 = vmul.f32 %v1802, %v1997
  %v2004 = vmul.f32 %v1805, %v1997
  %v2005 = vmul.f32 %v1807, %v1997
  %v2006 = vmul.f32 %v1810, %v1997
  %v2007 = vmul.f32 %v1812, %v1997
  %v2008 = vmul.f32 %v1815, %v1997
  %v2009 = vmul.f32 %v1817, %v1997
  %v2010 = vmul.f32 %v1820, %v1997
  %v2011 = vmul.f32 %v1822, %v1997
  %v2012 = vmul.f32 %v1825, %v1997
  %v2013 = vmul.f32 %v1827, %v1997
  %v2014 = vmul.f32 %v1830, %v1997
  %v2015 = vmul.f32 %v1832, %v1997
  %v2016 = vmul.f32 %v1835, %v1997
  %v2017 = vmul.f32 %v1837, %v1997
  %v2018 = vmul.f32 %v1840, %v1997
  %v2019 = vmul.f32 %v1842, %v1997
  %v2020 = vmul.f32 %v1845, %v1997
  %v2021 = vmul.f32 %v1847, %v1997
  %v2022 = vmul.f32 %v1850, %v1997
  %v2023 = vmul.f32 %v1852, %v1997
  %v2024 = vmul.f32 %v1855, %v1997
  %v2025 = vmul.f32 %v1857, %v1997
  %v2026 = vmul.f32 %v1860, %v1997
  %v2027 = vmul.f32 %v1862, %v1997
  %v2028 = vmul.f32 %v1865, %v1997
  %v2029 = vmul.f32 %v1867, %v1997
  %v2030 = vperm.slane %v1996, 5
  %v2031 = vadd.f32 %v1998, %v2030
  %v2032 = vadd.f32 %v1999, %v2030
  %v2033 = vadd.f32 %v2000, %v2030
  %v2034 = vadd.f32 %v2001, %v2030
  %v2035 = vadd.f32 %v2002, %v2030
  %v2036 = vadd.f32 %v2003, %v2030
  %v2037 = vadd.f32 %v2004, %v2030
  %v2038 = vadd.f32 %v2005, %v2030
  %v2039 = vadd.f32 %v2006, %v2030
  %v2040 = vadd.f32 %v2007, %v2030
  %v2041 = vadd.f32 %v2008, %v2030
  %v2042 = vadd.f32 %v2009, %v2030
  %v2043 = vadd.f32 %v2010, %v2030
  %v2044 = vadd.f32 %v2011, %v2030
  %v2045 = vadd.f32 %v2012, %v2030
  %v2046 = vadd.f32 %v2013, %v2030
  %v2047 = vadd.f32 %v2014, %v2030
  %v2048 = vadd.f32 %v2015, %v2030
  %v2049 = vadd.f32 %v2016, %v2030
  %v2050 = vadd.f32 %v2017, %v2030
  %v2051 = vadd.f32 %v2018, %v2030
  %v2052 = vadd.f32 %v2019, %v2030
  %v2053 = vadd.f32 %v2020, %v2030
  %v2054 = vadd.f32 %v2021, %v2030
  %v2055 = vadd.f32 %v2022, %v2030
  %v2056 = vadd.f32 %v2023, %v2030
  %v2057 = vadd.f32 %v2024, %v2030
  %v2058 = vadd.f32 %v2025, %v2030
  %v2059 = vadd.f32 %v2026, %v2030
  %v2060 = vadd.f32 %v2027, %v2030
  %v2061 = vadd.f32 %v2028, %v2030
  %v2062 = vadd.f32 %v2029, %v2030
  %v2063 = vmax.f32 %v2031, 0.0
  %v2064 = vmax.f32 %v2032, 0.0
  %v2065 = vmax.f32 %v2033, 0.0
  %v2066 = vmax.f32 %v2034, 0.0
  %v2067 = vmax.f32 %v2035, 0.0
  %v2068 = vmax.f32 %v2036, 0.0
  %v2069 = vmax.f32 %v2037, 0.0
  %v2070 = vmax.f32 %v2038, 0.0
  %v2071 = vmax.f32 %v2039, 0.0
  %v2072 = vmax.f32 %v2040, 0.0
  %v2073 = vmax.f32 %v2041, 0.0
  %v2074 = vmax.f32 %v2042, 0.0
  %v2075 = vmax.f32 %v2043, 0.0
  %v2076 = vmax.f32 %v2044, 0.0
  %v2077 = vmax.f32 %v2045, 0.0
  %v2078 = vmax.f32 %v2046, 0.0
  %v2079 = vmax.f32 %v2047, 0.0
  %v2080 = vmax.f32 %v2048, 0.0
  %v2081 = vmax.f32 %v2049, 0.0
  %v2082 = vmax.f32 %v2050, 0.0
  %v2083 = vmax.f32 %v2051, 0.0
  %v2084 = vmax.f32 %v2052, 0.0
  %v2085 = vmax.f32 %v2053, 0.0
  %v2086 = vmax.f32 %v2054, 0.0
  %v2087 = vmax.f32 %v2055, 0.0
  %v2088 = vmax.f32 %v2056, 0.0
  %v2089 = vmax.f32 %v2057, 0.0
  %v2090 = vmax.f32 %v2058, 0.0
  %v2091 = vmax.f32 %v2059, 0.0
  %v2092 = vmax.f32 %v2060, 0.0
  %v2093 = vmax.f32 %v2061, 0.0
  %v2094 = vmax.f32 %v2062, 0.0
  %v2095 = vpack.c.bf16 %v2063, %v2063
  %v2096 = vpack.c.bf16 %v2064, %v2064
  %v2097 = vpack.c.bf16 %v2065, %v2065
  %v2098 = vpack.c.bf16 %v2066, %v2066
  %v2099 = vpack.c.bf16 %v2067, %v2067
  %v2100 = vpack.c.bf16 %v2068, %v2068
  %v2101 = vpack.c.bf16 %v2069, %v2069
  %v2102 = vpack.c.bf16 %v2070, %v2070
  %v2103 = vpack.c.bf16 %v2071, %v2071
  %v2104 = vpack.c.bf16 %v2072, %v2072
  %v2105 = vpack.c.bf16 %v2073, %v2073
  %v2106 = vpack.c.bf16 %v2074, %v2074
  %v2107 = vpack.c.bf16 %v2075, %v2075
  %v2108 = vpack.c.bf16 %v2076, %v2076
  %v2109 = vpack.c.bf16 %v2077, %v2077
  %v2110 = vpack.c.bf16 %v2078, %v2078
  %v2111 = vpack.c.bf16 %v2079, %v2079
  %v2112 = vpack.c.bf16 %v2080, %v2080
  %v2113 = vpack.c.bf16 %v2081, %v2081
  %v2114 = vpack.c.bf16 %v2082, %v2082
  %v2115 = vpack.c.bf16 %v2083, %v2083
  %v2116 = vpack.c.bf16 %v2084, %v2084
  %v2117 = vpack.c.bf16 %v2085, %v2085
  %v2118 = vpack.c.bf16 %v2086, %v2086
  %v2119 = vpack.c.bf16 %v2087, %v2087
  %v2120 = vpack.c.bf16 %v2088, %v2088
  %v2121 = vpack.c.bf16 %v2089, %v2089
  %v2122 = vpack.c.bf16 %v2090, %v2090
  %v2123 = vpack.c.bf16 %v2091, %v2091
  %v2124 = vpack.c.bf16 %v2092, %v2092
  %v2125 = vpack.c.bf16 %v2093, %v2093
  %v2126 = vpack.c.bf16 %v2094, %v2094
  %v2127 = vunpack.c.l.bf16 %v2095
  %v2128 = vunpack.c.l.bf16 %v2096
  %v2129 = vunpack.c.l.bf16 %v2097
  %v2130 = vunpack.c.l.bf16 %v2098
  %v2131 = vunpack.c.l.bf16 %v2099
  %v2132 = vunpack.c.l.bf16 %v2100
  %v2133 = vunpack.c.l.bf16 %v2101
  %v2134 = vunpack.c.l.bf16 %v2102
  %v2135 = vunpack.c.l.bf16 %v2103
  %v2136 = vunpack.c.l.bf16 %v2104
  %v2137 = vunpack.c.l.bf16 %v2105
  %v2138 = vunpack.c.l.bf16 %v2106
  %v2139 = vunpack.c.l.bf16 %v2107
  %v2140 = vunpack.c.l.bf16 %v2108
  %v2141 = vunpack.c.l.bf16 %v2109
  %v2142 = vunpack.c.l.bf16 %v2110
  %v2143 = vunpack.c.l.bf16 %v2111
  %v2144 = vunpack.c.l.bf16 %v2112
  %v2145 = vunpack.c.l.bf16 %v2113
  %v2146 = vunpack.c.l.bf16 %v2114
  %v2147 = vunpack.c.l.bf16 %v2115
  %v2148 = vunpack.c.l.bf16 %v2116
  %v2149 = vunpack.c.l.bf16 %v2117
  %v2150 = vunpack.c.l.bf16 %v2118
  %v2151 = vunpack.c.l.bf16 %v2119
  %v2152 = vunpack.c.l.bf16 %v2120
  %v2153 = vunpack.c.l.bf16 %v2121
  %v2154 = vunpack.c.l.bf16 %v2122
  %v2155 = vunpack.c.l.bf16 %v2123
  %v2156 = vunpack.c.l.bf16 %v2124
  %v2157 = vunpack.c.l.bf16 %v2125
  %v2158 = vunpack.c.l.bf16 %v2126
  %v2159 = vmax.f32 %v2127, %v2128
  %v2160 = vmax.f32 %v2159, %v2129
  %v2161 = vmax.f32 %v2160, %v2130
  %v2162 = vrot.slane %v2161, 4
  %v2163 = vmax.f32 %v2161, %v2162
  %v2164 = vrot.slane %v2163, 2
  %v2165 = vmax.f32 %v2163, %v2164
  %v2166 = vrot.slane %v2165, 1
  %v2167 = vmax.f32 %v2165, %v2166
  %v2168 = vmax.f32 %v2131, %v2132
  %v2169 = vmax.f32 %v2168, %v2133
  %v2170 = vmax.f32 %v2169, %v2134
  %v2171 = vrot.slane %v2170, 4
  %v2172 = vmax.f32 %v2170, %v2171
  %v2173 = vrot.slane %v2172, 2
  %v2174 = vmax.f32 %v2172, %v2173
  %v2175 = vrot.slane %v2174, 1
  %v2176 = vmax.f32 %v2174, %v2175
  %v2177 = vmax.f32 %v2135, %v2136
  %v2178 = vmax.f32 %v2177, %v2137
  %v2179 = vmax.f32 %v2178, %v2138
  %v2180 = vrot.slane %v2179, 4
  %v2181 = vmax.f32 %v2179, %v2180
  %v2182 = vrot.slane %v2181, 2
  %v2183 = vmax.f32 %v2181, %v2182
  %v2184 = vrot.slane %v2183, 1
  %v2185 = vmax.f32 %v2183, %v2184
  %v2186 = vmax.f32 %v2139, %v2140
  %v2187 = vmax.f32 %v2186, %v2141
  %v2188 = vmax.f32 %v2187, %v2142
  %v2189 = vrot.slane %v2188, 4
  %v2190 = vmax.f32 %v2188, %v2189
  %v2191 = vrot.slane %v2190, 2
  %v2192 = vmax.f32 %v2190, %v2191
  %v2193 = vrot.slane %v2192, 1
  %v2194 = vmax.f32 %v2192, %v2193
  %v2195 = vmax.f32 %v2143, %v2144
  %v2196 = vmax.f32 %v2195, %v2145
  %v2197 = vmax.f32 %v2196, %v2146
  %v2198 = vrot.slane %v2197, 4
  %v2199 = vmax.f32 %v2197, %v2198
  %v2200 = vrot.slane %v2199, 2
  %v2201 = vmax.f32 %v2199, %v2200
  %v2202 = vrot.slane %v2201, 1
  %v2203 = vmax.f32 %v2201, %v2202
  %v2204 = vmax.f32 %v2147, %v2148
  %v2205 = vmax.f32 %v2204, %v2149
  %v2206 = vmax.f32 %v2205, %v2150
  %v2207 = vrot.slane %v2206, 4
  %v2208 = vmax.f32 %v2206, %v2207
  %v2209 = vrot.slane %v2208, 2
  %v2210 = vmax.f32 %v2208, %v2209
  %v2211 = vrot.slane %v2210, 1
  %v2212 = vmax.f32 %v2210, %v2211
  %v2213 = vmax.f32 %v2151, %v2152
  %v2214 = vmax.f32 %v2213, %v2153
  %v2215 = vmax.f32 %v2214, %v2154
  %v2216 = vrot.slane %v2215, 4
  %v2217 = vmax.f32 %v2215, %v2216
  %v2218 = vrot.slane %v2217, 2
  %v2219 = vmax.f32 %v2217, %v2218
  %v2220 = vrot.slane %v2219, 1
  %v2221 = vmax.f32 %v2219, %v2220
  %v2222 = vmax.f32 %v2155, %v2156
  %v2223 = vmax.f32 %v2222, %v2157
  %v2224 = vmax.f32 %v2223, %v2158
  %v2225 = vrot.slane %v2224, 4
  %v2226 = vmax.f32 %v2224, %v2225
  %v2227 = vrot.slane %v2226, 2
  %v2228 = vmax.f32 %v2226, %v2227
  %v2229 = vrot.slane %v2228, 1
  %v2230 = vmax.f32 %v2228, %v2229
  %v2231 = vpack.c.bf16 %v2167, %v2167
  %v2232 = vpack.c.bf16 %v2176, %v2176
  %v2233 = vpack.c.bf16 %v2185, %v2185
  %v2234 = vpack.c.bf16 %v2194, %v2194
  %v2235 = vpack.c.bf16 %v2203, %v2203
  %v2236 = vpack.c.bf16 %v2212, %v2212
  %v2237 = vpack.c.bf16 %v2221, %v2221
  %v2238 = vpack.c.bf16 %v2230, %v2230
  %v2239 = vld [vmem:[%s4] sm:$0xff]
  %v2240 = vld [vmem:[%s4 + $0x8] sm:$0xff]
  %v2241 = vld [vmem:[%s4 + $0x10] sm:$0xff]
  %v2242 = vld [vmem:[%s4 + $0x18] sm:$0xff]
  %v2243 = vld [vmem:[%s4 + $0x20] sm:$0xff]
  %v2244 = vld [vmem:[%s4 + $0x28] sm:$0xff]
  %v2245 = vld [vmem:[%s4 + $0x30] sm:$0xff]
  %v2246 = vld [vmem:[%s4 + $0x38] sm:$0xff]
  %v2247 = vld [vmem:[%s4 + $0x40] sm:$0xff]
  %v2248 = vld [vmem:[%s4 + $0x48] sm:$0xff]
  %v2249 = vld [vmem:[%s4 + $0x50] sm:$0xff]
  %v2250 = vld [vmem:[%s4 + $0x58] sm:$0xff]
  %v2251 = vld [vmem:[%s4 + $0x60] sm:$0xff]
  %v2252 = vld [vmem:[%s4 + $0x68] sm:$0xff]
  %v2253 = vld [vmem:[%s4 + $0x70] sm:$0xff]
  %v2254 = vld [vmem:[%s4 + $0x78] sm:$0xff]
  %v2287 = vunpack.c.l.b16 %v2095
  %v2288 = vunpack.c.l.b16 %v2096
  %v2289 = vunpack.c.l.b16 %v2097
  %v2290 = vunpack.c.l.b16 %v2098
  %v2291 = vunpack.c.l.b16 %v2099
  %v2292 = vunpack.c.l.b16 %v2100
  %v2293 = vunpack.c.l.b16 %v2101
  %v2294 = vunpack.c.l.b16 %v2102
  %v2295 = vunpack.c.l.b16 %v2103
  %v2296 = vunpack.c.l.b16 %v2104
  %v2297 = vunpack.c.l.b16 %v2105
  %v2298 = vunpack.c.l.b16 %v2106
  %v2299 = vunpack.c.l.b16 %v2107
  %v2300 = vunpack.c.l.b16 %v2108
  %v2301 = vunpack.c.l.b16 %v2109
  %v2302 = vunpack.c.l.b16 %v2110
  %v2303 = vunpack.c.l.b16 %v2111
  %v2304 = vunpack.c.l.b16 %v2112
  %v2305 = vunpack.c.l.b16 %v2113
  %v2306 = vunpack.c.l.b16 %v2114
  %v2307 = vunpack.c.l.b16 %v2115
  %v2308 = vunpack.c.l.b16 %v2116
  %v2309 = vunpack.c.l.b16 %v2117
  %v2310 = vunpack.c.l.b16 %v2118
  %v2311 = vunpack.c.l.b16 %v2119
  %v2312 = vunpack.c.l.b16 %v2120
  %v2313 = vunpack.c.l.b16 %v2121
  %v2314 = vunpack.c.l.b16 %v2122
  %v2315 = vunpack.c.l.b16 %v2123
  %v2316 = vunpack.c.l.b16 %v2124
  %v2317 = vunpack.c.l.b16 %v2125
  %v2318 = vunpack.c.l.b16 %v2126
  %v2319 = vpack.c.b16 %v2288, %v2287
  %v2320 = vpack.c.b16 %v2290, %v2289
  %v2321 = vpack.c.b16 %v2292, %v2291
  %v2322 = vpack.c.b16 %v2294, %v2293
  %v2323 = vpack.c.b16 %v2296, %v2295
  %v2324 = vpack.c.b16 %v2298, %v2297
  %v2325 = vpack.c.b16 %v2300, %v2299
  %v2326 = vpack.c.b16 %v2302, %v2301
  %v2327 = vpack.c.b16 %v2304, %v2303
  %v2328 = vpack.c.b16 %v2306, %v2305
  %v2329 = vpack.c.b16 %v2308, %v2307
  %v2330 = vpack.c.b16 %v2310, %v2309
  %v2331 = vpack.c.b16 %v2312, %v2311
  %v2332 = vpack.c.b16 %v2314, %v2313
  %v2333 = vpack.c.b16 %v2316, %v2315
  %v2334 = vpack.c.b16 %v2318, %v2317
  %v2367 = vunpack.c.l.b16 %v2239
  %v2368 = vunpack.c.h.b16 %v2239
  %v2369 = vunpack.c.l.b16 %v2240
  %v2370 = vunpack.c.h.b16 %v2240
  %v2371 = vunpack.c.l.b16 %v2241
  %v2372 = vunpack.c.h.b16 %v2241
  %v2373 = vunpack.c.l.b16 %v2242
  %v2374 = vunpack.c.h.b16 %v2242
  %v2375 = vunpack.c.l.b16 %v2243
  %v2376 = vunpack.c.h.b16 %v2243
  %v2377 = vunpack.c.l.b16 %v2244
  %v2378 = vunpack.c.h.b16 %v2244
  %v2379 = vunpack.c.l.b16 %v2245
  %v2380 = vunpack.c.h.b16 %v2245
  %v2381 = vunpack.c.l.b16 %v2246
  %v2382 = vunpack.c.h.b16 %v2246
  %v2383 = vunpack.c.l.b16 %v2247
  %v2384 = vunpack.c.h.b16 %v2247
  %v2385 = vunpack.c.l.b16 %v2248
  %v2386 = vunpack.c.h.b16 %v2248
  %v2387 = vunpack.c.l.b16 %v2249
  %v2388 = vunpack.c.h.b16 %v2249
  %v2389 = vunpack.c.l.b16 %v2250
  %v2390 = vunpack.c.h.b16 %v2250
  %v2391 = vunpack.c.l.b16 %v2251
  %v2392 = vunpack.c.h.b16 %v2251
  %v2393 = vunpack.c.l.b16 %v2252
  %v2394 = vunpack.c.h.b16 %v2252
  %v2395 = vunpack.c.l.b16 %v2253
  %v2396 = vunpack.c.h.b16 %v2253
  %v2397 = vunpack.c.l.b16 %v2254
  %v2398 = vunpack.c.h.b16 %v2254
  %v2399 = vpack.c.b16 %v2369, %v2367
  %v2400 = vpack.c.b16 %v2370, %v2368
  %v2401 = vpack.c.b16 %v2373, %v2371
  %v2402 = vpack.c.b16 %v2374, %v2372
  %v2403 = vpack.c.b16 %v2377, %v2375
  %v2404 = vpack.c.b16 %v2378, %v2376
  %v2405 = vpack.c.b16 %v2381, %v2379
  %v2406 = vpack.c.b16 %v2382, %v2380
  %v2407 = vpack.c.b16 %v2385, %v2383
  %v2408 = vpack.c.b16 %v2386, %v2384
  %v2409 = vpack.c.b16 %v2389, %v2387
  %v2410 = vpack.c.b16 %v2390, %v2388
  %v2411 = vpack.c.b16 %v2393, %v2391
  %v2412 = vpack.c.b16 %v2394, %v2392
  %v2413 = vpack.c.b16 %v2397, %v2395
  %v2414 = vpack.c.b16 %v2398, %v2396
  %2431 = vmatpush.bf16.msra.mxu0 %v2413
  %2432 = vmatpush.bf16.msra.mxu0 %v2411
  %2433 = vmatpush.bf16.msra.mxu0 %v2409
  %2434 = vmatpush.bf16.msra.mxu0 %v2407
  %2435 = vmatpush.bf16.msra.mxu0 %v2405
  %2436 = vmatpush.bf16.msra.mxu0 %v2403
  %2437 = vmatpush.bf16.msra.mxu0 %v2401
  %2438 = vmatpush.bf16.msra.mxu0 %v2399
  %2439 = vmatmul.bf16.gmra.mxu0 %v2319
  %v2440 = vpop.f32.mrf.mxu0
  %v2441 = vadd.f32 0.0, %v2440
  %v2442 = vpop.f32.mrf.mxu0
  %v2443 = vadd.f32 0.0, %v2442
  %2444 = vmatmul.bf16.gmra.mxu0 %v2320
  %v2445 = vpop.f32.mrf.mxu0
  %v2446 = vadd.f32 0.0, %v2445
  %v2447 = vpop.f32.mrf.mxu0
  %v2448 = vadd.f32 0.0, %v2447
  %2449 = vmatmul.bf16.gmra.mxu0 %v2321
  %v2450 = vpop.f32.mrf.mxu0
  %v2451 = vadd.f32 0.0, %v2450
  %v2452 = vpop.f32.mrf.mxu0
  %v2453 = vadd.f32 0.0, %v2452
  %2454 = vmatmul.bf16.gmra.mxu0 %v2322
  %v2455 = vpop.f32.mrf.mxu0
  %v2456 = vadd.f32 0.0, %v2455
  %v2457 = vpop.f32.mrf.mxu0
  %v2458 = vadd.f32 0.0, %v2457
  %2459 = vmatmul.bf16.gmra.mxu0 %v2323
  %v2460 = vpop.f32.mrf.mxu0
  %v2461 = vadd.f32 0.0, %v2460
  %v2462 = vpop.f32.mrf.mxu0
  %v2463 = vadd.f32 0.0, %v2462
  %2464 = vmatmul.bf16.gmra.mxu0 %v2324
  %v2465 = vpop.f32.mrf.mxu0
  %v2466 = vadd.f32 0.0, %v2465
  %v2467 = vpop.f32.mrf.mxu0
  %v2468 = vadd.f32 0.0, %v2467
  %2469 = vmatmul.bf16.gmra.mxu0 %v2325
  %v2470 = vpop.f32.mrf.mxu0
  %v2471 = vadd.f32 0.0, %v2470
  %v2472 = vpop.f32.mrf.mxu0
  %v2473 = vadd.f32 0.0, %v2472
  %2474 = vmatmul.bf16.gmra.mxu0 %v2326
  %v2475 = vpop.f32.mrf.mxu0
  %v2476 = vadd.f32 0.0, %v2475
  %v2477 = vpop.f32.mrf.mxu0
  %v2478 = vadd.f32 0.0, %v2477
  %2479 = vmatmul.bf16.gmra.mxu0 %v2327
  %v2480 = vpop.f32.mrf.mxu0
  %v2481 = vadd.f32 0.0, %v2480
  %v2482 = vpop.f32.mrf.mxu0
  %v2483 = vadd.f32 0.0, %v2482
  %2484 = vmatmul.bf16.gmra.mxu0 %v2328
  %v2485 = vpop.f32.mrf.mxu0
  %v2486 = vadd.f32 0.0, %v2485
  %v2487 = vpop.f32.mrf.mxu0
  %v2488 = vadd.f32 0.0, %v2487
  %2489 = vmatmul.bf16.gmra.mxu0 %v2329
  %v2490 = vpop.f32.mrf.mxu0
  %v2491 = vadd.f32 0.0, %v2490
  %v2492 = vpop.f32.mrf.mxu0
  %v2493 = vadd.f32 0.0, %v2492
  %2494 = vmatmul.bf16.gmra.mxu0 %v2330
  %v2495 = vpop.f32.mrf.mxu0
  %v2496 = vadd.f32 0.0, %v2495
  %v2497 = vpop.f32.mrf.mxu0
  %v2498 = vadd.f32 0.0, %v2497
  %2499 = vmatmul.bf16.gmra.mxu0 %v2331
  %v2500 = vpop.f32.mrf.mxu0
  %v2501 = vadd.f32 0.0, %v2500
  %v2502 = vpop.f32.mrf.mxu0
  %v2503 = vadd.f32 0.0, %v2502
  %2504 = vmatmul.bf16.gmra.mxu0 %v2332
  %v2505 = vpop.f32.mrf.mxu0
  %v2506 = vadd.f32 0.0, %v2505
  %v2507 = vpop.f32.mrf.mxu0
  %v2508 = vadd.f32 0.0, %v2507
  %2509 = vmatmul.bf16.gmra.mxu0 %v2333
  %v2510 = vpop.f32.mrf.mxu0
  %v2511 = vadd.f32 0.0, %v2510
  %v2512 = vpop.f32.mrf.mxu0
  %v2513 = vadd.f32 0.0, %v2512
  %2514 = vmatmul.bf16.gmra.mxu0 %v2334
  %v2515 = vpop.f32.mrf.mxu0
  %v2516 = vadd.f32 0.0, %v2515
  %v2517 = vpop.f32.mrf.mxu0
  %v2518 = vadd.f32 0.0, %v2517
  %2519 = vdwg.mxu0
  %2520 = vmatpush.bf16.msra.mxu0 %v2414
  %2521 = vmatpush.bf16.msra.mxu0 %v2412
  %2522 = vmatpush.bf16.msra.mxu0 %v2410
  %2523 = vmatpush.bf16.msra.mxu0 %v2408
  %2524 = vmatpush.bf16.msra.mxu0 %v2406
  %2525 = vmatpush.bf16.msra.mxu0 %v2404
  %2526 = vmatpush.bf16.msra.mxu0 %v2402
  %2527 = vmatpush.bf16.msra.mxu0 %v2400
  %2528 = vmatmul.bf16.gmra.mxu0 %v2319
  %v2529 = vpop.f32.mrf.mxu0
  %v2530 = vadd.f32 0.0, %v2529
  %v2531 = vpop.f32.mrf.mxu0
  %v2532 = vadd.f32 0.0, %v2531
  %2533 = vmatmul.bf16.gmra.mxu0 %v2320
  %v2534 = vpop.f32.mrf.mxu0
  %v2535 = vadd.f32 0.0, %v2534
  %v2536 = vpop.f32.mrf.mxu0
  %v2537 = vadd.f32 0.0, %v2536
  %2538 = vmatmul.bf16.gmra.mxu0 %v2321
  %v2539 = vpop.f32.mrf.mxu0
  %v2540 = vadd.f32 0.0, %v2539
  %v2541 = vpop.f32.mrf.mxu0
  %v2542 = vadd.f32 0.0, %v2541
  %2543 = vmatmul.bf16.gmra.mxu0 %v2322
  %v2544 = vpop.f32.mrf.mxu0
  %v2545 = vadd.f32 0.0, %v2544
  %v2546 = vpop.f32.mrf.mxu0
  %v2547 = vadd.f32 0.0, %v2546
  %2548 = vmatmul.bf16.gmra.mxu0 %v2323
  %v2549 = vpop.f32.mrf.mxu0
  %v2550 = vadd.f32 0.0, %v2549
  %v2551 = vpop.f32.mrf.mxu0
  %v2552 = vadd.f32 0.0, %v2551
  %2553 = vmatmul.bf16.gmra.mxu0 %v2324
  %v2554 = vpop.f32.mrf.mxu0
  %v2555 = vadd.f32 0.0, %v2554
  %v2556 = vpop.f32.mrf.mxu0
  %v2557 = vadd.f32 0.0, %v2556
  %2558 = vmatmul.bf16.gmra.mxu0 %v2325
  %v2559 = vpop.f32.mrf.mxu0
  %v2560 = vadd.f32 0.0, %v2559
  %v2561 = vpop.f32.mrf.mxu0
  %v2562 = vadd.f32 0.0, %v2561
  %2563 = vmatmul.bf16.gmra.mxu0 %v2326
  %v2564 = vpop.f32.mrf.mxu0
  %v2565 = vadd.f32 0.0, %v2564
  %v2566 = vpop.f32.mrf.mxu0
  %v2567 = vadd.f32 0.0, %v2566
  %2568 = vmatmul.bf16.gmra.mxu0 %v2327
  %v2569 = vpop.f32.mrf.mxu0
  %v2570 = vadd.f32 0.0, %v2569
  %v2571 = vpop.f32.mrf.mxu0
  %v2572 = vadd.f32 0.0, %v2571
  %2573 = vmatmul.bf16.gmra.mxu0 %v2328
  %v2574 = vpop.f32.mrf.mxu0
  %v2575 = vadd.f32 0.0, %v2574
  %v2576 = vpop.f32.mrf.mxu0
  %v2577 = vadd.f32 0.0, %v2576
  %2578 = vmatmul.bf16.gmra.mxu0 %v2329
  %v2579 = vpop.f32.mrf.mxu0
  %v2580 = vadd.f32 0.0, %v2579
  %v2581 = vpop.f32.mrf.mxu0
  %v2582 = vadd.f32 0.0, %v2581
  %2583 = vmatmul.bf16.gmra.mxu0 %v2330
  %v2584 = vpop.f32.mrf.mxu0
  %v2585 = vadd.f32 0.0, %v2584
  %v2586 = vpop.f32.mrf.mxu0
  %v2587 = vadd.f32 0.0, %v2586
  %2588 = vmatmul.bf16.gmra.mxu0 %v2331
  %v2589 = vpop.f32.mrf.mxu0
  %v2590 = vadd.f32 0.0, %v2589
  %v2591 = vpop.f32.mrf.mxu0
  %v2592 = vadd.f32 0.0, %v2591
  %2593 = vmatmul.bf16.gmra.mxu0 %v2332
  %v2594 = vpop.f32.mrf.mxu0
  %v2595 = vadd.f32 0.0, %v2594
  %v2596 = vpop.f32.mrf.mxu0
  %v2597 = vadd.f32 0.0, %v2596
  %2598 = vmatmul.bf16.gmra.mxu0 %v2333
  %v2599 = vpop.f32.mrf.mxu0
  %v2600 = vadd.f32 0.0, %v2599
  %v2601 = vpop.f32.mrf.mxu0
  %v2602 = vadd.f32 0.0, %v2601
  %2603 = vmatmul.bf16.gmra.mxu0 %v2334
  %v2604 = vpop.f32.mrf.mxu0
  %v2605 = vadd.f32 0.0, %v2604
  %v2606 = vpop.f32.mrf.mxu0
  %v2607 = vadd.f32 0.0, %v2606
  %2608 = vdwg.mxu0
  %v2609 = vmul.f32 %v2441, %v2441
  %v2610 = vmul.f32 %v2530, %v2530
  %v2611 = vmul.f32 %v2443, %v2443
  %v2612 = vmul.f32 %v2532, %v2532
  %v2613 = vmul.f32 %v2446, %v2446
  %v2614 = vmul.f32 %v2535, %v2535
  %v2615 = vmul.f32 %v2448, %v2448
  %v2616 = vmul.f32 %v2537, %v2537
  %v2617 = vmul.f32 %v2451, %v2451
  %v2618 = vmul.f32 %v2540, %v2540
  %v2619 = vmul.f32 %v2453, %v2453
  %v2620 = vmul.f32 %v2542, %v2542
  %v2621 = vmul.f32 %v2456, %v2456
  %v2622 = vmul.f32 %v2545, %v2545
  %v2623 = vmul.f32 %v2458, %v2458
  %v2624 = vmul.f32 %v2547, %v2547
  %v2625 = vmul.f32 %v2461, %v2461
  %v2626 = vmul.f32 %v2550, %v2550
  %v2627 = vmul.f32 %v2463, %v2463
  %v2628 = vmul.f32 %v2552, %v2552
  %v2629 = vmul.f32 %v2466, %v2466
  %v2630 = vmul.f32 %v2555, %v2555
  %v2631 = vmul.f32 %v2468, %v2468
  %v2632 = vmul.f32 %v2557, %v2557
  %v2633 = vmul.f32 %v2471, %v2471
  %v2634 = vmul.f32 %v2560, %v2560
  %v2635 = vmul.f32 %v2473, %v2473
  %v2636 = vmul.f32 %v2562, %v2562
  %v2637 = vmul.f32 %v2476, %v2476
  %v2638 = vmul.f32 %v2565, %v2565
  %v2639 = vmul.f32 %v2478, %v2478
  %v2640 = vmul.f32 %v2567, %v2567
  %v2641 = vmul.f32 %v2481, %v2481
  %v2642 = vmul.f32 %v2570, %v2570
  %v2643 = vmul.f32 %v2483, %v2483
  %v2644 = vmul.f32 %v2572, %v2572
  %v2645 = vmul.f32 %v2486, %v2486
  %v2646 = vmul.f32 %v2575, %v2575
  %v2647 = vmul.f32 %v2488, %v2488
  %v2648 = vmul.f32 %v2577, %v2577
  %v2649 = vmul.f32 %v2491, %v2491
  %v2650 = vmul.f32 %v2580, %v2580
  %v2651 = vmul.f32 %v2493, %v2493
  %v2652 = vmul.f32 %v2582, %v2582
  %v2653 = vmul.f32 %v2496, %v2496
  %v2654 = vmul.f32 %v2585, %v2585
  %v2655 = vmul.f32 %v2498, %v2498
  %v2656 = vmul.f32 %v2587, %v2587
  %v2657 = vmul.f32 %v2501, %v2501
  %v2658 = vmul.f32 %v2590, %v2590
  %v2659 = vmul.f32 %v2503, %v2503
  %v2660 = vmul.f32 %v2592, %v2592
  %v2661 = vmul.f32 %v2506, %v2506
  %v2662 = vmul.f32 %v2595, %v2595
  %v2663 = vmul.f32 %v2508, %v2508
  %v2664 = vmul.f32 %v2597, %v2597
  %v2665 = vmul.f32 %v2511, %v2511
  %v2666 = vmul.f32 %v2600, %v2600
  %v2667 = vmul.f32 %v2513, %v2513
  %v2668 = vmul.f32 %v2602, %v2602
  %v2669 = vmul.f32 %v2516, %v2516
  %v2670 = vmul.f32 %v2605, %v2605
  %v2671 = vmul.f32 %v2518, %v2518
  %v2672 = vmul.f32 %v2607, %v2607
  %v2673 = vadd.f32 %v2441, %v2443
  %v2674 = vadd.f32 %v2673, %v2446
  %v2675 = vadd.f32 %v2674, %v2448
  %v2676 = vadd.f32 %v2675, %v2451
  %v2677 = vadd.f32 %v2676, %v2453
  %v2678 = vadd.f32 %v2677, %v2456
  %v2679 = vadd.f32 %v2678, %v2458
  %v2680 = vadd.f32 %v2679, %v2461
  %v2681 = vadd.f32 %v2680, %v2463
  %v2682 = vadd.f32 %v2681, %v2466
  %v2683 = vadd.f32 %v2682, %v2468
  %v2684 = vadd.f32 %v2683, %v2471
  %v2685 = vadd.f32 %v2684, %v2473
  %v2686 = vadd.f32 %v2685, %v2476
  %v2687 = vadd.f32 %v2686, %v2478
  %v2688 = vadd.f32 %v2687, %v2481
  %v2689 = vadd.f32 %v2688, %v2483
  %v2690 = vadd.f32 %v2689, %v2486
  %v2691 = vadd.f32 %v2690, %v2488
  %v2692 = vadd.f32 %v2691, %v2491
  %v2693 = vadd.f32 %v2692, %v2493
  %v2694 = vadd.f32 %v2693, %v2496
  %v2695 = vadd.f32 %v2694, %v2498
  %v2696 = vadd.f32 %v2695, %v2501
  %v2697 = vadd.f32 %v2696, %v2503
  %v2698 = vadd.f32 %v2697, %v2506
  %v2699 = vadd.f32 %v2698, %v2508
  %v2700 = vadd.f32 %v2699, %v2511
  %v2701 = vadd.f32 %v2700, %v2513
  %v2702 = vadd.f32 %v2701, %v2516
  %v2703 = vadd.f32 %v2702, %v2518
  %v2704 = vrot.slane %v2703, 4
  %v2705 = vadd.f32 %v2703, %v2704
  %v2706 = vrot.slane %v2705, 2
  %v2707 = vadd.f32 %v2705, %v2706
  %v2708 = vrot.slane %v2707, 1
  %v2709 = vadd.f32 %v2707, %v2708
  %v2710 = vadd.f32 %v2530, %v2532
  %v2711 = vadd.f32 %v2710, %v2535
  %v2712 = vadd.f32 %v2711, %v2537
  %v2713 = vadd.f32 %v2712, %v2540
  %v2714 = vadd.f32 %v2713, %v2542
  %v2715 = vadd.f32 %v2714, %v2545
  %v2716 = vadd.f32 %v2715, %v2547
  %v2717 = vadd.f32 %v2716, %v2550
  %v2718 = vadd.f32 %v2717, %v2552
  %v2719 = vadd.f32 %v2718, %v2555
  %v2720 = vadd.f32 %v2719, %v2557
  %v2721 = vadd.f32 %v2720, %v2560
  %v2722 = vadd.f32 %v2721, %v2562
  %v2723 = vadd.f32 %v2722, %v2565
  %v2724 = vadd.f32 %v2723, %v2567
  %v2725 = vadd.f32 %v2724, %v2570
  %v2726 = vadd.f32 %v2725, %v2572
  %v2727 = vadd.f32 %v2726, %v2575
  %v2728 = vadd.f32 %v2727, %v2577
  %v2729 = vadd.f32 %v2728, %v2580
  %v2730 = vadd.f32 %v2729, %v2582
  %v2731 = vadd.f32 %v2730, %v2585
  %v2732 = vadd.f32 %v2731, %v2587
  %v2733 = vadd.f32 %v2732, %v2590
  %v2734 = vadd.f32 %v2733, %v2592
  %v2735 = vadd.f32 %v2734, %v2595
  %v2736 = vadd.f32 %v2735, %v2597
  %v2737 = vadd.f32 %v2736, %v2600
  %v2738 = vadd.f32 %v2737, %v2602
  %v2739 = vadd.f32 %v2738, %v2605
  %v2740 = vadd.f32 %v2739, %v2607
  %v2741 = vrot.slane %v2740, 4
  %v2742 = vadd.f32 %v2740, %v2741
  %v2743 = vrot.slane %v2742, 2
  %v2744 = vadd.f32 %v2742, %v2743
  %v2745 = vrot.slane %v2744, 1
  %v2746 = vadd.f32 %v2744, %v2745
  %v2747 = vadd.f32 %v2609, %v2611
  %v2748 = vadd.f32 %v2747, %v2613
  %v2749 = vadd.f32 %v2748, %v2615
  %v2750 = vadd.f32 %v2749, %v2617
  %v2751 = vadd.f32 %v2750, %v2619
  %v2752 = vadd.f32 %v2751, %v2621
  %v2753 = vadd.f32 %v2752, %v2623
  %v2754 = vadd.f32 %v2753, %v2625
  %v2755 = vadd.f32 %v2754, %v2627
  %v2756 = vadd.f32 %v2755, %v2629
  %v2757 = vadd.f32 %v2756, %v2631
  %v2758 = vadd.f32 %v2757, %v2633
  %v2759 = vadd.f32 %v2758, %v2635
  %v2760 = vadd.f32 %v2759, %v2637
  %v2761 = vadd.f32 %v2760, %v2639
  %v2762 = vadd.f32 %v2761, %v2641
  %v2763 = vadd.f32 %v2762, %v2643
  %v2764 = vadd.f32 %v2763, %v2645
  %v2765 = vadd.f32 %v2764, %v2647
  %v2766 = vadd.f32 %v2765, %v2649
  %v2767 = vadd.f32 %v2766, %v2651
  %v2768 = vadd.f32 %v2767, %v2653
  %v2769 = vadd.f32 %v2768, %v2655
  %v2770 = vadd.f32 %v2769, %v2657
  %v2771 = vadd.f32 %v2770, %v2659
  %v2772 = vadd.f32 %v2771, %v2661
  %v2773 = vadd.f32 %v2772, %v2663
  %v2774 = vadd.f32 %v2773, %v2665
  %v2775 = vadd.f32 %v2774, %v2667
  %v2776 = vadd.f32 %v2775, %v2669
  %v2777 = vadd.f32 %v2776, %v2671
  %v2778 = vrot.slane %v2777, 4
  %v2779 = vadd.f32 %v2777, %v2778
  %v2780 = vrot.slane %v2779, 2
  %v2781 = vadd.f32 %v2779, %v2780
  %v2782 = vrot.slane %v2781, 1
  %v2783 = vadd.f32 %v2781, %v2782
  %v2784 = vadd.f32 %v2610, %v2612
  %v2785 = vadd.f32 %v2784, %v2614
  %v2786 = vadd.f32 %v2785, %v2616
  %v2787 = vadd.f32 %v2786, %v2618
  %v2788 = vadd.f32 %v2787, %v2620
  %v2789 = vadd.f32 %v2788, %v2622
  %v2790 = vadd.f32 %v2789, %v2624
  %v2791 = vadd.f32 %v2790, %v2626
  %v2792 = vadd.f32 %v2791, %v2628
  %v2793 = vadd.f32 %v2792, %v2630
  %v2794 = vadd.f32 %v2793, %v2632
  %v2795 = vadd.f32 %v2794, %v2634
  %v2796 = vadd.f32 %v2795, %v2636
  %v2797 = vadd.f32 %v2796, %v2638
  %v2798 = vadd.f32 %v2797, %v2640
  %v2799 = vadd.f32 %v2798, %v2642
  %v2800 = vadd.f32 %v2799, %v2644
  %v2801 = vadd.f32 %v2800, %v2646
  %v2802 = vadd.f32 %v2801, %v2648
  %v2803 = vadd.f32 %v2802, %v2650
  %v2804 = vadd.f32 %v2803, %v2652
  %v2805 = vadd.f32 %v2804, %v2654
  %v2806 = vadd.f32 %v2805, %v2656
  %v2807 = vadd.f32 %v2806, %v2658
  %v2808 = vadd.f32 %v2807, %v2660
  %v2809 = vadd.f32 %v2808, %v2662
  %v2810 = vadd.f32 %v2809, %v2664
  %v2811 = vadd.f32 %v2810, %v2666
  %v2812 = vadd.f32 %v2811, %v2668
  %v2813 = vadd.f32 %v2812, %v2670
  %v2814 = vadd.f32 %v2813, %v2672
  %v2815 = vrot.slane %v2814, 4
  %v2816 = vadd.f32 %v2814, %v2815
  %v2817 = vrot.slane %v2816, 2
  %v2818 = vadd.f32 %v2816, %v2817
  %v2819 = vrot.slane %v2818, 1
  %v2820 = vadd.f32 %v2818, %v2819
  %v2821 = vmul.f32 %v2709, 0.00390625
  %v2822 = vmul.f32 %v2746, 0.00390625
  %v2823 = vmul.f32 %v2783, 0.00390625
  %v2824 = vmul.f32 %v2820, 0.00390625
  %v2825 = vmul.f32 %v2821, %v2821
  %v2826 = vmul.f32 %v2822, %v2822
  %v2827 = vsub.f32 %v2823, %v2825
  %v2828 = vsub.f32 %v2824, %v2826
  %v2829 = vmax.f32 %v2827, 0.0
  %v2830 = vmax.f32 %v2828, 0.0
  %v2831 = vadd.f32 %v2829, 1e-05
  %v2832 = vadd.f32 %v2830, 1e-05
  %v2833 = vrsqrt.pop %v2831
  %v2834 = vmul.f32 %v2833, %v2831
  %v2835 = vmul.f32 %v2834, %v2833
  %v2836 = vmul.f32 0.5, %v2835
  %v2837 = vsub.f32 1.5, %v2836
  %v2838 = vmul.f32 %v2833, %v2837
  %vm2839 = vweird.f32 %v2831
  %vm2840 = vweird.f32 %v2833
  %vm2841 = vmor %vm2839, %vm2840
  %v2842 = vsel %vm2841, %v2833, %v2838
  %v2843 = vrsqrt.pop %v2832
  %v2844 = vmul.f32 %v2843, %v2832
  %v2845 = vmul.f32 %v2844, %v2843
  %v2846 = vmul.f32 0.5, %v2845
  %v2847 = vsub.f32 1.5, %v2846
  %v2848 = vmul.f32 %v2843, %v2847
  %vm2849 = vweird.f32 %v2832
  %vm2850 = vweird.f32 %v2843
  %vm2851 = vmor %vm2849, %vm2850
  %v2852 = vsel %vm2851, %v2843, %v2848
  %v2853 = vmul.f32 %v30, %v2842
  %v2854 = vmul.f32 %v31, %v2852
  %v2855 = vmul.f32 %v2821, %v2853
  %v2856 = vmul.f32 %v2822, %v2854
  %v2859 = vrot.slane %v2855, 7
  %v2860 = vrot.slane %v2856, 7
  %v2863 = vsub.f32 %v30, %v2859
  %v2864 = vsub.f32 %v31, %v2860
  %v2865 = vperm.slane %v2853, 6
  %v2866 = vperm.slane %v2854, 6
  %v2867 = vmul.f32 %v2441, %v2865
  %v2868 = vmul.f32 %v2530, %v2866
  %v2869 = vmul.f32 %v2443, %v2865
  %v2870 = vmul.f32 %v2532, %v2866
  %v2871 = vmul.f32 %v2446, %v2865
  %v2872 = vmul.f32 %v2535, %v2866
  %v2873 = vmul.f32 %v2448, %v2865
  %v2874 = vmul.f32 %v2537, %v2866
  %v2875 = vmul.f32 %v2451, %v2865
  %v2876 = vmul.f32 %v2540, %v2866
  %v2877 = vmul.f32 %v2453, %v2865
  %v2878 = vmul.f32 %v2542, %v2866
  %v2879 = vmul.f32 %v2456, %v2865
  %v2880 = vmul.f32 %v2545, %v2866
  %v2881 = vmul.f32 %v2458, %v2865
  %v2882 = vmul.f32 %v2547, %v2866
  %v2883 = vmul.f32 %v2461, %v2865
  %v2884 = vmul.f32 %v2550, %v2866
  %v2885 = vmul.f32 %v2463, %v2865
  %v2886 = vmul.f32 %v2552, %v2866
  %v2887 = vmul.f32 %v2466, %v2865
  %v2888 = vmul.f32 %v2555, %v2866
  %v2889 = vmul.f32 %v2468, %v2865
  %v2890 = vmul.f32 %v2557, %v2866
  %v2891 = vmul.f32 %v2471, %v2865
  %v2892 = vmul.f32 %v2560, %v2866
  %v2893 = vmul.f32 %v2473, %v2865
  %v2894 = vmul.f32 %v2562, %v2866
  %v2895 = vmul.f32 %v2476, %v2865
  %v2896 = vmul.f32 %v2565, %v2866
  %v2897 = vmul.f32 %v2478, %v2865
  %v2898 = vmul.f32 %v2567, %v2866
  %v2899 = vmul.f32 %v2481, %v2865
  %v2900 = vmul.f32 %v2570, %v2866
  %v2901 = vmul.f32 %v2483, %v2865
  %v2902 = vmul.f32 %v2572, %v2866
  %v2903 = vmul.f32 %v2486, %v2865
  %v2904 = vmul.f32 %v2575, %v2866
  %v2905 = vmul.f32 %v2488, %v2865
  %v2906 = vmul.f32 %v2577, %v2866
  %v2907 = vmul.f32 %v2491, %v2865
  %v2908 = vmul.f32 %v2580, %v2866
  %v2909 = vmul.f32 %v2493, %v2865
  %v2910 = vmul.f32 %v2582, %v2866
  %v2911 = vmul.f32 %v2496, %v2865
  %v2912 = vmul.f32 %v2585, %v2866
  %v2913 = vmul.f32 %v2498, %v2865
  %v2914 = vmul.f32 %v2587, %v2866
  %v2915 = vmul.f32 %v2501, %v2865
  %v2916 = vmul.f32 %v2590, %v2866
  %v2917 = vmul.f32 %v2503, %v2865
  %v2918 = vmul.f32 %v2592, %v2866
  %v2919 = vmul.f32 %v2506, %v2865
  %v2920 = vmul.f32 %v2595, %v2866
  %v2921 = vmul.f32 %v2508, %v2865
  %v2922 = vmul.f32 %v2597, %v2866
  %v2923 = vmul.f32 %v2511, %v2865
  %v2924 = vmul.f32 %v2600, %v2866
  %v2925 = vmul.f32 %v2513, %v2865
  %v2926 = vmul.f32 %v2602, %v2866
  %v2927 = vmul.f32 %v2516, %v2865
  %v2928 = vmul.f32 %v2605, %v2866
  %v2929 = vmul.f32 %v2518, %v2865
  %v2930 = vmul.f32 %v2607, %v2866
  %v2931 = vperm.slane %v2863, 7
  %v2932 = vperm.slane %v2864, 7
  %v2933 = vadd.f32 %v2867, %v2931
  %v2934 = vadd.f32 %v2868, %v2932
  %v2935 = vadd.f32 %v2869, %v2931
  %v2936 = vadd.f32 %v2870, %v2932
  %v2937 = vadd.f32 %v2871, %v2931
  %v2938 = vadd.f32 %v2872, %v2932
  %v2939 = vadd.f32 %v2873, %v2931
  %v2940 = vadd.f32 %v2874, %v2932
  %v2941 = vadd.f32 %v2875, %v2931
  %v2942 = vadd.f32 %v2876, %v2932
  %v2943 = vadd.f32 %v2877, %v2931
  %v2944 = vadd.f32 %v2878, %v2932
  %v2945 = vadd.f32 %v2879, %v2931
  %v2946 = vadd.f32 %v2880, %v2932
  %v2947 = vadd.f32 %v2881, %v2931
  %v2948 = vadd.f32 %v2882, %v2932
  %v2949 = vadd.f32 %v2883, %v2931
  %v2950 = vadd.f32 %v2884, %v2932
  %v2951 = vadd.f32 %v2885, %v2931
  %v2952 = vadd.f32 %v2886, %v2932
  %v2953 = vadd.f32 %v2887, %v2931
  %v2954 = vadd.f32 %v2888, %v2932
  %v2955 = vadd.f32 %v2889, %v2931
  %v2956 = vadd.f32 %v2890, %v2932
  %v2957 = vadd.f32 %v2891, %v2931
  %v2958 = vadd.f32 %v2892, %v2932
  %v2959 = vadd.f32 %v2893, %v2931
  %v2960 = vadd.f32 %v2894, %v2932
  %v2961 = vadd.f32 %v2895, %v2931
  %v2962 = vadd.f32 %v2896, %v2932
  %v2963 = vadd.f32 %v2897, %v2931
  %v2964 = vadd.f32 %v2898, %v2932
  %v2965 = vadd.f32 %v2899, %v2931
  %v2966 = vadd.f32 %v2900, %v2932
  %v2967 = vadd.f32 %v2901, %v2931
  %v2968 = vadd.f32 %v2902, %v2932
  %v2969 = vadd.f32 %v2903, %v2931
  %v2970 = vadd.f32 %v2904, %v2932
  %v2971 = vadd.f32 %v2905, %v2931
  %v2972 = vadd.f32 %v2906, %v2932
  %v2973 = vadd.f32 %v2907, %v2931
  %v2974 = vadd.f32 %v2908, %v2932
  %v2975 = vadd.f32 %v2909, %v2931
  %v2976 = vadd.f32 %v2910, %v2932
  %v2977 = vadd.f32 %v2911, %v2931
  %v2978 = vadd.f32 %v2912, %v2932
  %v2979 = vadd.f32 %v2913, %v2931
  %v2980 = vadd.f32 %v2914, %v2932
  %v2981 = vadd.f32 %v2915, %v2931
  %v2982 = vadd.f32 %v2916, %v2932
  %v2983 = vadd.f32 %v2917, %v2931
  %v2984 = vadd.f32 %v2918, %v2932
  %v2985 = vadd.f32 %v2919, %v2931
  %v2986 = vadd.f32 %v2920, %v2932
  %v2987 = vadd.f32 %v2921, %v2931
  %v2988 = vadd.f32 %v2922, %v2932
  %v2989 = vadd.f32 %v2923, %v2931
  %v2990 = vadd.f32 %v2924, %v2932
  %v2991 = vadd.f32 %v2925, %v2931
  %v2992 = vadd.f32 %v2926, %v2932
  %v2993 = vadd.f32 %v2927, %v2931
  %v2994 = vadd.f32 %v2928, %v2932
  %v2995 = vadd.f32 %v2929, %v2931
  %v2996 = vadd.f32 %v2930, %v2932
  %v2997 = vmax.f32 %v2933, 0.0
  %v2998 = vmax.f32 %v2934, 0.0
  %v2999 = vmax.f32 %v2935, 0.0
  %v3000 = vmax.f32 %v2936, 0.0
  %v3001 = vmax.f32 %v2937, 0.0
  %v3002 = vmax.f32 %v2938, 0.0
  %v3003 = vmax.f32 %v2939, 0.0
  %v3004 = vmax.f32 %v2940, 0.0
  %v3005 = vmax.f32 %v2941, 0.0
  %v3006 = vmax.f32 %v2942, 0.0
  %v3007 = vmax.f32 %v2943, 0.0
  %v3008 = vmax.f32 %v2944, 0.0
  %v3009 = vmax.f32 %v2945, 0.0
  %v3010 = vmax.f32 %v2946, 0.0
  %v3011 = vmax.f32 %v2947, 0.0
  %v3012 = vmax.f32 %v2948, 0.0
  %v3013 = vmax.f32 %v2949, 0.0
  %v3014 = vmax.f32 %v2950, 0.0
  %v3015 = vmax.f32 %v2951, 0.0
  %v3016 = vmax.f32 %v2952, 0.0
  %v3017 = vmax.f32 %v2953, 0.0
  %v3018 = vmax.f32 %v2954, 0.0
  %v3019 = vmax.f32 %v2955, 0.0
  %v3020 = vmax.f32 %v2956, 0.0
  %v3021 = vmax.f32 %v2957, 0.0
  %v3022 = vmax.f32 %v2958, 0.0
  %v3023 = vmax.f32 %v2959, 0.0
  %v3024 = vmax.f32 %v2960, 0.0
  %v3025 = vmax.f32 %v2961, 0.0
  %v3026 = vmax.f32 %v2962, 0.0
  %v3027 = vmax.f32 %v2963, 0.0
  %v3028 = vmax.f32 %v2964, 0.0
  %v3029 = vmax.f32 %v2965, 0.0
  %v3030 = vmax.f32 %v2966, 0.0
  %v3031 = vmax.f32 %v2967, 0.0
  %v3032 = vmax.f32 %v2968, 0.0
  %v3033 = vmax.f32 %v2969, 0.0
  %v3034 = vmax.f32 %v2970, 0.0
  %v3035 = vmax.f32 %v2971, 0.0
  %v3036 = vmax.f32 %v2972, 0.0
  %v3037 = vmax.f32 %v2973, 0.0
  %v3038 = vmax.f32 %v2974, 0.0
  %v3039 = vmax.f32 %v2975, 0.0
  %v3040 = vmax.f32 %v2976, 0.0
  %v3041 = vmax.f32 %v2977, 0.0
  %v3042 = vmax.f32 %v2978, 0.0
  %v3043 = vmax.f32 %v2979, 0.0
  %v3044 = vmax.f32 %v2980, 0.0
  %v3045 = vmax.f32 %v2981, 0.0
  %v3046 = vmax.f32 %v2982, 0.0
  %v3047 = vmax.f32 %v2983, 0.0
  %v3048 = vmax.f32 %v2984, 0.0
  %v3049 = vmax.f32 %v2985, 0.0
  %v3050 = vmax.f32 %v2986, 0.0
  %v3051 = vmax.f32 %v2987, 0.0
  %v3052 = vmax.f32 %v2988, 0.0
  %v3053 = vmax.f32 %v2989, 0.0
  %v3054 = vmax.f32 %v2990, 0.0
  %v3055 = vmax.f32 %v2991, 0.0
  %v3056 = vmax.f32 %v2992, 0.0
  %v3057 = vmax.f32 %v2993, 0.0
  %v3058 = vmax.f32 %v2994, 0.0
  %v3059 = vmax.f32 %v2995, 0.0
  %v3060 = vmax.f32 %v2996, 0.0
  %v3061 = vpack.c.bf16 %v2998, %v2997
  %v3062 = vpack.c.bf16 %v3000, %v2999
  %v3063 = vpack.c.bf16 %v3002, %v3001
  %v3064 = vpack.c.bf16 %v3004, %v3003
  %v3065 = vpack.c.bf16 %v3006, %v3005
  %v3066 = vpack.c.bf16 %v3008, %v3007
  %v3067 = vpack.c.bf16 %v3010, %v3009
  %v3068 = vpack.c.bf16 %v3012, %v3011
  %v3069 = vpack.c.bf16 %v3014, %v3013
  %v3070 = vpack.c.bf16 %v3016, %v3015
  %v3071 = vpack.c.bf16 %v3018, %v3017
  %v3072 = vpack.c.bf16 %v3020, %v3019
  %v3073 = vpack.c.bf16 %v3022, %v3021
  %v3074 = vpack.c.bf16 %v3024, %v3023
  %v3075 = vpack.c.bf16 %v3026, %v3025
  %v3076 = vpack.c.bf16 %v3028, %v3027
  %v3077 = vpack.c.bf16 %v3030, %v3029
  %v3078 = vpack.c.bf16 %v3032, %v3031
  %v3079 = vpack.c.bf16 %v3034, %v3033
  %v3080 = vpack.c.bf16 %v3036, %v3035
  %v3081 = vpack.c.bf16 %v3038, %v3037
  %v3082 = vpack.c.bf16 %v3040, %v3039
  %v3083 = vpack.c.bf16 %v3042, %v3041
  %v3084 = vpack.c.bf16 %v3044, %v3043
  %v3085 = vpack.c.bf16 %v3046, %v3045
  %v3086 = vpack.c.bf16 %v3048, %v3047
  %v3087 = vpack.c.bf16 %v3050, %v3049
  %v3088 = vpack.c.bf16 %v3052, %v3051
  %v3089 = vpack.c.bf16 %v3054, %v3053
  %v3090 = vpack.c.bf16 %v3056, %v3055
  %v3091 = vpack.c.bf16 %v3058, %v3057
  %v3092 = vpack.c.bf16 %v3060, %v3059
  %v3093 = vunpack.c.l.bf16 %v3061
  %v3094 = vunpack.c.h.bf16 %v3061
  %v3095 = vunpack.c.l.bf16 %v3062
  %v3096 = vunpack.c.h.bf16 %v3062
  %v3097 = vunpack.c.l.bf16 %v3063
  %v3098 = vunpack.c.h.bf16 %v3063
  %v3099 = vunpack.c.l.bf16 %v3064
  %v3100 = vunpack.c.h.bf16 %v3064
  %v3101 = vunpack.c.l.bf16 %v3065
  %v3102 = vunpack.c.h.bf16 %v3065
  %v3103 = vunpack.c.l.bf16 %v3066
  %v3104 = vunpack.c.h.bf16 %v3066
  %v3105 = vunpack.c.l.bf16 %v3067
  %v3106 = vunpack.c.h.bf16 %v3067
  %v3107 = vunpack.c.l.bf16 %v3068
  %v3108 = vunpack.c.h.bf16 %v3068
  %v3109 = vunpack.c.l.bf16 %v3069
  %v3110 = vunpack.c.h.bf16 %v3069
  %v3111 = vunpack.c.l.bf16 %v3070
  %v3112 = vunpack.c.h.bf16 %v3070
  %v3113 = vunpack.c.l.bf16 %v3071
  %v3114 = vunpack.c.h.bf16 %v3071
  %v3115 = vunpack.c.l.bf16 %v3072
  %v3116 = vunpack.c.h.bf16 %v3072
  %v3117 = vunpack.c.l.bf16 %v3073
  %v3118 = vunpack.c.h.bf16 %v3073
  %v3119 = vunpack.c.l.bf16 %v3074
  %v3120 = vunpack.c.h.bf16 %v3074
  %v3121 = vunpack.c.l.bf16 %v3075
  %v3122 = vunpack.c.h.bf16 %v3075
  %v3123 = vunpack.c.l.bf16 %v3076
  %v3124 = vunpack.c.h.bf16 %v3076
  %v3125 = vunpack.c.l.bf16 %v3077
  %v3126 = vunpack.c.h.bf16 %v3077
  %v3127 = vunpack.c.l.bf16 %v3078
  %v3128 = vunpack.c.h.bf16 %v3078
  %v3129 = vunpack.c.l.bf16 %v3079
  %v3130 = vunpack.c.h.bf16 %v3079
  %v3131 = vunpack.c.l.bf16 %v3080
  %v3132 = vunpack.c.h.bf16 %v3080
  %v3133 = vunpack.c.l.bf16 %v3081
  %v3134 = vunpack.c.h.bf16 %v3081
  %v3135 = vunpack.c.l.bf16 %v3082
  %v3136 = vunpack.c.h.bf16 %v3082
  %v3137 = vunpack.c.l.bf16 %v3083
  %v3138 = vunpack.c.h.bf16 %v3083
  %v3139 = vunpack.c.l.bf16 %v3084
  %v3140 = vunpack.c.h.bf16 %v3084
  %v3141 = vunpack.c.l.bf16 %v3085
  %v3142 = vunpack.c.h.bf16 %v3085
  %v3143 = vunpack.c.l.bf16 %v3086
  %v3144 = vunpack.c.h.bf16 %v3086
  %v3145 = vunpack.c.l.bf16 %v3087
  %v3146 = vunpack.c.h.bf16 %v3087
  %v3147 = vunpack.c.l.bf16 %v3088
  %v3148 = vunpack.c.h.bf16 %v3088
  %v3149 = vunpack.c.l.bf16 %v3089
  %v3150 = vunpack.c.h.bf16 %v3089
  %v3151 = vunpack.c.l.bf16 %v3090
  %v3152 = vunpack.c.h.bf16 %v3090
  %v3153 = vunpack.c.l.bf16 %v3091
  %v3154 = vunpack.c.h.bf16 %v3091
  %v3155 = vunpack.c.l.bf16 %v3092
  %v3156 = vunpack.c.h.bf16 %v3092
  %v3157 = vmax.f32 %v3093, %v3095
  %v3158 = vmax.f32 %v3157, %v3097
  %v3159 = vmax.f32 %v3158, %v3099
  %v3160 = vrot.slane %v3159, 4
  %v3161 = vmax.f32 %v3159, %v3160
  %v3162 = vrot.slane %v3161, 2
  %v3163 = vmax.f32 %v3161, %v3162
  %v3164 = vrot.slane %v3163, 1
  %v3165 = vmax.f32 %v3163, %v3164
  %v3166 = vmax.f32 %v3094, %v3096
  %v3167 = vmax.f32 %v3166, %v3098
  %v3168 = vmax.f32 %v3167, %v3100
  %v3169 = vrot.slane %v3168, 4
  %v3170 = vmax.f32 %v3168, %v3169
  %v3171 = vrot.slane %v3170, 2
  %v3172 = vmax.f32 %v3170, %v3171
  %v3173 = vrot.slane %v3172, 1
  %v3174 = vmax.f32 %v3172, %v3173
  %v3175 = vmax.f32 %v3101, %v3103
  %v3176 = vmax.f32 %v3175, %v3105
  %v3177 = vmax.f32 %v3176, %v3107
  %v3178 = vrot.slane %v3177, 4
  %v3179 = vmax.f32 %v3177, %v3178
  %v3180 = vrot.slane %v3179, 2
  %v3181 = vmax.f32 %v3179, %v3180
  %v3182 = vrot.slane %v3181, 1
  %v3183 = vmax.f32 %v3181, %v3182
  %v3184 = vmax.f32 %v3102, %v3104
  %v3185 = vmax.f32 %v3184, %v3106
  %v3186 = vmax.f32 %v3185, %v3108
  %v3187 = vrot.slane %v3186, 4
  %v3188 = vmax.f32 %v3186, %v3187
  %v3189 = vrot.slane %v3188, 2
  %v3190 = vmax.f32 %v3188, %v3189
  %v3191 = vrot.slane %v3190, 1
  %v3192 = vmax.f32 %v3190, %v3191
  %v3193 = vmax.f32 %v3109, %v3111
  %v3194 = vmax.f32 %v3193, %v3113
  %v3195 = vmax.f32 %v3194, %v3115
  %v3196 = vrot.slane %v3195, 4
  %v3197 = vmax.f32 %v3195, %v3196
  %v3198 = vrot.slane %v3197, 2
  %v3199 = vmax.f32 %v3197, %v3198
  %v3200 = vrot.slane %v3199, 1
  %v3201 = vmax.f32 %v3199, %v3200
  %v3202 = vmax.f32 %v3110, %v3112
  %v3203 = vmax.f32 %v3202, %v3114
  %v3204 = vmax.f32 %v3203, %v3116
  %v3205 = vrot.slane %v3204, 4
  %v3206 = vmax.f32 %v3204, %v3205
  %v3207 = vrot.slane %v3206, 2
  %v3208 = vmax.f32 %v3206, %v3207
  %v3209 = vrot.slane %v3208, 1
  %v3210 = vmax.f32 %v3208, %v3209
  %v3211 = vmax.f32 %v3117, %v3119
  %v3212 = vmax.f32 %v3211, %v3121
  %v3213 = vmax.f32 %v3212, %v3123
  %v3214 = vrot.slane %v3213, 4
  %v3215 = vmax.f32 %v3213, %v3214
  %v3216 = vrot.slane %v3215, 2
  %v3217 = vmax.f32 %v3215, %v3216
  %v3218 = vrot.slane %v3217, 1
  %v3219 = vmax.f32 %v3217, %v3218
  %v3220 = vmax.f32 %v3118, %v3120
  %v3221 = vmax.f32 %v3220, %v3122
  %v3222 = vmax.f32 %v3221, %v3124
  %v3223 = vrot.slane %v3222, 4
  %v3224 = vmax.f32 %v3222, %v3223
  %v3225 = vrot.slane %v3224, 2
  %v3226 = vmax.f32 %v3224, %v3225
  %v3227 = vrot.slane %v3226, 1
  %v3228 = vmax.f32 %v3226, %v3227
  %v3229 = vmax.f32 %v3125, %v3127
  %v3230 = vmax.f32 %v3229, %v3129
  %v3231 = vmax.f32 %v3230, %v3131
  %v3232 = vrot.slane %v3231, 4
  %v3233 = vmax.f32 %v3231, %v3232
  %v3234 = vrot.slane %v3233, 2
  %v3235 = vmax.f32 %v3233, %v3234
  %v3236 = vrot.slane %v3235, 1
  %v3237 = vmax.f32 %v3235, %v3236
  %v3238 = vmax.f32 %v3126, %v3128
  %v3239 = vmax.f32 %v3238, %v3130
  %v3240 = vmax.f32 %v3239, %v3132
  %v3241 = vrot.slane %v3240, 4
  %v3242 = vmax.f32 %v3240, %v3241
  %v3243 = vrot.slane %v3242, 2
  %v3244 = vmax.f32 %v3242, %v3243
  %v3245 = vrot.slane %v3244, 1
  %v3246 = vmax.f32 %v3244, %v3245
  %v3247 = vmax.f32 %v3133, %v3135
  %v3248 = vmax.f32 %v3247, %v3137
  %v3249 = vmax.f32 %v3248, %v3139
  %v3250 = vrot.slane %v3249, 4
  %v3251 = vmax.f32 %v3249, %v3250
  %v3252 = vrot.slane %v3251, 2
  %v3253 = vmax.f32 %v3251, %v3252
  %v3254 = vrot.slane %v3253, 1
  %v3255 = vmax.f32 %v3253, %v3254
  %v3256 = vmax.f32 %v3134, %v3136
  %v3257 = vmax.f32 %v3256, %v3138
  %v3258 = vmax.f32 %v3257, %v3140
  %v3259 = vrot.slane %v3258, 4
  %v3260 = vmax.f32 %v3258, %v3259
  %v3261 = vrot.slane %v3260, 2
  %v3262 = vmax.f32 %v3260, %v3261
  %v3263 = vrot.slane %v3262, 1
  %v3264 = vmax.f32 %v3262, %v3263
  %v3265 = vmax.f32 %v3141, %v3143
  %v3266 = vmax.f32 %v3265, %v3145
  %v3267 = vmax.f32 %v3266, %v3147
  %v3268 = vrot.slane %v3267, 4
  %v3269 = vmax.f32 %v3267, %v3268
  %v3270 = vrot.slane %v3269, 2
  %v3271 = vmax.f32 %v3269, %v3270
  %v3272 = vrot.slane %v3271, 1
  %v3273 = vmax.f32 %v3271, %v3272
  %v3274 = vmax.f32 %v3142, %v3144
  %v3275 = vmax.f32 %v3274, %v3146
  %v3276 = vmax.f32 %v3275, %v3148
  %v3277 = vrot.slane %v3276, 4
  %v3278 = vmax.f32 %v3276, %v3277
  %v3279 = vrot.slane %v3278, 2
  %v3280 = vmax.f32 %v3278, %v3279
  %v3281 = vrot.slane %v3280, 1
  %v3282 = vmax.f32 %v3280, %v3281
  %v3283 = vmax.f32 %v3149, %v3151
  %v3284 = vmax.f32 %v3283, %v3153
  %v3285 = vmax.f32 %v3284, %v3155
  %v3286 = vrot.slane %v3285, 4
  %v3287 = vmax.f32 %v3285, %v3286
  %v3288 = vrot.slane %v3287, 2
  %v3289 = vmax.f32 %v3287, %v3288
  %v3290 = vrot.slane %v3289, 1
  %v3291 = vmax.f32 %v3289, %v3290
  %v3292 = vmax.f32 %v3150, %v3152
  %v3293 = vmax.f32 %v3292, %v3154
  %v3294 = vmax.f32 %v3293, %v3156
  %v3295 = vrot.slane %v3294, 4
  %v3296 = vmax.f32 %v3294, %v3295
  %v3297 = vrot.slane %v3296, 2
  %v3298 = vmax.f32 %v3296, %v3297
  %v3299 = vrot.slane %v3298, 1
  %v3300 = vmax.f32 %v3298, %v3299
  %v3301 = vpack.c.bf16 %v3165, %v3165
  %v3302 = vpack.c.bf16 %v3174, %v3174
  %v3303 = vpack.c.bf16 %v3183, %v3183
  %v3304 = vpack.c.bf16 %v3192, %v3192
  %v3305 = vpack.c.bf16 %v3201, %v3201
  %v3306 = vpack.c.bf16 %v3210, %v3210
  %v3307 = vpack.c.bf16 %v3219, %v3219
  %v3308 = vpack.c.bf16 %v3228, %v3228
  %v3309 = vpack.c.bf16 %v3237, %v3237
  %v3310 = vpack.c.bf16 %v3246, %v3246
  %v3311 = vpack.c.bf16 %v3255, %v3255
  %v3312 = vpack.c.bf16 %v3264, %v3264
  %v3313 = vpack.c.bf16 %v3273, %v3273
  %v3314 = vpack.c.bf16 %v3282, %v3282
  %v3315 = vpack.c.bf16 %v3291, %v3291
  %v3316 = vpack.c.bf16 %v3300, %v3300
  %v3317 = vld [vmem:[%s5] sm:$0xff]
  %v3318 = vld [vmem:[%s5 + $0x8] sm:$0xff]
  %v3319 = vld [vmem:[%s5 + $0x10] sm:$0xff]
  %v3320 = vld [vmem:[%s5 + $0x18] sm:$0xff]
  %v3321 = vld [vmem:[%s5 + $0x20] sm:$0xff]
  %v3322 = vld [vmem:[%s5 + $0x28] sm:$0xff]
  %v3323 = vld [vmem:[%s5 + $0x30] sm:$0xff]
  %v3324 = vld [vmem:[%s5 + $0x38] sm:$0xff]
  %v3325 = vld [vmem:[%s5 + $0x40] sm:$0xff]
  %v3326 = vld [vmem:[%s5 + $0x48] sm:$0xff]
  %v3327 = vld [vmem:[%s5 + $0x50] sm:$0xff]
  %v3328 = vld [vmem:[%s5 + $0x58] sm:$0xff]
  %v3329 = vld [vmem:[%s5 + $0x60] sm:$0xff]
  %v3330 = vld [vmem:[%s5 + $0x68] sm:$0xff]
  %v3331 = vld [vmem:[%s5 + $0x70] sm:$0xff]
  %v3332 = vld [vmem:[%s5 + $0x78] sm:$0xff]
  %v3333 = vld [vmem:[%s5 + $0x80] sm:$0xff]
  %v3334 = vld [vmem:[%s5 + $0x88] sm:$0xff]
  %v3335 = vld [vmem:[%s5 + $0x90] sm:$0xff]
  %v3336 = vld [vmem:[%s5 + $0x98] sm:$0xff]
  %v3337 = vld [vmem:[%s5 + $0xa0] sm:$0xff]
  %v3338 = vld [vmem:[%s5 + $0xa8] sm:$0xff]
  %v3339 = vld [vmem:[%s5 + $0xb0] sm:$0xff]
  %v3340 = vld [vmem:[%s5 + $0xb8] sm:$0xff]
  %v3341 = vld [vmem:[%s5 + $0xc0] sm:$0xff]
  %v3342 = vld [vmem:[%s5 + $0xc8] sm:$0xff]
  %v3343 = vld [vmem:[%s5 + $0xd0] sm:$0xff]
  %v3344 = vld [vmem:[%s5 + $0xd8] sm:$0xff]
  %v3345 = vld [vmem:[%s5 + $0xe0] sm:$0xff]
  %v3346 = vld [vmem:[%s5 + $0xe8] sm:$0xff]
  %v3347 = vld [vmem:[%s5 + $0xf0] sm:$0xff]
  %v3348 = vld [vmem:[%s5 + $0xf8] sm:$0xff]
  %v3349 = vld [vmem:[%s5 + $0x100] sm:$0xff]
  %v3350 = vld [vmem:[%s5 + $0x108] sm:$0xff]
  %v3351 = vld [vmem:[%s5 + $0x110] sm:$0xff]
  %v3352 = vld [vmem:[%s5 + $0x118] sm:$0xff]
  %v3353 = vld [vmem:[%s5 + $0x120] sm:$0xff]
  %v3354 = vld [vmem:[%s5 + $0x128] sm:$0xff]
  %v3355 = vld [vmem:[%s5 + $0x130] sm:$0xff]
  %v3356 = vld [vmem:[%s5 + $0x138] sm:$0xff]
  %v3357 = vld [vmem:[%s5 + $0x140] sm:$0xff]
  %v3358 = vld [vmem:[%s5 + $0x148] sm:$0xff]
  %v3359 = vld [vmem:[%s5 + $0x150] sm:$0xff]
  %v3360 = vld [vmem:[%s5 + $0x158] sm:$0xff]
  %v3361 = vld [vmem:[%s5 + $0x160] sm:$0xff]
  %v3362 = vld [vmem:[%s5 + $0x168] sm:$0xff]
  %v3363 = vld [vmem:[%s5 + $0x170] sm:$0xff]
  %v3364 = vld [vmem:[%s5 + $0x178] sm:$0xff]
  %v3373 = vunpack.c.l.b16 %v2231
  %v3374 = vunpack.c.l.b16 %v2232
  %v3375 = vunpack.c.l.b16 %v2233
  %v3376 = vunpack.c.l.b16 %v2234
  %v3377 = vunpack.c.l.b16 %v2235
  %v3378 = vunpack.c.l.b16 %v2236
  %v3379 = vunpack.c.l.b16 %v2237
  %v3380 = vunpack.c.l.b16 %v2238
  %vm3381 = vcmask 1041409
  %v3382 = vsel %vm3381, %v3374, %v3373
  %vm3383 = vcmask 1042434
  %v3384 = vsel %vm3383, %v3375, %v3382
  %vm3385 = vcmask 1043459
  %v3386 = vsel %vm3385, %v3376, %v3384
  %vm3387 = vcmask 1044484
  %v3388 = vsel %vm3387, %v3377, %v3386
  %vm3389 = vcmask 1045509
  %v3390 = vsel %vm3389, %v3378, %v3388
  %vm3391 = vcmask 1046534
  %v3392 = vsel %vm3391, %v3379, %v3390
  %vm3393 = vcmask 1047559
  %v3394 = vsel %vm3393, %v3380, %v3392
  %v3395 = vpack.c.b16 %v3394, %v3394
  %v3413 = vunpack.c.l.b16 %v3349
  %v3414 = vunpack.c.h.b16 %v3349
  %v3415 = vunpack.c.l.b16 %v3350
  %v3416 = vunpack.c.h.b16 %v3350
  %v3417 = vunpack.c.l.b16 %v3351
  %v3418 = vunpack.c.h.b16 %v3351
  %v3419 = vunpack.c.l.b16 %v3352
  %v3420 = vunpack.c.h.b16 %v3352
  %v3421 = vunpack.c.l.b16 %v3353
  %v3422 = vunpack.c.h.b16 %v3353
  %v3423 = vunpack.c.l.b16 %v3354
  %v3424 = vunpack.c.h.b16 %v3354
  %v3425 = vunpack.c.l.b16 %v3355
  %v3426 = vunpack.c.h.b16 %v3355
  %v3427 = vunpack.c.l.b16 %v3356
  %v3428 = vunpack.c.h.b16 %v3356
  %v3429 = vunpack.c.l.b16 %v3357
  %v3430 = vunpack.c.h.b16 %v3357
  %v3431 = vunpack.c.l.b16 %v3358
  %v3432 = vunpack.c.h.b16 %v3358
  %v3433 = vunpack.c.l.b16 %v3359
  %v3434 = vunpack.c.h.b16 %v3359
  %v3435 = vunpack.c.l.b16 %v3360
  %v3436 = vunpack.c.h.b16 %v3360
  %v3437 = vunpack.c.l.b16 %v3361
  %v3438 = vunpack.c.h.b16 %v3361
  %v3439 = vunpack.c.l.b16 %v3362
  %v3440 = vunpack.c.h.b16 %v3362
  %v3441 = vunpack.c.l.b16 %v3363
  %v3442 = vunpack.c.h.b16 %v3363
  %v3443 = vunpack.c.l.b16 %v3364
  %v3444 = vunpack.c.h.b16 %v3364
  %v3445 = vpack.c.b16 %v3415, %v3413
  %v3446 = vpack.c.b16 %v3416, %v3414
  %v3447 = vpack.c.b16 %v3419, %v3417
  %v3448 = vpack.c.b16 %v3420, %v3418
  %v3449 = vpack.c.b16 %v3423, %v3421
  %v3450 = vpack.c.b16 %v3424, %v3422
  %v3451 = vpack.c.b16 %v3427, %v3425
  %v3452 = vpack.c.b16 %v3428, %v3426
  %v3453 = vpack.c.b16 %v3431, %v3429
  %v3454 = vpack.c.b16 %v3432, %v3430
  %v3455 = vpack.c.b16 %v3435, %v3433
  %v3456 = vpack.c.b16 %v3436, %v3434
  %v3457 = vpack.c.b16 %v3439, %v3437
  %v3458 = vpack.c.b16 %v3440, %v3438
  %v3459 = vpack.c.b16 %v3443, %v3441
  %v3460 = vpack.c.b16 %v3444, %v3442
  %3477 = vmatpush.bf16.msra.mxu0 %v3459
  %3478 = vmatpush.bf16.msra.mxu0 %v3457
  %3479 = vmatpush.bf16.msra.mxu0 %v3455
  %3480 = vmatpush.bf16.msra.mxu0 %v3453
  %3481 = vmatpush.bf16.msra.mxu0 %v3451
  %3482 = vmatpush.bf16.msra.mxu0 %v3449
  %3483 = vmatpush.bf16.msra.mxu0 %v3447
  %3484 = vmatpush.bf16.msra.mxu0 %v3445
  %3485 = vmatmul.bf16.gmra.mxu0 %v3395
  %v3486 = vpop.f32.mrf.mxu0
  %v3487 = vadd.f32 0.0, %v3486
  %v3488 = vpop.f32.mrf.mxu0
  %3489 = vdwg.mxu0
  %3490 = vmatpush.bf16.msra.mxu0 %v3460
  %3491 = vmatpush.bf16.msra.mxu0 %v3458
  %3492 = vmatpush.bf16.msra.mxu0 %v3456
  %3493 = vmatpush.bf16.msra.mxu0 %v3454
  %3494 = vmatpush.bf16.msra.mxu0 %v3452
  %3495 = vmatpush.bf16.msra.mxu0 %v3450
  %3496 = vmatpush.bf16.msra.mxu0 %v3448
  %3497 = vmatpush.bf16.msra.mxu0 %v3446
  %3498 = vmatmul.bf16.gmra.mxu0 %v3395
  %v3499 = vpop.f32.mrf.mxu0
  %v3500 = vadd.f32 0.0, %v3499
  %v3501 = vpop.f32.mrf.mxu0
  %3502 = vdwg.mxu0
  %v3519 = vunpack.c.l.b16 %v3301
  %v3520 = vunpack.c.l.b16 %v3302
  %v3521 = vunpack.c.l.b16 %v3303
  %v3522 = vunpack.c.l.b16 %v3304
  %v3523 = vunpack.c.l.b16 %v3305
  %v3524 = vunpack.c.l.b16 %v3306
  %v3525 = vunpack.c.l.b16 %v3307
  %v3526 = vunpack.c.l.b16 %v3308
  %v3527 = vunpack.c.l.b16 %v3309
  %v3528 = vunpack.c.l.b16 %v3310
  %v3529 = vunpack.c.l.b16 %v3311
  %v3530 = vunpack.c.l.b16 %v3312
  %v3531 = vunpack.c.l.b16 %v3313
  %v3532 = vunpack.c.l.b16 %v3314
  %v3533 = vunpack.c.l.b16 %v3315
  %v3534 = vunpack.c.l.b16 %v3316
  %v3535 = vsel %vm3381, %v3521, %v3519
  %v3536 = vsel %vm3383, %v3523, %v3535
  %v3537 = vsel %vm3385, %v3525, %v3536
  %v3538 = vsel %vm3387, %v3527, %v3537
  %v3539 = vsel %vm3389, %v3529, %v3538
  %v3540 = vsel %vm3391, %v3531, %v3539
  %v3541 = vsel %vm3393, %v3533, %v3540
  %v3542 = vsel %vm3381, %v3522, %v3520
  %v3543 = vsel %vm3383, %v3524, %v3542
  %v3544 = vsel %vm3385, %v3526, %v3543
  %v3545 = vsel %vm3387, %v3528, %v3544
  %v3546 = vsel %vm3389, %v3530, %v3545
  %v3547 = vsel %vm3391, %v3532, %v3546
  %v3548 = vsel %vm3393, %v3534, %v3547
  %v3549 = vpack.c.b16 %v3541, %v3541
  %v3550 = vpack.c.b16 %v3548, %v3548
  %v3585 = vunpack.c.l.b16 %v3317
  %v3586 = vunpack.c.h.b16 %v3317
  %v3587 = vunpack.c.l.b16 %v3318
  %v3588 = vunpack.c.h.b16 %v3318
  %v3589 = vunpack.c.l.b16 %v3319
  %v3590 = vunpack.c.h.b16 %v3319
  %v3591 = vunpack.c.l.b16 %v3320
  %v3592 = vunpack.c.h.b16 %v3320
  %v3593 = vunpack.c.l.b16 %v3321
  %v3594 = vunpack.c.h.b16 %v3321
  %v3595 = vunpack.c.l.b16 %v3322
  %v3596 = vunpack.c.h.b16 %v3322
  %v3597 = vunpack.c.l.b16 %v3323
  %v3598 = vunpack.c.h.b16 %v3323
  %v3599 = vunpack.c.l.b16 %v3324
  %v3600 = vunpack.c.h.b16 %v3324
  %v3601 = vunpack.c.l.b16 %v3325
  %v3602 = vunpack.c.h.b16 %v3325
  %v3603 = vunpack.c.l.b16 %v3326
  %v3604 = vunpack.c.h.b16 %v3326
  %v3605 = vunpack.c.l.b16 %v3327
  %v3606 = vunpack.c.h.b16 %v3327
  %v3607 = vunpack.c.l.b16 %v3328
  %v3608 = vunpack.c.h.b16 %v3328
  %v3609 = vunpack.c.l.b16 %v3329
  %v3610 = vunpack.c.h.b16 %v3329
  %v3611 = vunpack.c.l.b16 %v3330
  %v3612 = vunpack.c.h.b16 %v3330
  %v3613 = vunpack.c.l.b16 %v3331
  %v3614 = vunpack.c.h.b16 %v3331
  %v3615 = vunpack.c.l.b16 %v3332
  %v3616 = vunpack.c.h.b16 %v3332
  %v3617 = vunpack.c.l.b16 %v3333
  %v3618 = vunpack.c.h.b16 %v3333
  %v3619 = vunpack.c.l.b16 %v3334
  %v3620 = vunpack.c.h.b16 %v3334
  %v3621 = vunpack.c.l.b16 %v3335
  %v3622 = vunpack.c.h.b16 %v3335
  %v3623 = vunpack.c.l.b16 %v3336
  %v3624 = vunpack.c.h.b16 %v3336
  %v3625 = vunpack.c.l.b16 %v3337
  %v3626 = vunpack.c.h.b16 %v3337
  %v3627 = vunpack.c.l.b16 %v3338
  %v3628 = vunpack.c.h.b16 %v3338
  %v3629 = vunpack.c.l.b16 %v3339
  %v3630 = vunpack.c.h.b16 %v3339
  %v3631 = vunpack.c.l.b16 %v3340
  %v3632 = vunpack.c.h.b16 %v3340
  %v3633 = vunpack.c.l.b16 %v3341
  %v3634 = vunpack.c.h.b16 %v3341
  %v3635 = vunpack.c.l.b16 %v3342
  %v3636 = vunpack.c.h.b16 %v3342
  %v3637 = vunpack.c.l.b16 %v3343
  %v3638 = vunpack.c.h.b16 %v3343
  %v3639 = vunpack.c.l.b16 %v3344
  %v3640 = vunpack.c.h.b16 %v3344
  %v3641 = vunpack.c.l.b16 %v3345
  %v3642 = vunpack.c.h.b16 %v3345
  %v3643 = vunpack.c.l.b16 %v3346
  %v3644 = vunpack.c.h.b16 %v3346
  %v3645 = vunpack.c.l.b16 %v3347
  %v3646 = vunpack.c.h.b16 %v3347
  %v3647 = vunpack.c.l.b16 %v3348
  %v3648 = vunpack.c.h.b16 %v3348
  %v3649 = vpack.c.b16 %v3587, %v3585
  %v3650 = vpack.c.b16 %v3588, %v3586
  %v3651 = vpack.c.b16 %v3591, %v3589
  %v3652 = vpack.c.b16 %v3592, %v3590
  %v3653 = vpack.c.b16 %v3595, %v3593
  %v3654 = vpack.c.b16 %v3596, %v3594
  %v3655 = vpack.c.b16 %v3599, %v3597
  %v3656 = vpack.c.b16 %v3600, %v3598
  %v3657 = vpack.c.b16 %v3603, %v3601
  %v3658 = vpack.c.b16 %v3604, %v3602
  %v3659 = vpack.c.b16 %v3607, %v3605
  %v3660 = vpack.c.b16 %v3608, %v3606
  %v3661 = vpack.c.b16 %v3611, %v3609
  %v3662 = vpack.c.b16 %v3612, %v3610
  %v3663 = vpack.c.b16 %v3615, %v3613
  %v3664 = vpack.c.b16 %v3616, %v3614
  %v3665 = vpack.c.b16 %v3619, %v3617
  %v3666 = vpack.c.b16 %v3620, %v3618
  %v3667 = vpack.c.b16 %v3623, %v3621
  %v3668 = vpack.c.b16 %v3624, %v3622
  %v3669 = vpack.c.b16 %v3627, %v3625
  %v3670 = vpack.c.b16 %v3628, %v3626
  %v3671 = vpack.c.b16 %v3631, %v3629
  %v3672 = vpack.c.b16 %v3632, %v3630
  %v3673 = vpack.c.b16 %v3635, %v3633
  %v3674 = vpack.c.b16 %v3636, %v3634
  %v3675 = vpack.c.b16 %v3639, %v3637
  %v3676 = vpack.c.b16 %v3640, %v3638
  %v3677 = vpack.c.b16 %v3643, %v3641
  %v3678 = vpack.c.b16 %v3644, %v3642
  %v3679 = vpack.c.b16 %v3647, %v3645
  %v3680 = vpack.c.b16 %v3648, %v3646
  %3713 = vmatpush.bf16.msra.mxu0 %v3663
  %3714 = vmatpush.bf16.msra.mxu0 %v3661
  %3715 = vmatpush.bf16.msra.mxu0 %v3659
  %3716 = vmatpush.bf16.msra.mxu0 %v3657
  %3717 = vmatpush.bf16.msra.mxu0 %v3655
  %3718 = vmatpush.bf16.msra.mxu0 %v3653
  %3719 = vmatpush.bf16.msra.mxu0 %v3651
  %3720 = vmatpush.bf16.msra.mxu0 %v3649
  %3721 = vmatmul.bf16.gmra.mxu0 %v3549
  %v3722 = vpop.f32.mrf.mxu0
  %v3723 = vadd.f32 %v3487, %v3722
  %v3724 = vpop.f32.mrf.mxu0
  %3725 = vdwg.mxu0
  %3726 = vmatpush.bf16.msra.mxu0 %v3679
  %3727 = vmatpush.bf16.msra.mxu0 %v3677
  %3728 = vmatpush.bf16.msra.mxu0 %v3675
  %3729 = vmatpush.bf16.msra.mxu0 %v3673
  %3730 = vmatpush.bf16.msra.mxu0 %v3671
  %3731 = vmatpush.bf16.msra.mxu0 %v3669
  %3732 = vmatpush.bf16.msra.mxu0 %v3667
  %3733 = vmatpush.bf16.msra.mxu0 %v3665
  %3734 = vmatmul.bf16.gmra.mxu0 %v3550
  %v3735 = vpop.f32.mrf.mxu0
  %v3736 = vadd.f32 %v3723, %v3735
  %v3737 = vpop.f32.mrf.mxu0
  %3738 = vdwg.mxu0
  %3739 = vmatpush.bf16.msra.mxu0 %v3664
  %3740 = vmatpush.bf16.msra.mxu0 %v3662
  %3741 = vmatpush.bf16.msra.mxu0 %v3660
  %3742 = vmatpush.bf16.msra.mxu0 %v3658
  %3743 = vmatpush.bf16.msra.mxu0 %v3656
  %3744 = vmatpush.bf16.msra.mxu0 %v3654
  %3745 = vmatpush.bf16.msra.mxu0 %v3652
  %3746 = vmatpush.bf16.msra.mxu0 %v3650
  %3747 = vmatmul.bf16.gmra.mxu0 %v3549
  %v3748 = vpop.f32.mrf.mxu0
  %v3749 = vadd.f32 %v3500, %v3748
  %v3750 = vpop.f32.mrf.mxu0
  %3751 = vdwg.mxu0
  %3752 = vmatpush.bf16.msra.mxu0 %v3680
  %3753 = vmatpush.bf16.msra.mxu0 %v3678
  %3754 = vmatpush.bf16.msra.mxu0 %v3676
  %3755 = vmatpush.bf16.msra.mxu0 %v3674
  %3756 = vmatpush.bf16.msra.mxu0 %v3672
  %3757 = vmatpush.bf16.msra.mxu0 %v3670
  %3758 = vmatpush.bf16.msra.mxu0 %v3668
  %3759 = vmatpush.bf16.msra.mxu0 %v3666
  %3760 = vmatmul.bf16.gmra.mxu0 %v3550
  %v3761 = vpop.f32.mrf.mxu0
  %v3762 = vadd.f32 %v3749, %v3761
  %v3763 = vpop.f32.mrf.mxu0
  %3764 = vdwg.mxu0
  %v3765 = vld [vmem:[%s5 + $0x180] sm:$0xff]
  %v3766 = vld [vmem:[%s5 + $0x188] sm:$0xff]
  %v3767 = vld [vmem:[%s5 + $0x190] sm:$0xff]
  %v3768 = vld [vmem:[%s5 + $0x198] sm:$0xff]
  %v3769 = vld [vmem:[%s5 + $0x1a0] sm:$0xff]
  %v3770 = vld [vmem:[%s5 + $0x1a8] sm:$0xff]
  %v3771 = vld [vmem:[%s5 + $0x1b0] sm:$0xff]
  %v3772 = vld [vmem:[%s5 + $0x1b8] sm:$0xff]
  %v3781 = vunpack.c.l.b16 %v1612
  %v3782 = vunpack.c.l.b16 %v1613
  %v3783 = vunpack.c.l.b16 %v1614
  %v3784 = vunpack.c.l.b16 %v1615
  %v3785 = vunpack.c.l.b16 %v1616
  %v3786 = vunpack.c.l.b16 %v1617
  %v3787 = vunpack.c.l.b16 %v1618
  %v3788 = vunpack.c.l.b16 %v1619
  %v3789 = vsel %vm3381, %v3782, %v3781
  %v3790 = vsel %vm3383, %v3783, %v3789
  %v3791 = vsel %vm3385, %v3784, %v3790
  %v3792 = vsel %vm3387, %v3785, %v3791
  %v3793 = vsel %vm3389, %v3786, %v3792
  %v3794 = vsel %vm3391, %v3787, %v3793
  %v3795 = vsel %vm3393, %v3788, %v3794
  %v3796 = vpack.c.b16 %v3795, %v3795
  %v3805 = vunpack.c.l.b16 %v3765
  %v3806 = vunpack.c.h.b16 %v3765
  %v3807 = vunpack.c.l.b16 %v3766
  %v3808 = vunpack.c.h.b16 %v3766
  %v3809 = vunpack.c.l.b16 %v3767
  %v3810 = vunpack.c.h.b16 %v3767
  %v3811 = vunpack.c.l.b16 %v3768
  %v3812 = vunpack.c.h.b16 %v3768
  %v3813 = vunpack.c.l.b16 %v3769
  %v3814 = vunpack.c.h.b16 %v3769
  %v3815 = vunpack.c.l.b16 %v3770
  %v3816 = vunpack.c.h.b16 %v3770
  %v3817 = vunpack.c.l.b16 %v3771
  %v3818 = vunpack.c.h.b16 %v3771
  %v3819 = vunpack.c.l.b16 %v3772
  %v3820 = vunpack.c.h.b16 %v3772
  %v3821 = vpack.c.b16 %v3807, %v3805
  %v3822 = vpack.c.b16 %v3808, %v3806
  %v3823 = vpack.c.b16 %v3811, %v3809
  %v3824 = vpack.c.b16 %v3812, %v3810
  %v3825 = vpack.c.b16 %v3815, %v3813
  %v3826 = vpack.c.b16 %v3816, %v3814
  %v3827 = vpack.c.b16 %v3819, %v3817
  %v3828 = vpack.c.b16 %v3820, %v3818
  %v3838 = vsel %vm710, %v3796, 0
  %3840 = vmatpush.bf16.msra.mxu0 0
  %3841 = vmatpush.bf16.msra.mxu0 0
  %3842 = vmatpush.bf16.msra.mxu0 0
  %3843 = vmatpush.bf16.msra.mxu0 0
  %3844 = vmatpush.bf16.msra.mxu0 %v3827
  %3845 = vmatpush.bf16.msra.mxu0 %v3825
  %3846 = vmatpush.bf16.msra.mxu0 %v3823
  %3847 = vmatpush.bf16.msra.mxu0 %v3821
  %3848 = vmatmul.bf16.gmra.mxu0 %v3838
  %v3849 = vpop.f32.mrf.mxu0
  %v3850 = vadd.f32 0.0, %v3849
  %v3851 = vpop.f32.mrf.mxu0
  %3852 = vdwg.mxu0
  %3853 = vmatpush.bf16.msra.mxu0 0
  %3854 = vmatpush.bf16.msra.mxu0 0
  %3855 = vmatpush.bf16.msra.mxu0 0
  %3856 = vmatpush.bf16.msra.mxu0 0
  %3857 = vmatpush.bf16.msra.mxu0 %v3828
  %3858 = vmatpush.bf16.msra.mxu0 %v3826
  %3859 = vmatpush.bf16.msra.mxu0 %v3824
  %3860 = vmatpush.bf16.msra.mxu0 %v3822
  %3861 = vmatmul.bf16.gmra.mxu0 %v3838
  %v3862 = vpop.f32.mrf.mxu0
  %v3863 = vadd.f32 0.0, %v3862
  %v3864 = vpop.f32.mrf.mxu0
  %3865 = vdwg.mxu0
  %v3866 = vadd.f32 %v3736, %v3850
  %v3867 = vadd.f32 %v3762, %v3863
  %v3868 = vmul.f32 %v3866, %v3866
  %v3869 = vmul.f32 %v3867, %v3867
  %v3870 = vrot.slane %v3866, 4
  %v3871 = vadd.f32 %v3866, %v3870
  %v3872 = vrot.slane %v3871, 2
  %v3873 = vadd.f32 %v3871, %v3872
  %v3874 = vrot.slane %v3873, 1
  %v3875 = vadd.f32 %v3873, %v3874
  %v3876 = vrot.slane %v3867, 4
  %v3877 = vadd.f32 %v3867, %v3876
  %v3878 = vrot.slane %v3877, 2
  %v3879 = vadd.f32 %v3877, %v3878
  %v3880 = vrot.slane %v3879, 1
  %v3881 = vadd.f32 %v3879, %v3880
  %v3882 = vrot.slane %v3868, 4
  %v3883 = vadd.f32 %v3868, %v3882
  %v3884 = vrot.slane %v3883, 2
  %v3885 = vadd.f32 %v3883, %v3884
  %v3886 = vrot.slane %v3885, 1
  %v3887 = vadd.f32 %v3885, %v3886
  %v3888 = vrot.slane %v3869, 4
  %v3889 = vadd.f32 %v3869, %v3888
  %v3890 = vrot.slane %v3889, 2
  %v3891 = vadd.f32 %v3889, %v3890
  %v3892 = vrot.slane %v3891, 1
  %v3893 = vadd.f32 %v3891, %v3892
  %v3894 = vmul.f32 %v3875, 0.125
  %v3895 = vmul.f32 %v3881, 0.125
  %v3896 = vmul.f32 %v3887, 0.125
  %v3897 = vmul.f32 %v3893, 0.125
  %v3898 = vmul.f32 %v3894, %v3894
  %v3899 = vmul.f32 %v3895, %v3895
  %v3900 = vsub.f32 %v3896, %v3898
  %v3901 = vsub.f32 %v3897, %v3899
  %v3902 = vmax.f32 %v3900, 0.0
  %v3903 = vmax.f32 %v3901, 0.0
  %v3904 = vadd.f32 %v3902, 1e-05
  %v3905 = vadd.f32 %v3903, 1e-05
  %v3906 = vrsqrt.pop %v3904
  %v3907 = vmul.f32 %v3906, %v3904
  %v3908 = vmul.f32 %v3907, %v3906
  %v3909 = vmul.f32 0.5, %v3908
  %v3910 = vsub.f32 1.5, %v3909
  %v3911 = vmul.f32 %v3906, %v3910
  %vm3912 = vweird.f32 %v3904
  %vm3913 = vweird.f32 %v3906
  %vm3914 = vmor %vm3912, %vm3913
  %v3915 = vsel %vm3914, %v3906, %v3911
  %v3916 = vrsqrt.pop %v3905
  %v3917 = vmul.f32 %v3916, %v3905
  %v3918 = vmul.f32 %v3917, %v3916
  %v3919 = vmul.f32 0.5, %v3918
  %v3920 = vsub.f32 1.5, %v3919
  %v3921 = vmul.f32 %v3916, %v3920
  %vm3922 = vweird.f32 %v3905
  %vm3923 = vweird.f32 %v3916
  %vm3924 = vmor %vm3922, %vm3923
  %v3925 = vsel %vm3924, %v3916, %v3921
  %v3926 = vmul.f32 %v32, %v3915
  %v3927 = vmul.f32 %v33, %v3925
  %v3928 = vmul.f32 %v3894, %v3926
  %v3929 = vmul.f32 %v3895, %v3927
  %v3932 = vrot.slane %v3928, 7
  %v3933 = vrot.slane %v3929, 7
  %v3936 = vsub.f32 %v32, %v3932
  %v3937 = vsub.f32 %v33, %v3933
  %v3938 = vperm.slane %v3926, 0
  %v3939 = vperm.slane %v3927, 0
  %v3940 = vmul.f32 %v3866, %v3938
  %v3941 = vmul.f32 %v3867, %v3939
  %v3942 = vperm.slane %v3936, 1
  %v3943 = vperm.slane %v3937, 1
  %v3944 = vadd.f32 %v3940, %v3942
  %v3945 = vadd.f32 %v3941, %v3943
  %v3946 = vmax.f32 %v3944, 0.0
  %v3947 = vmax.f32 %v3945, 0.0
  %v3948 = vpack.c.bf16 %v3946, %v3946
  %v3949 = vpack.c.bf16 %v3947, %v3947
  %v3950 = vld [vmem:[%s6] sm:$0xf]
  %v3951 = vld [vmem:[%s6 + $0x4] sm:$0xf]
  %v3952 = vld [vmem:[%s6 + $0x8] sm:$0xf]
  %v3953 = vld [vmem:[%s6 + $0xc] sm:$0xf]
  %v3954 = vld [vmem:[%s6 + $0x10] sm:$0xf]
  %v3955 = vld [vmem:[%s6 + $0x14] sm:$0xf]
  %v3956 = vld [vmem:[%s6 + $0x18] sm:$0xf]
  %v3957 = vld [vmem:[%s6 + $0x1c] sm:$0xf]
  %v3958 = vld [vmem:[%s6 + $0x20] sm:$0xf]
  %v3959 = vld [vmem:[%s6 + $0x24] sm:$0xf]
  %v3960 = vld [vmem:[%s6 + $0x28] sm:$0xf]
  %v3961 = vld [vmem:[%s6 + $0x2c] sm:$0xf]
  %v3962 = vld [vmem:[%s6 + $0x30] sm:$0xf]
  %v3963 = vld [vmem:[%s6 + $0x34] sm:$0xf]
  %v3964 = vld [vmem:[%s6 + $0x38] sm:$0xf]
  %v3965 = vld [vmem:[%s6 + $0x3c] sm:$0xf]
  %v3966 = vld [vmem:[%s6 + $0x40] sm:$0xf]
  %v3967 = vld [vmem:[%s6 + $0x44] sm:$0xf]
  %v3968 = vld [vmem:[%s6 + $0x48] sm:$0xf]
  %v3969 = vld [vmem:[%s6 + $0x4c] sm:$0xf]
  %v3970 = vld [vmem:[%s6 + $0x50] sm:$0xf]
  %v3971 = vld [vmem:[%s6 + $0x54] sm:$0xf]
  %v3972 = vld [vmem:[%s6 + $0x58] sm:$0xf]
  %v3973 = vld [vmem:[%s6 + $0x5c] sm:$0xf]
  %v3974 = vld [vmem:[%s6 + $0x60] sm:$0xf]
  %v3975 = vld [vmem:[%s6 + $0x64] sm:$0xf]
  %v3976 = vld [vmem:[%s6 + $0x68] sm:$0xf]
  %v3977 = vld [vmem:[%s6 + $0x6c] sm:$0xf]
  %v3978 = vld [vmem:[%s6 + $0x70] sm:$0xf]
  %v3979 = vld [vmem:[%s6 + $0x74] sm:$0xf]
  %v3980 = vld [vmem:[%s6 + $0x78] sm:$0xf]
  %v3981 = vld [vmem:[%s6 + $0x7c] sm:$0xf]
  %v4014 = vunpack.c.l.b16 %v3950
  %v4015 = vunpack.c.l.b16 %v3951
  %v4016 = vunpack.c.l.b16 %v3952
  %v4017 = vunpack.c.l.b16 %v3953
  %v4018 = vunpack.c.l.b16 %v3954
  %v4019 = vunpack.c.l.b16 %v3955
  %v4020 = vunpack.c.l.b16 %v3956
  %v4021 = vunpack.c.l.b16 %v3957
  %v4022 = vunpack.c.l.b16 %v3958
  %v4023 = vunpack.c.l.b16 %v3959
  %v4024 = vunpack.c.l.b16 %v3960
  %v4025 = vunpack.c.l.b16 %v3961
  %v4026 = vunpack.c.l.b16 %v3962
  %v4027 = vunpack.c.l.b16 %v3963
  %v4028 = vunpack.c.l.b16 %v3964
  %v4029 = vunpack.c.l.b16 %v3965
  %v4030 = vunpack.c.l.b16 %v3966
  %v4031 = vunpack.c.l.b16 %v3967
  %v4032 = vunpack.c.l.b16 %v3968
  %v4033 = vunpack.c.l.b16 %v3969
  %v4034 = vunpack.c.l.b16 %v3970
  %v4035 = vunpack.c.l.b16 %v3971
  %v4036 = vunpack.c.l.b16 %v3972
  %v4037 = vunpack.c.l.b16 %v3973
  %v4038 = vunpack.c.l.b16 %v3974
  %v4039 = vunpack.c.l.b16 %v3975
  %v4040 = vunpack.c.l.b16 %v3976
  %v4041 = vunpack.c.l.b16 %v3977
  %v4042 = vunpack.c.l.b16 %v3978
  %v4043 = vunpack.c.l.b16 %v3979
  %v4044 = vunpack.c.l.b16 %v3980
  %v4045 = vunpack.c.l.b16 %v3981
  %v4046 = vpack.c.b16 %v4015, %v4014
  %v4047 = vpack.c.b16 %v4017, %v4016
  %v4048 = vpack.c.b16 %v4019, %v4018
  %v4049 = vpack.c.b16 %v4021, %v4020
  %v4050 = vpack.c.b16 %v4023, %v4022
  %v4051 = vpack.c.b16 %v4025, %v4024
  %v4052 = vpack.c.b16 %v4027, %v4026
  %v4053 = vpack.c.b16 %v4029, %v4028
  %v4054 = vpack.c.b16 %v4031, %v4030
  %v4055 = vpack.c.b16 %v4033, %v4032
  %v4056 = vpack.c.b16 %v4035, %v4034
  %v4057 = vpack.c.b16 %v4037, %v4036
  %v4058 = vpack.c.b16 %v4039, %v4038
  %v4059 = vpack.c.b16 %v4041, %v4040
  %v4060 = vpack.c.b16 %v4043, %v4042
  %v4061 = vpack.c.b16 %v4045, %v4044
  %4078 = vmatpush.bf16.msra.mxu0 %v4053
  %4079 = vmatpush.bf16.msra.mxu0 %v4052
  %4080 = vmatpush.bf16.msra.mxu0 %v4051
  %4081 = vmatpush.bf16.msra.mxu0 %v4050
  %4082 = vmatpush.bf16.msra.mxu0 %v4049
  %4083 = vmatpush.bf16.msra.mxu0 %v4048
  %4084 = vmatpush.bf16.msra.mxu0 %v4047
  %4085 = vmatpush.bf16.msra.mxu0 %v4046
  %4086 = vmatmul.bf16.gmra.mxu0 %v3948
  %v4087 = vpop.f32.mrf.mxu0
  %v4088 = vadd.f32 0.0, %v4087
  %v4089 = vpop.f32.mrf.mxu0
  %4090 = vdwg.mxu0
  %4091 = vmatpush.bf16.msra.mxu0 %v4061
  %4092 = vmatpush.bf16.msra.mxu0 %v4060
  %4093 = vmatpush.bf16.msra.mxu0 %v4059
  %4094 = vmatpush.bf16.msra.mxu0 %v4058
  %4095 = vmatpush.bf16.msra.mxu0 %v4057
  %4096 = vmatpush.bf16.msra.mxu0 %v4056
  %4097 = vmatpush.bf16.msra.mxu0 %v4055
  %4098 = vmatpush.bf16.msra.mxu0 %v4054
  %4099 = vmatmul.bf16.gmra.mxu0 %v3949
  %v4100 = vpop.f32.mrf.mxu0
  %v4101 = vadd.f32 %v4088, %v4100
  %v4102 = vpop.f32.mrf.mxu0
  %4103 = vdwg.mxu0
  %v4104 = vmul.f32 %v4101, %v4101
  %v4105 = vrot.slane %v4101, 4
  %v4106 = vadd.f32 %v4101, %v4105
  %v4107 = vrot.slane %v4106, 2
  %v4108 = vadd.f32 %v4106, %v4107
  %v4109 = vrot.slane %v4108, 1
  %v4110 = vadd.f32 %v4108, %v4109
  %v4111 = vrot.slane %v4104, 4
  %v4112 = vadd.f32 %v4104, %v4111
  %v4113 = vrot.slane %v4112, 2
  %v4114 = vadd.f32 %v4112, %v4113
  %v4115 = vrot.slane %v4114, 1
  %v4116 = vadd.f32 %v4114, %v4115
  %v4117 = vmul.f32 %v4110, 0.125
  %v4118 = vmul.f32 %v4116, 0.125
  %v4119 = vmul.f32 %v4117, %v4117
  %v4120 = vsub.f32 %v4118, %v4119
  %v4121 = vmax.f32 %v4120, 0.0
  %v4122 = vadd.f32 %v4121, 1e-05
  %v4123 = vrsqrt.pop %v4122
  %v4124 = vmul.f32 %v4123, %v4122
  %v4125 = vmul.f32 %v4124, %v4123
  %v4126 = vmul.f32 0.5, %v4125
  %v4127 = vsub.f32 1.5, %v4126
  %v4128 = vmul.f32 %v4123, %v4127
  %vm4129 = vweird.f32 %v4122
  %vm4130 = vweird.f32 %v4123
  %vm4131 = vmor %vm4129, %vm4130
  %v4132 = vsel %vm4131, %v4123, %v4128
  %v4133 = vmul.f32 %v32, %v4132
  %v4134 = vmul.f32 %v4117, %v4133
  %v4136 = vrot.slane %v4134, 7
  %v4138 = vsub.f32 %v32, %v4136
  %v4139 = vperm.slane %v4133, 2
  %v4140 = vmul.f32 %v4101, %v4139
  %v4141 = vperm.slane %v4138, 3
  %v4142 = vadd.f32 %v4140, %v4141
  %v4143 = vmax.f32 %v4142, 0.0
  %v4144 = vpack.c.bf16 %v4143, %v4143
  %v4145 = vld [vmem:[%s7] sm:$0xf]
  %v4146 = vld [vmem:[%s7 + $0x4] sm:$0xf]
  %v4147 = vld [vmem:[%s7 + $0x8] sm:$0xf]
  %v4148 = vld [vmem:[%s7 + $0xc] sm:$0xf]
  %v4149 = vld [vmem:[%s7 + $0x10] sm:$0xf]
  %v4150 = vld [vmem:[%s7 + $0x14] sm:$0xf]
  %v4151 = vld [vmem:[%s7 + $0x18] sm:$0xf]
  %v4152 = vld [vmem:[%s7 + $0x1c] sm:$0xf]
  %v4153 = vld [vmem:[%s7 + $0x20] sm:$0xf]
  %v4154 = vld [vmem:[%s7 + $0x24] sm:$0xf]
  %v4155 = vld [vmem:[%s7 + $0x28] sm:$0xf]
  %v4156 = vld [vmem:[%s7 + $0x2c] sm:$0xf]
  %v4157 = vld [vmem:[%s7 + $0x30] sm:$0xf]
  %v4158 = vld [vmem:[%s7 + $0x34] sm:$0xf]
  %v4159 = vld [vmem:[%s7 + $0x38] sm:$0xf]
  %v4160 = vld [vmem:[%s7 + $0x3c] sm:$0xf]
  %v4177 = vunpack.c.l.b16 %v4145
  %v4178 = vunpack.c.l.b16 %v4146
  %v4179 = vunpack.c.l.b16 %v4147
  %v4180 = vunpack.c.l.b16 %v4148
  %v4181 = vunpack.c.l.b16 %v4149
  %v4182 = vunpack.c.l.b16 %v4150
  %v4183 = vunpack.c.l.b16 %v4151
  %v4184 = vunpack.c.l.b16 %v4152
  %v4185 = vunpack.c.l.b16 %v4153
  %v4186 = vunpack.c.l.b16 %v4154
  %v4187 = vunpack.c.l.b16 %v4155
  %v4188 = vunpack.c.l.b16 %v4156
  %v4189 = vunpack.c.l.b16 %v4157
  %v4190 = vunpack.c.l.b16 %v4158
  %v4191 = vunpack.c.l.b16 %v4159
  %v4192 = vunpack.c.l.b16 %v4160
  %v4193 = vpack.c.b16 %v4178, %v4177
  %v4194 = vpack.c.b16 %v4180, %v4179
  %v4195 = vpack.c.b16 %v4182, %v4181
  %v4196 = vpack.c.b16 %v4184, %v4183
  %v4197 = vpack.c.b16 %v4186, %v4185
  %v4198 = vpack.c.b16 %v4188, %v4187
  %v4199 = vpack.c.b16 %v4190, %v4189
  %v4200 = vpack.c.b16 %v4192, %v4191
  %4209 = vmatpush.bf16.msra.mxu0 %v4200
  %4210 = vmatpush.bf16.msra.mxu0 %v4199
  %4211 = vmatpush.bf16.msra.mxu0 %v4198
  %4212 = vmatpush.bf16.msra.mxu0 %v4197
  %4213 = vmatpush.bf16.msra.mxu0 %v4196
  %4214 = vmatpush.bf16.msra.mxu0 %v4195
  %4215 = vmatpush.bf16.msra.mxu0 %v4194
  %4216 = vmatpush.bf16.msra.mxu0 %v4193
  %4217 = vmatmul.bf16.gmra.mxu0 %v4144
  %v4218 = vpop.f32.mrf.mxu0
  %v4219 = vadd.f32 0.0, %v4218
  %v4220 = vpop.f32.mrf.mxu0
  %4221 = vdwg.mxu0
  %v4222 = vmul.f32 %v4219, %v4219
  %vm4223 = vcmask 130048
  %v4224 = vsel %vm4223, %v4219, 0.0
  %v4225 = vrot.slane %v4224, 4
  %v4226 = vadd.f32 %v4224, %v4225
  %v4227 = vrot.slane %v4226, 2
  %v4228 = vadd.f32 %v4226, %v4227
  %v4229 = vrot.slane %v4228, 1
  %v4230 = vadd.f32 %v4228, %v4229
  %v4231 = vsel %vm4223, %v4222, 0.0
  %v4232 = vrot.slane %v4231, 4
  %v4233 = vadd.f32 %v4231, %v4232
  %v4234 = vrot.slane %v4233, 2
  %v4235 = vadd.f32 %v4233, %v4234
  %v4236 = vrot.slane %v4235, 1
  %v4237 = vadd.f32 %v4235, %v4236
  %v4238 = vmul.f32 %v4230, 0.125
  %v4239 = vmul.f32 %v4237, 0.125
  %v4240 = vmul.f32 %v4238, %v4238
  %v4241 = vsub.f32 %v4239, %v4240
  %v4242 = vmax.f32 %v4241, 0.0
  %v4243 = vadd.f32 %v4242, 1e-05
  %v4244 = vrsqrt.pop %v4243
  %v4245 = vmul.f32 %v4244, %v4243
  %v4246 = vmul.f32 %v4245, %v4244
  %v4247 = vmul.f32 0.5, %v4246
  %v4248 = vsub.f32 1.5, %v4247
  %v4249 = vmul.f32 %v4244, %v4248
  %vm4250 = vweird.f32 %v4243
  %vm4251 = vweird.f32 %v4244
  %vm4252 = vmor %vm4250, %vm4251
  %v4253 = vsel %vm4252, %v4244, %v4249
  %v4254 = vmul.f32 %v32, %v4253
  %v4255 = vmul.f32 %v4238, %v4254
  %v4257 = vrot.slane %v4255, 7
  %v4259 = vsub.f32 %v32, %v4257
  %v4260 = vperm.slane %v4254, 4
  %v4261 = vmul.f32 %v4219, %v4260
  %v4262 = vperm.slane %v4259, 5
  %v4263 = vadd.f32 %v4261, %v4262
  %v4264 = vmax.f32 %v4263, 0.0
  %v4265 = vpack.c.bf16 %v4264, %v4264
  %v4266 = vunpack.c.l.bf16 %v4265
  %v4267 = vperm.slane %v32, 6
  %v4268 = vmul.f32 %v4266, %v4267
  %v4269 = vsel %vm4223, %v4268, 0.0
  %4270 = vadd.xlane.f32.xlu0 %v4269
  %v4271 = vpop.xlane.xlu0 %4270
  %v4272 = vperm.slane %v32, 7
  %v4273 = vadd.f32 %v4271, %v4272
  %vm4274 = vcmask 7168
  %4275 = vst.msk [vmem:[%s8] sm:$0xff] %vm4274, %v4273
  // Predicated region
  $region34: #{netlocald_forward.1} parent=0 // pred_check
    _
  $region35: #{netlocald_forward.1} parent=0 // pred_check_branch
    %4277 = sbr.rel (0) target = $region37
  $region36: #{netlocald_forward.1} parent=0 // pred_region
    _
  $region37: #{netlocald_forward.1} parent=0 // pred_fallthru
    _
  // Predicated region
  $region38: #{netlocald_forward.1} parent=0 // pred_check
    _
  $region39: #{netlocald_forward.1} parent=0 // pred_check_branch
    %4279 = sbr.rel (0) target = $region41
  $region40: #{netlocald_forward.1} parent=0 // pred_region
    _
  $region41: #{netlocald_forward.1} parent=0 // pred_fallthru
    _

</llo_original>
